<compile_context>
chip_gen: v7x
topology: tpu7x:2x2x1
jax: 0.10.0
libtpu: 0.0.40
codegen_flags: <defaults>
</compile_context>

<pallas_src>
import jax
import jax.numpy as jnp
from jax.experimental import pallas as pl
from jax.experimental.pallas import tpu as pltpu

IN_DIM = 28 * 28          # 784
LATENT = 3
LATENT_PAD = 128          # latent width padded to a full lane group (VMEM/MXU only)
ENC_DIMS = [IN_DIM, 128, 64, 12, LATENT]
DEC_DIMS = [LATENT, 12, 64, 128, IN_DIM]


# -----------------------------------------------------------------------------
# Kernel
# -----------------------------------------------------------------------------
def autoencoder_kernel(
    x_ref,
    ew0, eb0, ew1, eb1, ew2, eb2, ew3, eb3,      # encoder params (W bf16, b f32)
    dw0, db0, dw1, db1, dw2, db2, dw3, db3,      # decoder params (W bf16, b f32)
    enc_ref, dec_ref,
):
    """Whole forward pass (8 matmuls + activations) on one VMEM-resident batch tile."""

    def dense(h_bf16, w_ref, b_ref, relu):
        # bf16 MXU inputs, f32 accumulation, f32 bias add.
        y = jnp.dot(h_bf16, w_ref[...], preferred_element_type=jnp.float32) + b_ref[...]
        return jnp.maximum(y, 0.0) if relu else y

    bf = jnp.bfloat16
    h = x_ref[...]                                            # bf16 (tile, 784)

    # ----- encoder -----
    h = dense(h, ew0, eb0, True).astype(bf)
    h = dense(h, ew1, eb1, True).astype(bf)
    h = dense(h, ew2, eb2, True).astype(bf)
    encoded = dense(h, ew3, eb3, False)                       # f32 (tile, 128); cols >=3 exactly 0
    enc_ref[...] = encoded[:, :LATENT].astype(enc_ref.dtype)  # true 3-wide output

    # ----- decoder -----
    h = dense(encoded.astype(bf), dw0, db0, True).astype(bf)  # padded latent rows of dw0 are 0
    h = dense(h, dw1, db1, True).astype(bf)
    h = dense(h, dw2, db2, True).astype(bf)
    logits = dense(h, dw3, db3, False)                        # f32 (tile, 784)
    dec_ref[...] = jax.nn.sigmoid(logits).astype(dec_ref.dtype)


# -----------------------------------------------------------------------------
# Parameters
# -----------------------------------------------------------------------------
def make_params(key):
    """Deterministic PyTorch-style (uniform +-1/sqrt(fan_in)) init.

    Weights stored as (in, out) so the forward does x @ W + b; biases as (1, out).
    These are the *unpadded* f32 parameters (also used by the reference).
    """
    params = []
    for dims in (ENC_DIMS, DEC_DIMS):
        for i in range(len(dims) - 1):
            fan_in, fan_out = dims[i], dims[i + 1]
            key, kw, kb = jax.random.split(key, 3)
            bound = 1.0 / jnp.sqrt(jnp.float32(fan_in))
            w = jax.random.uniform(kw, (fan_in, fan_out), jnp.float32, -bound, bound)
            b = jax.random.uniform(kb, (1, fan_out), jnp.float32, -bound, bound)
            params += [w, b]
    return params  # 16 arrays


def pad_params(params):
    """Cast weights to bf16; lane-pad only the 3-wide latent dims with zeros."""
    (ew0, eb0, ew1, eb1, ew2, eb2, ew3, eb3,
     dw0, db0, dw1, db1, dw2, db2, dw3, db3) = params

    def pad2(a, rows, cols):
        return jnp.pad(a, ((0, rows - a.shape[0]), (0, cols - a.shape[1])))

    bf = jnp.bfloat16
    return [
        ew0.astype(bf), eb0,
        ew1.astype(bf), eb1,
        ew2.astype(bf), eb2,
        pad2(ew3, 12, LATENT_PAD).astype(bf),                 # zero cols 3..127
        pad2(eb3, 1, LATENT_PAD),
        pad2(dw0, LATENT_PAD, 12).astype(bf), db0,            # zero rows 3..127
        dw1.astype(bf), db1,
        dw2.astype(bf), db2,
        dw3.astype(bf), db3,
    ]


# -----------------------------------------------------------------------------
# Wrapper
# -----------------------------------------------------------------------------
def autoencoder_forward(x, padded_params, *, batch_tile=None):
    """Fused autoencoder forward.  Returns (encoded (B,3), decoded (B,784)) in bf16."""
    B, D = x.shape
    assert D == IN_DIM
    if x.dtype != jnp.bfloat16:
        x = x.astype(jnp.bfloat16)   # bf16 input stream halves the largest HBM read

    if batch_tile is None:
        # Aim for >=4 grid steps (>=2 per TensorCore on v7x) so the input/output DMAs
        # overlap with compute, while keeping each step big enough that the ~0.35us
        # per-step overhead stays small.  Cap at 512 rows (safe VMEM on all gens).
        batch_tile = min(512, max(8, pl.next_power_of_2(max(1, B // 4))))

    n_tiles = pl.cdiv(B, batch_tile)
    B_pad = n_tiles * batch_tile
    if B_pad != B:
        x = jnp.pad(x, ((0, B_pad - B), (0, 0)))   # batch-axis padding only

    x_spec = pl.BlockSpec((batch_tile, IN_DIM), lambda i: (i, 0))
    # Params are tiny (<0.5 MiB total, bf16 weights): whole-array VMEM-resident blocks
    # with a constant index_map so no per-step re-fetch is needed.
    param_specs = [pl.BlockSpec(p.shape, lambda i: (0, 0)) for p in padded_params]
    enc_spec = pl.BlockSpec((batch_tile, LATENT), lambda i: (i, 0))
    dec_spec = pl.BlockSpec((batch_tile, IN_DIM), lambda i: (i, 0))

    out_shapes = (
        jax.ShapeDtypeStruct((B_pad, LATENT), jnp.bfloat16),
        jax.ShapeDtypeStruct((B_pad, IN_DIM), jnp.bfloat16),
    )

    # Advisory cost estimate for XLA's scheduler.
    flops_per_row = 2 * sum(a * b for a, b in zip(ENC_DIMS[:-1] + DEC_DIMS[:-1],
                                                  ENC_DIMS[1:] + DEC_DIMS[1:]))
    param_bytes = sum(int(p.size) * p.dtype.itemsize for p in padded_params)
    cost = pl.CostEstimate(
        flops=flops_per_row * B_pad,
        transcendentals=IN_DIM * B_pad,                         # sigmoid exps
        bytes_accessed=2 * B_pad * (IN_DIM + IN_DIM + LATENT) + param_bytes,
    )

    encoded, decoded = pl.pallas_call(
        autoencoder_kernel,
        out_shape=out_shapes,
        grid_spec=pltpu.PrefetchScalarGridSpec(
            num_scalar_prefetch=0,
            grid=(n_tiles,),
            in_specs=[x_spec] + param_specs,
            out_specs=[enc_spec, dec_spec],
        ),
        compiler_params=pltpu.CompilerParams(
            dimension_semantics=("parallel",),   # batch tiles shard across TCs (v7x)
        ),
        cost_estimate=cost,
    )(x, *padded_params)

    if B_pad != B:                              # slice only when we actually padded
        encoded = encoded[:B]
        decoded = decoded[:B]
    return encoded, decoded


# -----------------------------------------------------------------------------
# Plain-JAX reference (f32 everywhere) for sanity checking.
# -----------------------------------------------------------------------------
def reference_forward(x, params):
    (ew0, eb0, ew1, eb1, ew2, eb2, ew3, eb3,
     dw0, db0, dw1, db1, dw2, db2, dw3, db3) = params
    h = jnp.maximum(x @ ew0 + eb0, 0.0)
    h = jnp.maximum(h @ ew1 + eb1, 0.0)
    h = jnp.maximum(h @ ew2 + eb2, 0.0)
    enc = h @ ew3 + eb3
    h = jnp.maximum(enc @ dw0 + db0, 0.0)
    h = jnp.maximum(h @ dw1 + db1, 0.0)
    h = jnp.maximum(h @ dw2 + db2, 0.0)
    dec = jax.nn.sigmoid(h @ dw3 + db3)
    return enc, dec


if __name__ == "__main__":
    key = jax.random.PRNGKey(0)
    key, kx, kp = jax.random.split(key, 3)

    B = 512  # auto batch_tile -> 128 rows/step, 4 grid steps (>=2 per v7x TensorCore)
    x = jax.random.uniform(kx, (B, IN_DIM), jnp.float32)   # MNIST-like pixels in [0, 1)
    x_bf16 = x.astype(jnp.bfloat16)                         # bf16 input stream
    params = make_params(kp)
    padded_params = pad_params(params)

    encoded, decoded = autoencoder_forward(x_bf16, padded_params)
    jax.block_until_ready((encoded, decoded))

    # Correctness check against plain f32 JAX (bf16 MXU inputs / bf16 outputs -> loosened tol).
    enc_ref, dec_ref = reference_forward(x_bf16.astype(jnp.float32), params)
    assert encoded.shape == (B, LATENT) and decoded.shape == (B, IN_DIM)
    assert jnp.allclose(encoded.astype(jnp.float32), enc_ref, atol=5e-2, rtol=5e-2)
    assert jnp.allclose(decoded.astype(jnp.float32), dec_ref, atol=2e-2, rtol=2e-2)

    print("KERNEL_OK")
</pallas_src>

<mosaic_0001>
module attributes {stable_mosaic.version = 11 : i64} {
  func.func @autoencoder_kernel(%arg0: i32, %arg1: memref<128x784xbf16, #tpu.memory_space<vmem>>, %arg2: memref<784x128xbf16, #tpu.memory_space<vmem>>, %arg3: memref<1x128xf32, #tpu.memory_space<vmem>>, %arg4: memref<128x64xbf16, #tpu.memory_space<vmem>>, %arg5: memref<1x64xf32, #tpu.memory_space<vmem>>, %arg6: memref<64x12xbf16, #tpu.memory_space<vmem>>, %arg7: memref<1x12xf32, #tpu.memory_space<vmem>>, %arg8: memref<12x128xbf16, #tpu.memory_space<vmem>>, %arg9: memref<1x128xf32, #tpu.memory_space<vmem>>, %arg10: memref<128x12xbf16, #tpu.memory_space<vmem>>, %arg11: memref<1x12xf32, #tpu.memory_space<vmem>>, %arg12: memref<12x64xbf16, #tpu.memory_space<vmem>>, %arg13: memref<1x64xf32, #tpu.memory_space<vmem>>, %arg14: memref<64x128xbf16, #tpu.memory_space<vmem>>, %arg15: memref<1x128xf32, #tpu.memory_space<vmem>>, %arg16: memref<128x784xbf16, #tpu.memory_space<vmem>>, %arg17: memref<1x784xf32, #tpu.memory_space<vmem>>, %arg18: memref<128x3xbf16, #tpu.memory_space<vmem>>, %arg19: memref<128x784xbf16, #tpu.memory_space<vmem>>) attributes {dimension_semantics = [#tpu.dimension_semantics<parallel>], iteration_bounds = array<i64: 4>, scalar_prefetch = 0 : i64, scratch_operands = 0 : i64, tpu.core_type = #tpu.core_type<tc>, window_params = [{transform_indices = @transform_0, window_bounds = array<i64: 128, 784>}, {pipeline_mode = #tpu.pipeline_mode<synchronous>, transform_indices = @transform_1, window_bounds = array<i64: 784, 128>}, {pipeline_mode = #tpu.pipeline_mode<synchronous>, transform_indices = @transform_2, window_bounds = array<i64: 1, 128>}, {pipeline_mode = #tpu.pipeline_mode<synchronous>, transform_indices = @transform_3, window_bounds = array<i64: 128, 64>}, {pipeline_mode = #tpu.pipeline_mode<synchronous>, transform_indices = @transform_4, window_bounds = array<i64: 1, 64>}, {pipeline_mode = #tpu.pipeline_mode<synchronous>, transform_indices = @transform_5, window_bounds = array<i64: 64, 12>}, {pipeline_mode = #tpu.pipeline_mode<synchronous>, transform_indices = @transform_6, window_bounds = array<i64: 1, 12>}, {pipeline_mode = #tpu.pipeline_mode<synchronous>, transform_indices = @transform_7, window_bounds = array<i64: 12, 128>}, {pipeline_mode = #tpu.pipeline_mode<synchronous>, transform_indices = @transform_8, window_bounds = array<i64: 1, 128>}, {pipeline_mode = #tpu.pipeline_mode<synchronous>, transform_indices = @transform_9, window_bounds = array<i64: 128, 12>}, {pipeline_mode = #tpu.pipeline_mode<synchronous>, transform_indices = @transform_10, window_bounds = array<i64: 1, 12>}, {pipeline_mode = #tpu.pipeline_mode<synchronous>, transform_indices = @transform_11, window_bounds = array<i64: 12, 64>}, {pipeline_mode = #tpu.pipeline_mode<synchronous>, transform_indices = @transform_12, window_bounds = array<i64: 1, 64>}, {pipeline_mode = #tpu.pipeline_mode<synchronous>, transform_indices = @transform_13, window_bounds = array<i64: 64, 128>}, {pipeline_mode = #tpu.pipeline_mode<synchronous>, transform_indices = @transform_14, window_bounds = array<i64: 1, 128>}, {pipeline_mode = #tpu.pipeline_mode<synchronous>, transform_indices = @transform_15, window_bounds = array<i64: 128, 784>}, {pipeline_mode = #tpu.pipeline_mode<synchronous>, transform_indices = @transform_16, window_bounds = array<i64: 1, 784>}, {transform_indices = @transform_17, window_bounds = array<i64: 128, 3>}, {transform_indices = @transform_18, window_bounds = array<i64: 128, 784>}]} {
    %c0 = arith.constant 0 : index
    %c0_0 = arith.constant 0 : index
    %0 = vector.load %arg1[%c0, %c0_0] : memref<128x784xbf16, #tpu.memory_space<vmem>>, vector<128x784xbf16>
    %c0_1 = arith.constant 0 : index
    %c0_2 = arith.constant 0 : index
    %1 = vector.load %arg2[%c0_1, %c0_2] : memref<784x128xbf16, #tpu.memory_space<vmem>>, vector<784x128xbf16>
    %cst = arith.constant dense<0.000000e+00> : vector<128x128xf32>
    %2 = tpu.matmul %0, %1, %cst {dimension_numbers = #tpu.dot_dimension_numbers<[1], [0], [0], [1], [0, 0, 1, 1], [], []>} : vector<128x784xbf16>, vector<784x128xbf16>, vector<128x128xf32> -> vector<128x128xf32>
    %c0_3 = arith.constant 0 : index
    %c0_4 = arith.constant 0 : index
    %3 = vector.load %arg3[%c0_3, %c0_4] : memref<1x128xf32, #tpu.memory_space<vmem>>, vector<1x128xf32>
    %4 = vector.broadcast %3 : vector<1x128xf32> to vector<128x128xf32>
    %5 = arith.addf %2, %4 : vector<128x128xf32>
    %cst_5 = arith.constant 0.000000e+00 : f32
    %6 = vector.broadcast %cst_5 : f32 to vector<128x128xf32>
    %7 = arith.maximumf %5, %6 : vector<128x128xf32>
    %8 = arith.truncf %7 : vector<128x128xf32> to vector<128x128xbf16>
    %c0_6 = arith.constant 0 : index
    %c0_7 = arith.constant 0 : index
    %9 = vector.load %arg4[%c0_6, %c0_7] : memref<128x64xbf16, #tpu.memory_space<vmem>>, vector<128x64xbf16>
    %cst_8 = arith.constant dense<0.000000e+00> : vector<128x64xf32>
    %10 = tpu.matmul %8, %9, %cst_8 {dimension_numbers = #tpu.dot_dimension_numbers<[1], [0], [0], [1], [0, 0, 1, 1], [], []>} : vector<128x128xbf16>, vector<128x64xbf16>, vector<128x64xf32> -> vector<128x64xf32>
    %c0_9 = arith.constant 0 : index
    %c0_10 = arith.constant 0 : index
    %11 = vector.load %arg5[%c0_9, %c0_10] : memref<1x64xf32, #tpu.memory_space<vmem>>, vector<1x64xf32>
    %12 = vector.broadcast %11 : vector<1x64xf32> to vector<128x64xf32>
    %13 = arith.addf %10, %12 : vector<128x64xf32>
    %cst_11 = arith.constant 0.000000e+00 : f32
    %14 = vector.broadcast %cst_11 : f32 to vector<128x64xf32>
    %15 = arith.maximumf %13, %14 : vector<128x64xf32>
    %16 = arith.truncf %15 : vector<128x64xf32> to vector<128x64xbf16>
    %c0_12 = arith.constant 0 : index
    %c0_13 = arith.constant 0 : index
    %17 = vector.load %arg6[%c0_12, %c0_13] : memref<64x12xbf16, #tpu.memory_space<vmem>>, vector<64x12xbf16>
    %cst_14 = arith.constant dense<0.000000e+00> : vector<128x12xf32>
    %18 = tpu.matmul %16, %17, %cst_14 {dimension_numbers = #tpu.dot_dimension_numbers<[1], [0], [0], [1], [0, 0, 1, 1], [], []>} : vector<128x64xbf16>, vector<64x12xbf16>, vector<128x12xf32> -> vector<128x12xf32>
    %c0_15 = arith.constant 0 : index
    %c0_16 = arith.constant 0 : index
    %19 = vector.load %arg7[%c0_15, %c0_16] : memref<1x12xf32, #tpu.memory_space<vmem>>, vector<1x12xf32>
    %20 = vector.broadcast %19 : vector<1x12xf32> to vector<128x12xf32>
    %21 = arith.addf %18, %20 : vector<128x12xf32>
    %cst_17 = arith.constant 0.000000e+00 : f32
    %22 = vector.broadcast %cst_17 : f32 to vector<128x12xf32>
    %23 = arith.maximumf %21, %22 : vector<128x12xf32>
    %24 = arith.truncf %23 : vector<128x12xf32> to vector<128x12xbf16>
    %c0_18 = arith.constant 0 : index
    %c0_19 = arith.constant 0 : index
    %25 = vector.load %arg8[%c0_18, %c0_19] : memref<12x128xbf16, #tpu.memory_space<vmem>>, vector<12x128xbf16>
    %cst_20 = arith.constant dense<0.000000e+00> : vector<128x128xf32>
    %26 = tpu.matmul %24, %25, %cst_20 {dimension_numbers = #tpu.dot_dimension_numbers<[1], [0], [0], [1], [0, 0, 1, 1], [], []>} : vector<128x12xbf16>, vector<12x128xbf16>, vector<128x128xf32> -> vector<128x128xf32>
    %c0_21 = arith.constant 0 : index
    %c0_22 = arith.constant 0 : index
    %27 = vector.load %arg9[%c0_21, %c0_22] : memref<1x128xf32, #tpu.memory_space<vmem>>, vector<1x128xf32>
    %28 = vector.broadcast %27 : vector<1x128xf32> to vector<128x128xf32>
    %29 = arith.addf %26, %28 : vector<128x128xf32>
    %30 = vector.extract_strided_slice %29 {offsets = [0, 0], sizes = [128, 3], strides = [1, 1]} : vector<128x128xf32> to vector<128x3xf32>
    %31 = arith.truncf %30 : vector<128x3xf32> to vector<128x3xbf16>
    %c0_23 = arith.constant 0 : index
    %c0_24 = arith.constant 0 : index
    %32 = vector.load %arg18[%c0_23, %c0_24] : memref<128x3xbf16, #tpu.memory_space<vmem>>, vector<128x3xbf16>
    tpu.vector_store %arg18[%c0_23, %c0_24], %31 {strides = array<i32>} : memref<128x3xbf16, #tpu.memory_space<vmem>>, vector<128x3xbf16>,
    %33 = arith.truncf %29 : vector<128x128xf32> to vector<128x128xbf16>
    %c0_25 = arith.constant 0 : index
    %c0_26 = arith.constant 0 : index
    %34 = vector.load %arg10[%c0_25, %c0_26] : memref<128x12xbf16, #tpu.memory_space<vmem>>, vector<128x12xbf16>
    %cst_27 = arith.constant dense<0.000000e+00> : vector<128x12xf32>
    %35 = tpu.matmul %33, %34, %cst_27 {dimension_numbers = #tpu.dot_dimension_numbers<[1], [0], [0], [1], [0, 0, 1, 1], [], []>} : vector<128x128xbf16>, vector<128x12xbf16>, vector<128x12xf32> -> vector<128x12xf32>
    %c0_28 = arith.constant 0 : index
    %c0_29 = arith.constant 0 : index
    %36 = vector.load %arg11[%c0_28, %c0_29] : memref<1x12xf32, #tpu.memory_space<vmem>>, vector<1x12xf32>
    %37 = vector.broadcast %36 : vector<1x12xf32> to vector<128x12xf32>
    %38 = arith.addf %35, %37 : vector<128x12xf32>
    %cst_30 = arith.constant 0.000000e+00 : f32
    %39 = vector.broadcast %cst_30 : f32 to vector<128x12xf32>
    %40 = arith.maximumf %38, %39 : vector<128x12xf32>
    %41 = arith.truncf %40 : vector<128x12xf32> to vector<128x12xbf16>
    %c0_31 = arith.constant 0 : index
    %c0_32 = arith.constant 0 : index
    %42 = vector.load %arg12[%c0_31, %c0_32] : memref<12x64xbf16, #tpu.memory_space<vmem>>, vector<12x64xbf16>
    %cst_33 = arith.constant dense<0.000000e+00> : vector<128x64xf32>
    %43 = tpu.matmul %41, %42, %cst_33 {dimension_numbers = #tpu.dot_dimension_numbers<[1], [0], [0], [1], [0, 0, 1, 1], [], []>} : vector<128x12xbf16>, vector<12x64xbf16>, vector<128x64xf32> -> vector<128x64xf32>
    %c0_34 = arith.constant 0 : index
    %c0_35 = arith.constant 0 : index
    %44 = vector.load %arg13[%c0_34, %c0_35] : memref<1x64xf32, #tpu.memory_space<vmem>>, vector<1x64xf32>
    %45 = vector.broadcast %44 : vector<1x64xf32> to vector<128x64xf32>
    %46 = arith.addf %43, %45 : vector<128x64xf32>
    %cst_36 = arith.constant 0.000000e+00 : f32
    %47 = vector.broadcast %cst_36 : f32 to vector<128x64xf32>
    %48 = arith.maximumf %46, %47 : vector<128x64xf32>
    %49 = arith.truncf %48 : vector<128x64xf32> to vector<128x64xbf16>
    %c0_37 = arith.constant 0 : index
    %c0_38 = arith.constant 0 : index
    %50 = vector.load %arg14[%c0_37, %c0_38] : memref<64x128xbf16, #tpu.memory_space<vmem>>, vector<64x128xbf16>
    %cst_39 = arith.constant dense<0.000000e+00> : vector<128x128xf32>
    %51 = tpu.matmul %49, %50, %cst_39 {dimension_numbers = #tpu.dot_dimension_numbers<[1], [0], [0], [1], [0, 0, 1, 1], [], []>} : vector<128x64xbf16>, vector<64x128xbf16>, vector<128x128xf32> -> vector<128x128xf32>
    %c0_40 = arith.constant 0 : index
    %c0_41 = arith.constant 0 : index
    %52 = vector.load %arg15[%c0_40, %c0_41] : memref<1x128xf32, #tpu.memory_space<vmem>>, vector<1x128xf32>
    %53 = vector.broadcast %52 : vector<1x128xf32> to vector<128x128xf32>
    %54 = arith.addf %51, %53 : vector<128x128xf32>
    %cst_42 = arith.constant 0.000000e+00 : f32
    %55 = vector.broadcast %cst_42 : f32 to vector<128x128xf32>
    %56 = arith.maximumf %54, %55 : vector<128x128xf32>
    %57 = arith.truncf %56 : vector<128x128xf32> to vector<128x128xbf16>
    %c0_43 = arith.constant 0 : index
    %c0_44 = arith.constant 0 : index
    %58 = vector.load %arg16[%c0_43, %c0_44] : memref<128x784xbf16, #tpu.memory_space<vmem>>, vector<128x784xbf16>
    %cst_45 = arith.constant dense<0.000000e+00> : vector<128x784xf32>
    %59 = tpu.matmul %57, %58, %cst_45 {dimension_numbers = #tpu.dot_dimension_numbers<[1], [0], [0], [1], [0, 0, 1, 1], [], []>} : vector<128x128xbf16>, vector<128x784xbf16>, vector<128x784xf32> -> vector<128x784xf32>
    %c0_46 = arith.constant 0 : index
    %c0_47 = arith.constant 0 : index
    %60 = vector.load %arg17[%c0_46, %c0_47] : memref<1x784xf32, #tpu.memory_space<vmem>>, vector<1x784xf32>
    %61 = vector.broadcast %60 : vector<1x784xf32> to vector<128x784xf32>
    %62 = arith.addf %59, %61 : vector<128x784xf32>
    %63 = arith.negf %62 : vector<128x784xf32>
    %64 = math.exp %63 : vector<128x784xf32>
    %cst_48 = arith.constant 1.000000e+00 : f32
    %65 = vector.broadcast %cst_48 : f32 to vector<128x784xf32>
    %66 = arith.addf %65, %64 : vector<128x784xf32>
    %67 = arith.divf %65, %66 : vector<128x784xf32>
    %68 = arith.truncf %67 : vector<128x784xf32> to vector<128x784xbf16>
    %c0_49 = arith.constant 0 : index
    %c0_50 = arith.constant 0 : index
    %69 = vector.load %arg19[%c0_49, %c0_50] : memref<128x784xbf16, #tpu.memory_space<vmem>>, vector<128x784xbf16>
    tpu.vector_store %arg19[%c0_49, %c0_50], %68 {strides = array<i32>} : memref<128x784xbf16, #tpu.memory_space<vmem>>, vector<128x784xbf16>,
    return
  }
  func.func @transform_0(%arg0: i32) -> (i32, i32) {
    %c0_i32 = arith.constant 0 : i32
    %c0_i32_0 = arith.constant 0 : i32
    return %arg0, %c0_i32 : i32, i32
  }
  func.func @transform_1(%arg0: i32) -> (i32, i32) {
    %c0_i32 = arith.constant 0 : i32
    %c0_i32_0 = arith.constant 0 : i32
    %c0_i32_1 = arith.constant 0 : i32
    return %c0_i32, %c0_i32_0 : i32, i32
  }
  func.func @transform_2(%arg0: i32) -> (i32, i32) {
    %c0_i32 = arith.constant 0 : i32
    %c0_i32_0 = arith.constant 0 : i32
    %c0_i32_1 = arith.constant 0 : i32
    return %c0_i32, %c0_i32_0 : i32, i32
  }
  func.func @transform_3(%arg0: i32) -> (i32, i32) {
    %c0_i32 = arith.constant 0 : i32
    %c0_i32_0 = arith.constant 0 : i32
    %c0_i32_1 = arith.constant 0 : i32
    return %c0_i32, %c0_i32_0 : i32, i32
  }
  func.func @transform_4(%arg0: i32) -> (i32, i32) {
    %c0_i32 = arith.constant 0 : i32
    %c0_i32_0 = arith.constant 0 : i32
    %c0_i32_1 = arith.constant 0 : i32
    return %c0_i32, %c0_i32_0 : i32, i32
  }
  func.func @transform_5(%arg0: i32) -> (i32, i32) {
    %c0_i32 = arith.constant 0 : i32
    %c0_i32_0 = arith.constant 0 : i32
    %c0_i32_1 = arith.constant 0 : i32
    return %c0_i32, %c0_i32_0 : i32, i32
  }
  func.func @transform_6(%arg0: i32) -> (i32, i32) {
    %c0_i32 = arith.constant 0 : i32
    %c0_i32_0 = arith.constant 0 : i32
    %c0_i32_1 = arith.constant 0 : i32
    return %c0_i32, %c0_i32_0 : i32, i32
  }
  func.func @transform_7(%arg0: i32) -> (i32, i32) {
    %c0_i32 = arith.constant 0 : i32
    %c0_i32_0 = arith.constant 0 : i32
    %c0_i32_1 = arith.constant 0 : i32
    return %c0_i32, %c0_i32_0 : i32, i32
  }
  func.func @transform_8(%arg0: i32) -> (i32, i32) {
    %c0_i32 = arith.constant 0 : i32
    %c0_i32_0 = arith.constant 0 : i32
    %c0_i32_1 = arith.constant 0 : i32
    return %c0_i32, %c0_i32_0 : i32, i32
  }
  func.func @transform_9(%arg0: i32) -> (i32, i32) {
    %c0_i32 = arith.constant 0 : i32
    %c0_i32_0 = arith.constant 0 : i32
    %c0_i32_1 = arith.constant 0 : i32
    return %c0_i32, %c0_i32_0 : i32, i32
  }
  func.func @transform_10(%arg0: i32) -> (i32, i32) {
    %c0_i32 = arith.constant 0 : i32
    %c0_i32_0 = arith.constant 0 : i32
    %c0_i32_1 = arith.constant 0 : i32
    return %c0_i32, %c0_i32_0 : i32, i32
  }
  func.func @transform_11(%arg0: i32) -> (i32, i32) {
    %c0_i32 = arith.constant 0 : i32
    %c0_i32_0 = arith.constant 0 : i32
    %c0_i32_1 = arith.constant 0 : i32
    return %c0_i32, %c0_i32_0 : i32, i32
  }
  func.func @transform_12(%arg0: i32) -> (i32, i32) {
    %c0_i32 = arith.constant 0 : i32
    %c0_i32_0 = arith.constant 0 : i32
    %c0_i32_1 = arith.constant 0 : i32
    return %c0_i32, %c0_i32_0 : i32, i32
  }
  func.func @transform_13(%arg0: i32) -> (i32, i32) {
    %c0_i32 = arith.constant 0 : i32
    %c0_i32_0 = arith.constant 0 : i32
    %c0_i32_1 = arith.constant 0 : i32
    return %c0_i32, %c0_i32_0 : i32, i32
  }
  func.func @transform_14(%arg0: i32) -> (i32, i32) {
    %c0_i32 = arith.constant 0 : i32
    %c0_i32_0 = arith.constant 0 : i32
    %c0_i32_1 = arith.constant 0 : i32
    return %c0_i32, %c0_i32_0 : i32, i32
  }
  func.func @transform_15(%arg0: i32) -> (i32, i32) {
    %c0_i32 = arith.constant 0 : i32
    %c0_i32_0 = arith.constant 0 : i32
    %c0_i32_1 = arith.constant 0 : i32
    return %c0_i32, %c0_i32_0 : i32, i32
  }
  func.func @transform_16(%arg0: i32) -> (i32, i32) {
    %c0_i32 = arith.constant 0 : i32
    %c0_i32_0 = arith.constant 0 : i32
    %c0_i32_1 = arith.constant 0 : i32
    return %c0_i32, %c0_i32_0 : i32, i32
  }
  func.func @transform_17(%arg0: i32) -> (i32, i32) {
    %c0_i32 = arith.constant 0 : i32
    %c0_i32_0 = arith.constant 0 : i32
    return %arg0, %c0_i32 : i32, i32
  }
  func.func @transform_18(%arg0: i32) -> (i32, i32) {
    %c0_i32 = arith.constant 0 : i32
    %c0_i32_0 = arith.constant 0 : i32
    return %arg0, %c0_i32 : i32, i32
  }
}

</mosaic_0001>

<llo_original>
// kernel: tpu_custom_call.1
$region0: #{tpu_custom_call.1}
  #allocation0 [shape = 'u32[]', space=smem, size = 0x4, offset = 0x4, fixed_abs, tag = 'smem constant byte address 0x4 - core index']
  #allocation1 [shape = 'u32[144,128]{1,0:T(1,128)}', space=vmem, size = 0x12000, scoped, tag = 'internal scratch']
  %s0 = inlined_call_operand.vmem [shape: bf16[512,784], index: 0, kind: input, shape index: {}]
  %s1 = inlined_call_operand.vmem [shape: bf16[784,128], index: 1, kind: input, shape index: {}]
  %s2 = inlined_call_operand.vmem [shape: f32[1,128], index: 2, kind: input, shape index: {}]
  %s3 = inlined_call_operand.vmem [shape: bf16[128,64], index: 3, kind: input, shape index: {}]
  %s4 = inlined_call_operand.vmem [shape: f32[1,64], index: 4, kind: input, shape index: {}]
  %s5 = inlined_call_operand.vmem [shape: bf16[64,12], index: 5, kind: input, shape index: {}]
  %s6 = inlined_call_operand.vmem [shape: f32[1,12], index: 6, kind: input, shape index: {}]
  %s7 = inlined_call_operand.vmem [shape: bf16[12,128], index: 7, kind: input, shape index: {}]
  %s8 = inlined_call_operand.vmem [shape: f32[1,128], index: 8, kind: input, shape index: {}]
  %s9 = inlined_call_operand.vmem [shape: bf16[128,12], index: 9, kind: input, shape index: {}]
  %s10 = inlined_call_operand.vmem [shape: f32[1,12], index: 10, kind: input, shape index: {}]
  %s11 = inlined_call_operand.vmem [shape: bf16[12,64], index: 11, kind: input, shape index: {}]
  %s12 = inlined_call_operand.vmem [shape: f32[1,64], index: 12, kind: input, shape index: {}]
  %s13 = inlined_call_operand.vmem [shape: bf16[64,128], index: 13, kind: input, shape index: {}]
  %s14 = inlined_call_operand.vmem [shape: f32[1,128], index: 14, kind: input, shape index: {}]
  %s15 = inlined_call_operand.vmem [shape: bf16[128,784], index: 15, kind: input, shape index: {}]
  %s16 = inlined_call_operand.vmem [shape: f32[1,784], index: 16, kind: input, shape index: {}]
  %s17 = inlined_call_operand.vmem [shape: bf16[512,3], index: 17, kind: output, shape index: {0}]
  %s18 = inlined_call_operand.vmem [shape: bf16[512,784], index: 18, kind: output, shape index: {1}]
  %19 = xla_tuple %s17, %s18
  %s20 = sld [smem:[#allocation0]]
  $region109: #{tpu_custom_call.1} parent=0
    _
  %s22 = ssub.s32 1, %s20
  %s23 = scalar_select 0, %s22, %s20
  loop: start=0, step=1, limit=6
  $region2: #{tpu_custom_call.1} parent=0 // loop_pre_header
    _
  $region3: #{tpu_custom_call.1} parent=0 // loop_header
    %s25 = sphi 0, %s29
    %p26 = scmp.ge.s32.totalorder %s25, 6
    %s35 = sphi 0, %s37
    %s38 = sphi 0, %s35
    %s39 = sphi 0, %s38
    %s55 = sphi 0, %s39
    %s59 = sphi 0, %s59
    %s61 = sphi 0, %s59
    %s62 = sphi 0, %s61
    %s76 = sphi 0, %s62
    %s80 = sphi 0, %s80
    %s82 = sphi 0, %s80
    %s83 = sphi 0, %s82
    %s97 = sphi 0, %s83
    %s101 = sphi 0, %s101
    %s103 = sphi 0, %s101
    %s104 = sphi 0, %s103
    %s118 = sphi 0, %s104
    %s122 = sphi 0, %s122
    %s124 = sphi 0, %s122
    %s125 = sphi 0, %s124
    %s139 = sphi 0, %s125
    %s143 = sphi 0, %s143
    %s145 = sphi 0, %s143
    %s146 = sphi 0, %s145
    %s160 = sphi 0, %s146
    %s164 = sphi 0, %s164
    %s166 = sphi 0, %s164
    %s167 = sphi 0, %s166
    %s181 = sphi 0, %s167
    %s185 = sphi 0, %s185
    %s187 = sphi 0, %s185
    %s188 = sphi 0, %s187
    %s202 = sphi 0, %s188
    %s206 = sphi 0, %s206
    %s208 = sphi 0, %s206
    %s209 = sphi 0, %s208
    %s223 = sphi 0, %s209
    %s227 = sphi 0, %s227
    %s229 = sphi 0, %s227
    %s230 = sphi 0, %s229
    %s244 = sphi 0, %s230
    %s248 = sphi 0, %s248
    %s250 = sphi 0, %s248
    %s251 = sphi 0, %s250
    %s265 = sphi 0, %s251
    %s269 = sphi 0, %s269
    %s271 = sphi 0, %s269
    %s272 = sphi 0, %s271
    %s286 = sphi 0, %s272
    %s290 = sphi 0, %s290
    %s292 = sphi 0, %s290
    %s293 = sphi 0, %s292
    %s307 = sphi 0, %s293
    %s311 = sphi 0, %s311
    %s313 = sphi 0, %s311
    %s314 = sphi 0, %s313
    %s328 = sphi 0, %s314
    %s332 = sphi 0, %s332
    %s334 = sphi 0, %s332
    %s335 = sphi 0, %s334
    %s349 = sphi 0, %s335
    %s353 = sphi 0, %s353
    %s355 = sphi 0, %s353
    %s356 = sphi 0, %s355
    %s370 = sphi 0, %s356
    %s374 = sphi 0, %s374
    %s376 = sphi 0, %s374
    %s377 = sphi 0, %s376
    %s391 = sphi 0, %s377
    %s397 = sphi 0, %s399
    %s400 = sphi 0, %s397
    %s401 = sphi 0, %s400
    %s417 = sphi 0, %s401
    %s423 = sphi 0, %s425
    %s426 = sphi 0, %s423
    %s427 = sphi 0, %s426
    %s443 = sphi 0, %s427
  $region4: #{tpu_custom_call.1} parent=0 // loop_header_branch
    %28 = sbr.rel (%p26) target = $region8
  $region5: #{tpu_custom_call.1} parent=0 // loop_body
    %s30 = ssub.s32 %s25, 1
    %s31 = ssub.s32 %s25, 2
    %s32 = sadd.s32 %s25, 1
    %s33 = ssub.s32 %s25, %s32
    %p34 = scmp.eq.s32.totalorder %s33, 0
    %s36 = sadd.s32 %s35, 1
    %s37 = scalar_select %p34, %s35, %s36
    %p40 = pneg %p34
    %p41 = scmp.eq.s32.totalorder %s25, 3
    %p42 = por %p40, %p41
    %p43 = scmp.ne.s32.totalorder %s35, %s38
    %p44 = scmp.eq.s32.totalorder %s25, 0
    %p45 = por %p43, %p44
    %p46 = scmp.ne.s32.totalorder %s35, %s38
    %p47 = scmp.eq.s32.totalorder %s30, 3
    %p48 = por %p46, %p47
    %p49 = scmp.ne.s32.totalorder %s38, %s39
    %p50 = scmp.eq.s32.totalorder %s30, 0
    %p51 = por %p49, %p50
    %p52 = scmp.ne.s32.totalorder %s38, %s39
    %p53 = scmp.eq.s32.totalorder %s31, 3
    %p54 = por %p52, %p53
    %p56 = scmp.ne.s32.totalorder %s39, %s55
    %p57 = scmp.eq.s32.totalorder %s31, 0
    %p58 = por %p56, %p57
    %s60 = sadd.s32 %s59, 1
    %p63 = scmp.eq.s32.totalorder %s25, 3
    %p64 = scmp.ne.s32.totalorder %s59, %s61
    %p65 = scmp.eq.s32.totalorder %s25, 0
    %p66 = por %p64, %p65
    %p67 = scmp.ne.s32.totalorder %s59, %s61
    %p68 = scmp.eq.s32.totalorder %s30, 3
    %p69 = por %p67, %p68
    %p70 = scmp.ne.s32.totalorder %s61, %s62
    %p71 = scmp.eq.s32.totalorder %s30, 0
    %p72 = por %p70, %p71
    %p73 = scmp.ne.s32.totalorder %s61, %s62
    %p74 = scmp.eq.s32.totalorder %s31, 3
    %p75 = por %p73, %p74
    %p77 = scmp.ne.s32.totalorder %s62, %s76
    %p78 = scmp.eq.s32.totalorder %s31, 0
    %p79 = por %p77, %p78
    %s81 = sadd.s32 %s80, 1
    %p84 = scmp.eq.s32.totalorder %s25, 3
    %p85 = scmp.ne.s32.totalorder %s80, %s82
    %p86 = scmp.eq.s32.totalorder %s25, 0
    %p87 = por %p85, %p86
    %p88 = scmp.ne.s32.totalorder %s80, %s82
    %p89 = scmp.eq.s32.totalorder %s30, 3
    %p90 = por %p88, %p89
    %p91 = scmp.ne.s32.totalorder %s82, %s83
    %p92 = scmp.eq.s32.totalorder %s30, 0
    %p93 = por %p91, %p92
    %p94 = scmp.ne.s32.totalorder %s82, %s83
    %p95 = scmp.eq.s32.totalorder %s31, 3
    %p96 = por %p94, %p95
    %p98 = scmp.ne.s32.totalorder %s83, %s97
    %p99 = scmp.eq.s32.totalorder %s31, 0
    %p100 = por %p98, %p99
    %s102 = sadd.s32 %s101, 1
    %p105 = scmp.eq.s32.totalorder %s25, 3
    %p106 = scmp.ne.s32.totalorder %s101, %s103
    %p107 = scmp.eq.s32.totalorder %s25, 0
    %p108 = por %p106, %p107
    %p109 = scmp.ne.s32.totalorder %s101, %s103
    %p110 = scmp.eq.s32.totalorder %s30, 3
    %p111 = por %p109, %p110
    %p112 = scmp.ne.s32.totalorder %s103, %s104
    %p113 = scmp.eq.s32.totalorder %s30, 0
    %p114 = por %p112, %p113
    %p115 = scmp.ne.s32.totalorder %s103, %s104
    %p116 = scmp.eq.s32.totalorder %s31, 3
    %p117 = por %p115, %p116
    %p119 = scmp.ne.s32.totalorder %s104, %s118
    %p120 = scmp.eq.s32.totalorder %s31, 0
    %p121 = por %p119, %p120
    %s123 = sadd.s32 %s122, 1
    %p126 = scmp.eq.s32.totalorder %s25, 3
    %p127 = scmp.ne.s32.totalorder %s122, %s124
    %p128 = scmp.eq.s32.totalorder %s25, 0
    %p129 = por %p127, %p128
    %p130 = scmp.ne.s32.totalorder %s122, %s124
    %p131 = scmp.eq.s32.totalorder %s30, 3
    %p132 = por %p130, %p131
    %p133 = scmp.ne.s32.totalorder %s124, %s125
    %p134 = scmp.eq.s32.totalorder %s30, 0
    %p135 = por %p133, %p134
    %p136 = scmp.ne.s32.totalorder %s124, %s125
    %p137 = scmp.eq.s32.totalorder %s31, 3
    %p138 = por %p136, %p137
    %p140 = scmp.ne.s32.totalorder %s125, %s139
    %p141 = scmp.eq.s32.totalorder %s31, 0
    %p142 = por %p140, %p141
    %s144 = sadd.s32 %s143, 1
    %p147 = scmp.eq.s32.totalorder %s25, 3
    %p148 = scmp.ne.s32.totalorder %s143, %s145
    %p149 = scmp.eq.s32.totalorder %s25, 0
    %p150 = por %p148, %p149
    %p151 = scmp.ne.s32.totalorder %s143, %s145
    %p152 = scmp.eq.s32.totalorder %s30, 3
    %p153 = por %p151, %p152
    %p154 = scmp.ne.s32.totalorder %s145, %s146
    %p155 = scmp.eq.s32.totalorder %s30, 0
    %p156 = por %p154, %p155
    %p157 = scmp.ne.s32.totalorder %s145, %s146
    %p158 = scmp.eq.s32.totalorder %s31, 3
    %p159 = por %p157, %p158
    %p161 = scmp.ne.s32.totalorder %s146, %s160
    %p162 = scmp.eq.s32.totalorder %s31, 0
    %p163 = por %p161, %p162
    %s165 = sadd.s32 %s164, 1
    %p168 = scmp.eq.s32.totalorder %s25, 3
    %p169 = scmp.ne.s32.totalorder %s164, %s166
    %p170 = scmp.eq.s32.totalorder %s25, 0
    %p171 = por %p169, %p170
    %p172 = scmp.ne.s32.totalorder %s164, %s166
    %p173 = scmp.eq.s32.totalorder %s30, 3
    %p174 = por %p172, %p173
    %p175 = scmp.ne.s32.totalorder %s166, %s167
    %p176 = scmp.eq.s32.totalorder %s30, 0
    %p177 = por %p175, %p176
    %p178 = scmp.ne.s32.totalorder %s166, %s167
    %p179 = scmp.eq.s32.totalorder %s31, 3
    %p180 = por %p178, %p179
    %p182 = scmp.ne.s32.totalorder %s167, %s181
    %p183 = scmp.eq.s32.totalorder %s31, 0
    %p184 = por %p182, %p183
    %s186 = sadd.s32 %s185, 1
    %p189 = scmp.eq.s32.totalorder %s25, 3
    %p190 = scmp.ne.s32.totalorder %s185, %s187
    %p191 = scmp.eq.s32.totalorder %s25, 0
    %p192 = por %p190, %p191
    %p193 = scmp.ne.s32.totalorder %s185, %s187
    %p194 = scmp.eq.s32.totalorder %s30, 3
    %p195 = por %p193, %p194
    %p196 = scmp.ne.s32.totalorder %s187, %s188
    %p197 = scmp.eq.s32.totalorder %s30, 0
    %p198 = por %p196, %p197
    %p199 = scmp.ne.s32.totalorder %s187, %s188
    %p200 = scmp.eq.s32.totalorder %s31, 3
    %p201 = por %p199, %p200
    %p203 = scmp.ne.s32.totalorder %s188, %s202
    %p204 = scmp.eq.s32.totalorder %s31, 0
    %p205 = por %p203, %p204
    %s207 = sadd.s32 %s206, 1
    %p210 = scmp.eq.s32.totalorder %s25, 3
    %p211 = scmp.ne.s32.totalorder %s206, %s208
    %p212 = scmp.eq.s32.totalorder %s25, 0
    %p213 = por %p211, %p212
    %p214 = scmp.ne.s32.totalorder %s206, %s208
    %p215 = scmp.eq.s32.totalorder %s30, 3
    %p216 = por %p214, %p215
    %p217 = scmp.ne.s32.totalorder %s208, %s209
    %p218 = scmp.eq.s32.totalorder %s30, 0
    %p219 = por %p217, %p218
    %p220 = scmp.ne.s32.totalorder %s208, %s209
    %p221 = scmp.eq.s32.totalorder %s31, 3
    %p222 = por %p220, %p221
    %p224 = scmp.ne.s32.totalorder %s209, %s223
    %p225 = scmp.eq.s32.totalorder %s31, 0
    %p226 = por %p224, %p225
    %s228 = sadd.s32 %s227, 1
    %p231 = scmp.eq.s32.totalorder %s25, 3
    %p232 = scmp.ne.s32.totalorder %s227, %s229
    %p233 = scmp.eq.s32.totalorder %s25, 0
    %p234 = por %p232, %p233
    %p235 = scmp.ne.s32.totalorder %s227, %s229
    %p236 = scmp.eq.s32.totalorder %s30, 3
    %p237 = por %p235, %p236
    %p238 = scmp.ne.s32.totalorder %s229, %s230
    %p239 = scmp.eq.s32.totalorder %s30, 0
    %p240 = por %p238, %p239
    %p241 = scmp.ne.s32.totalorder %s229, %s230
    %p242 = scmp.eq.s32.totalorder %s31, 3
    %p243 = por %p241, %p242
    %p245 = scmp.ne.s32.totalorder %s230, %s244
    %p246 = scmp.eq.s32.totalorder %s31, 0
    %p247 = por %p245, %p246
    %s249 = sadd.s32 %s248, 1
    %p252 = scmp.eq.s32.totalorder %s25, 3
    %p253 = scmp.ne.s32.totalorder %s248, %s250
    %p254 = scmp.eq.s32.totalorder %s25, 0
    %p255 = por %p253, %p254
    %p256 = scmp.ne.s32.totalorder %s248, %s250
    %p257 = scmp.eq.s32.totalorder %s30, 3
    %p258 = por %p256, %p257
    %p259 = scmp.ne.s32.totalorder %s250, %s251
    %p260 = scmp.eq.s32.totalorder %s30, 0
    %p261 = por %p259, %p260
    %p262 = scmp.ne.s32.totalorder %s250, %s251
    %p263 = scmp.eq.s32.totalorder %s31, 3
    %p264 = por %p262, %p263
    %p266 = scmp.ne.s32.totalorder %s251, %s265
    %p267 = scmp.eq.s32.totalorder %s31, 0
    %p268 = por %p266, %p267
    %s270 = sadd.s32 %s269, 1
    %p273 = scmp.eq.s32.totalorder %s25, 3
    %p274 = scmp.ne.s32.totalorder %s269, %s271
    %p275 = scmp.eq.s32.totalorder %s25, 0
    %p276 = por %p274, %p275
    %p277 = scmp.ne.s32.totalorder %s269, %s271
    %p278 = scmp.eq.s32.totalorder %s30, 3
    %p279 = por %p277, %p278
    %p280 = scmp.ne.s32.totalorder %s271, %s272
    %p281 = scmp.eq.s32.totalorder %s30, 0
    %p282 = por %p280, %p281
    %p283 = scmp.ne.s32.totalorder %s271, %s272
    %p284 = scmp.eq.s32.totalorder %s31, 3
    %p285 = por %p283, %p284
    %p287 = scmp.ne.s32.totalorder %s272, %s286
    %p288 = scmp.eq.s32.totalorder %s31, 0
    %p289 = por %p287, %p288
    %s291 = sadd.s32 %s290, 1
    %p294 = scmp.eq.s32.totalorder %s25, 3
    %p295 = scmp.ne.s32.totalorder %s290, %s292
    %p296 = scmp.eq.s32.totalorder %s25, 0
    %p297 = por %p295, %p296
    %p298 = scmp.ne.s32.totalorder %s290, %s292
    %p299 = scmp.eq.s32.totalorder %s30, 3
    %p300 = por %p298, %p299
    %p301 = scmp.ne.s32.totalorder %s292, %s293
    %p302 = scmp.eq.s32.totalorder %s30, 0
    %p303 = por %p301, %p302
    %p304 = scmp.ne.s32.totalorder %s292, %s293
    %p305 = scmp.eq.s32.totalorder %s31, 3
    %p306 = por %p304, %p305
    %p308 = scmp.ne.s32.totalorder %s293, %s307
    %p309 = scmp.eq.s32.totalorder %s31, 0
    %p310 = por %p308, %p309
    %s312 = sadd.s32 %s311, 1
    %p315 = scmp.eq.s32.totalorder %s25, 3
    %p316 = scmp.ne.s32.totalorder %s311, %s313
    %p317 = scmp.eq.s32.totalorder %s25, 0
    %p318 = por %p316, %p317
    %p319 = scmp.ne.s32.totalorder %s311, %s313
    %p320 = scmp.eq.s32.totalorder %s30, 3
    %p321 = por %p319, %p320
    %p322 = scmp.ne.s32.totalorder %s313, %s314
    %p323 = scmp.eq.s32.totalorder %s30, 0
    %p324 = por %p322, %p323
    %p325 = scmp.ne.s32.totalorder %s313, %s314
    %p326 = scmp.eq.s32.totalorder %s31, 3
    %p327 = por %p325, %p326
    %p329 = scmp.ne.s32.totalorder %s314, %s328
    %p330 = scmp.eq.s32.totalorder %s31, 0
    %p331 = por %p329, %p330
    %s333 = sadd.s32 %s332, 1
    %p336 = scmp.eq.s32.totalorder %s25, 3
    %p337 = scmp.ne.s32.totalorder %s332, %s334
    %p338 = scmp.eq.s32.totalorder %s25, 0
    %p339 = por %p337, %p338
    %p340 = scmp.ne.s32.totalorder %s332, %s334
    %p341 = scmp.eq.s32.totalorder %s30, 3
    %p342 = por %p340, %p341
    %p343 = scmp.ne.s32.totalorder %s334, %s335
    %p344 = scmp.eq.s32.totalorder %s30, 0
    %p345 = por %p343, %p344
    %p346 = scmp.ne.s32.totalorder %s334, %s335
    %p347 = scmp.eq.s32.totalorder %s31, 3
    %p348 = por %p346, %p347
    %p350 = scmp.ne.s32.totalorder %s335, %s349
    %p351 = scmp.eq.s32.totalorder %s31, 0
    %p352 = por %p350, %p351
    %s354 = sadd.s32 %s353, 1
    %p357 = scmp.eq.s32.totalorder %s25, 3
    %p358 = scmp.ne.s32.totalorder %s353, %s355
    %p359 = scmp.eq.s32.totalorder %s25, 0
    %p360 = por %p358, %p359
    %p361 = scmp.ne.s32.totalorder %s353, %s355
    %p362 = scmp.eq.s32.totalorder %s30, 3
    %p363 = por %p361, %p362
    %p364 = scmp.ne.s32.totalorder %s355, %s356
    %p365 = scmp.eq.s32.totalorder %s30, 0
    %p366 = por %p364, %p365
    %p367 = scmp.ne.s32.totalorder %s355, %s356
    %p368 = scmp.eq.s32.totalorder %s31, 3
    %p369 = por %p367, %p368
    %p371 = scmp.ne.s32.totalorder %s356, %s370
    %p372 = scmp.eq.s32.totalorder %s31, 0
    %p373 = por %p371, %p372
    %s375 = sadd.s32 %s374, 1
    %p378 = scmp.eq.s32.totalorder %s25, 3
    %p379 = scmp.ne.s32.totalorder %s374, %s376
    %p380 = scmp.eq.s32.totalorder %s25, 0
    %p381 = por %p379, %p380
    %p382 = scmp.ne.s32.totalorder %s374, %s376
    %p383 = scmp.eq.s32.totalorder %s30, 3
    %p384 = por %p382, %p383
    %p385 = scmp.ne.s32.totalorder %s376, %s377
    %p386 = scmp.eq.s32.totalorder %s30, 0
    %p387 = por %p385, %p386
    %p388 = scmp.ne.s32.totalorder %s376, %s377
    %p389 = scmp.eq.s32.totalorder %s31, 3
    %p390 = por %p388, %p389
    %p392 = scmp.ne.s32.totalorder %s377, %s391
    %p393 = scmp.eq.s32.totalorder %s31, 0
    %p394 = por %p392, %p393
    %s395 = ssub.s32 %s25, %s32
    %p396 = scmp.eq.s32.totalorder %s395, 0
    %s398 = sadd.s32 %s397, 1
    %s399 = scalar_select %p396, %s397, %s398
    %p402 = pneg %p396
    %p403 = scmp.eq.s32.totalorder %s25, 3
    %p404 = por %p402, %p403
    %p405 = scmp.ne.s32.totalorder %s397, %s400
    %p406 = scmp.eq.s32.totalorder %s25, 0
    %p407 = por %p405, %p406
    %p408 = scmp.ne.s32.totalorder %s397, %s400
    %p409 = scmp.eq.s32.totalorder %s30, 3
    %p410 = por %p408, %p409
    %p411 = scmp.ne.s32.totalorder %s400, %s401
    %p412 = scmp.eq.s32.totalorder %s30, 0
    %p413 = por %p411, %p412
    %p414 = scmp.ne.s32.totalorder %s400, %s401
    %p415 = scmp.eq.s32.totalorder %s31, 3
    %p416 = por %p414, %p415
    %p418 = scmp.ne.s32.totalorder %s401, %s417
    %p419 = scmp.eq.s32.totalorder %s31, 0
    %p420 = por %p418, %p419
    %s421 = ssub.s32 %s25, %s32
    %p422 = scmp.eq.s32.totalorder %s421, 0
    %s424 = sadd.s32 %s423, 1
    %s425 = scalar_select %p422, %s423, %s424
    %p428 = pneg %p422
    %p429 = scmp.eq.s32.totalorder %s25, 3
    %p430 = por %p428, %p429
    %p431 = scmp.ne.s32.totalorder %s423, %s426
    %p432 = scmp.eq.s32.totalorder %s25, 0
    %p433 = por %p431, %p432
    %p434 = scmp.ne.s32.totalorder %s423, %s426
    %p435 = scmp.eq.s32.totalorder %s30, 3
    %p436 = por %p434, %p435
    %p437 = scmp.ne.s32.totalorder %s426, %s427
    %p438 = scmp.eq.s32.totalorder %s30, 0
    %p439 = por %p437, %p438
    %p440 = scmp.ne.s32.totalorder %s426, %s427
    %p441 = scmp.eq.s32.totalorder %s31, 3
    %p442 = por %p440, %p441
    %p444 = scmp.ne.s32.totalorder %s427, %s443
    %p445 = scmp.eq.s32.totalorder %s31, 0
    %p446 = por %p444, %p445
    %p447 = scmp.le.s32.totalorder 1, %s25
    %p448 = scmp.lt.s32.totalorder %s25, 5
    %p449 = pnand %p447, %p448
    %p450 = pneg %p449
    // Predicated region
    $region9: #{tpu_custom_call.1} parent=5 // pred_check
      _
    $region10: #{tpu_custom_call.1} parent=5 // pred_check_branch
      %452 = sbr.rel (%p449) target = $region12
    $region11: #{tpu_custom_call.1} parent=5 // pred_region
      %s453 = ssub.s32 %s25, 1
      // Predicated region
      $region13: #{tpu_custom_call.1} parent=11 // pred_check
        %p454 = pneg %p72
      $region14: #{tpu_custom_call.1} parent=11 // pred_check_branch
        %456 = sbr.rel (%p454) target = $region16
      $region15: #{tpu_custom_call.1} parent=11 // pred_region
        _
      $region16: #{tpu_custom_call.1} parent=11 // pred_fallthru
        _
      // Predicated region
      $region17: #{tpu_custom_call.1} parent=11 // pred_check
        %p457 = pneg %p93
      $region18: #{tpu_custom_call.1} parent=11 // pred_check_branch
        %459 = sbr.rel (%p457) target = $region20
      $region19: #{tpu_custom_call.1} parent=11 // pred_region
        _
      $region20: #{tpu_custom_call.1} parent=11 // pred_fallthru
        _
      // Predicated region
      $region21: #{tpu_custom_call.1} parent=11 // pred_check
        %p460 = pneg %p114
      $region22: #{tpu_custom_call.1} parent=11 // pred_check_branch
        %462 = sbr.rel (%p460) target = $region24
      $region23: #{tpu_custom_call.1} parent=11 // pred_region
        _
      $region24: #{tpu_custom_call.1} parent=11 // pred_fallthru
        _
      // Predicated region
      $region25: #{tpu_custom_call.1} parent=11 // pred_check
        %p463 = pneg %p135
      $region26: #{tpu_custom_call.1} parent=11 // pred_check_branch
        %465 = sbr.rel (%p463) target = $region28
      $region27: #{tpu_custom_call.1} parent=11 // pred_region
        _
      $region28: #{tpu_custom_call.1} parent=11 // pred_fallthru
        _
      // Predicated region
      $region29: #{tpu_custom_call.1} parent=11 // pred_check
        %p466 = pneg %p156
      $region30: #{tpu_custom_call.1} parent=11 // pred_check_branch
        %468 = sbr.rel (%p466) target = $region32
      $region31: #{tpu_custom_call.1} parent=11 // pred_region
        _
      $region32: #{tpu_custom_call.1} parent=11 // pred_fallthru
        _
      // Predicated region
      $region33: #{tpu_custom_call.1} parent=11 // pred_check
        %p469 = pneg %p177
      $region34: #{tpu_custom_call.1} parent=11 // pred_check_branch
        %471 = sbr.rel (%p469) target = $region36
      $region35: #{tpu_custom_call.1} parent=11 // pred_region
        _
      $region36: #{tpu_custom_call.1} parent=11 // pred_fallthru
        _
      // Predicated region
      $region37: #{tpu_custom_call.1} parent=11 // pred_check
        %p472 = pneg %p198
      $region38: #{tpu_custom_call.1} parent=11 // pred_check_branch
        %474 = sbr.rel (%p472) target = $region40
      $region39: #{tpu_custom_call.1} parent=11 // pred_region
        _
      $region40: #{tpu_custom_call.1} parent=11 // pred_fallthru
        _
      // Predicated region
      $region41: #{tpu_custom_call.1} parent=11 // pred_check
        %p475 = pneg %p219
      $region42: #{tpu_custom_call.1} parent=11 // pred_check_branch
        %477 = sbr.rel (%p475) target = $region44
      $region43: #{tpu_custom_call.1} parent=11 // pred_region
        _
      $region44: #{tpu_custom_call.1} parent=11 // pred_fallthru
        _
      // Predicated region
      $region45: #{tpu_custom_call.1} parent=11 // pred_check
        %p478 = pneg %p240
      $region46: #{tpu_custom_call.1} parent=11 // pred_check_branch
        %480 = sbr.rel (%p478) target = $region48
      $region47: #{tpu_custom_call.1} parent=11 // pred_region
        _
      $region48: #{tpu_custom_call.1} parent=11 // pred_fallthru
        _
      // Predicated region
      $region49: #{tpu_custom_call.1} parent=11 // pred_check
        %p481 = pneg %p261
      $region50: #{tpu_custom_call.1} parent=11 // pred_check_branch
        %483 = sbr.rel (%p481) target = $region52
      $region51: #{tpu_custom_call.1} parent=11 // pred_region
        _
      $region52: #{tpu_custom_call.1} parent=11 // pred_fallthru
        _
      // Predicated region
      $region53: #{tpu_custom_call.1} parent=11 // pred_check
        %p484 = pneg %p282
      $region54: #{tpu_custom_call.1} parent=11 // pred_check_branch
        %486 = sbr.rel (%p484) target = $region56
      $region55: #{tpu_custom_call.1} parent=11 // pred_region
        _
      $region56: #{tpu_custom_call.1} parent=11 // pred_fallthru
        _
      // Predicated region
      $region57: #{tpu_custom_call.1} parent=11 // pred_check
        %p487 = pneg %p303
      $region58: #{tpu_custom_call.1} parent=11 // pred_check_branch
        %489 = sbr.rel (%p487) target = $region60
      $region59: #{tpu_custom_call.1} parent=11 // pred_region
        _
      $region60: #{tpu_custom_call.1} parent=11 // pred_fallthru
        _
      // Predicated region
      $region61: #{tpu_custom_call.1} parent=11 // pred_check
        %p490 = pneg %p324
      $region62: #{tpu_custom_call.1} parent=11 // pred_check_branch
        %492 = sbr.rel (%p490) target = $region64
      $region63: #{tpu_custom_call.1} parent=11 // pred_region
        _
      $region64: #{tpu_custom_call.1} parent=11 // pred_fallthru
        _
      // Predicated region
      $region65: #{tpu_custom_call.1} parent=11 // pred_check
        %p493 = pneg %p345
      $region66: #{tpu_custom_call.1} parent=11 // pred_check_branch
        %495 = sbr.rel (%p493) target = $region68
      $region67: #{tpu_custom_call.1} parent=11 // pred_region
        _
      $region68: #{tpu_custom_call.1} parent=11 // pred_fallthru
        _
      // Predicated region
      $region69: #{tpu_custom_call.1} parent=11 // pred_check
        %p496 = pneg %p366
      $region70: #{tpu_custom_call.1} parent=11 // pred_check_branch
        %498 = sbr.rel (%p496) target = $region72
      $region71: #{tpu_custom_call.1} parent=11 // pred_region
        _
      $region72: #{tpu_custom_call.1} parent=11 // pred_fallthru
        _
      // Predicated region
      $region73: #{tpu_custom_call.1} parent=11 // pred_check
        %p499 = pneg %p387
      $region74: #{tpu_custom_call.1} parent=11 // pred_check_branch
        %501 = sbr.rel (%p499) target = $region76
      $region75: #{tpu_custom_call.1} parent=11 // pred_region
        _
      $region76: #{tpu_custom_call.1} parent=11 // pred_fallthru
        _
    $region12: #{tpu_custom_call.1} parent=5 // pred_fallthru
      _
    %p502 = scmp.lt.s32.totalorder %s25, 4
    // Predicated region
    $region77: #{tpu_custom_call.1} parent=5 // pred_check
      %p503 = pneg %p502
    $region78: #{tpu_custom_call.1} parent=5 // pred_check_branch
      %505 = sbr.rel (%p503) target = $region80
    $region79: #{tpu_custom_call.1} parent=5 // pred_region
      // Predicated region
      $region81: #{tpu_custom_call.1} parent=79 // pred_check
        %p506 = pneg %p45
      $region82: #{tpu_custom_call.1} parent=79 // pred_check_branch
        %508 = sbr.rel (%p506) target = $region84
      $region83: #{tpu_custom_call.1} parent=79 // pred_region
        %s509 = smul.u32 16, %s25
        %p510 = scmp.lt.s32.totalorder %s509, 63
        %s511 = scalar_select %p510, %s509, 63
        %s512 = smul.addr %s511, 7
        %s513 = smul.addr %s512, 4
        %s514 = scalar_lea.vmem %s0, %s513
        %s515 = smul.u32 16, %s25
      $region84: #{tpu_custom_call.1} parent=79 // pred_fallthru
        _
    $region80: #{tpu_custom_call.1} parent=5 // pred_fallthru
      _
    %p516 = scmp.le.s32.totalorder 1, %s25
    %p517 = scmp.lt.s32.totalorder %s25, 5
    %p518 = pnand %p516, %p517
    %p519 = pneg %p518
    // Predicated region
    $region85: #{tpu_custom_call.1} parent=5 // pred_check
      _
    $region86: #{tpu_custom_call.1} parent=5 // pred_check_branch
      %521 = sbr.rel (%p518) target = $region88
    $region87: #{tpu_custom_call.1} parent=5 // pred_region
      %s522 = ssub.s32 %s25, 1
      %s523 = smul.u32 16, %s30
      %p524 = scmp.lt.s32.totalorder %s523, 63
      %s525 = scalar_select %p524, %s523, 63
      %s526 = smul.addr %s525, 7
      %s527 = smul.addr %s526, 4
      %s528 = scalar_lea.vmem %s0, %s527
      %p529 = pneg %p51
      %p530 = pneg %p48
      %p531 = pneg %p72
      %p532 = pneg %p69
      %p533 = pneg %p93
      %p534 = pneg %p90
      %p535 = pneg %p114
      %p536 = pneg %p111
      %p537 = pneg %p135
      %p538 = pneg %p132
      %p539 = pneg %p156
      %p540 = pneg %p153
      %p541 = pneg %p177
      %p542 = pneg %p174
      %p543 = pneg %p198
      %p544 = pneg %p195
      %p545 = pneg %p219
      %p546 = pneg %p216
      %p547 = pneg %p240
      %p548 = pneg %p237
      %p549 = pneg %p261
      %p550 = pneg %p258
      %p551 = pneg %p282
      %p552 = pneg %p279
      %p553 = pneg %p303
      %p554 = pneg %p300
      %p555 = pneg %p324
      %p556 = pneg %p321
      %p557 = pneg %p345
      %p558 = pneg %p342
      %p559 = pneg %p366
      %p560 = pneg %p363
      %p561 = pneg %p387
      %p562 = pneg %p384
      %p563 = pneg %p413
      %p564 = pneg %p410
      %s565 = smul.u32 16, %s30
      %p566 = scmp.lt.s32.totalorder %s565, 63
      %s567 = scalar_select %p566, %s565, 63
      %s568 = smul.addr %s567, 4
      %s569 = scalar_lea.vmem %s17, %s568
      %p570 = pneg %p439
      %p571 = pneg %p436
      %s572 = smul.u32 16, %s30
      %p573 = scmp.lt.s32.totalorder %s572, 63
      %s574 = scalar_select %p573, %s572, 63
      %s575 = smul.addr %s574, 7
      %s576 = smul.addr %s575, 4
      %s577 = scalar_lea.vmem %s18, %s576
      %s578 = smul.u32 16, %s30
      %p579 = scmp.lt.s32.totalorder %s578, 63
      %s580 = scalar_select %p579, %s578, 63
      %s581 = smul.addr %s580, 7
      %s582 = smul.addr %s581, 4
      %s583 = scalar_lea.vmem %s0, %s582
      %s584 = smul.u32 16, %s30
      %s585 = smul.u32 16, %s30
      %p586 = scmp.lt.s32.totalorder %s585, 63
      %s587 = scalar_select %p586, %s585, 63
      %s588 = smul.addr %s587, 4
      %s589 = scalar_lea.vmem %s17, %s588
      %s590 = smul.u32 16, %s30
      %s591 = smul.u32 16, %s30
      %p592 = scmp.lt.s32.totalorder %s591, 63
      %s593 = scalar_select %p592, %s591, 63
      %s594 = smul.addr %s593, 7
      %s595 = smul.addr %s594, 4
      %s596 = scalar_lea.vmem %s18, %s595
      %s597 = smul.u32 16, %s30
      %v599 = vld [vmem:[%s583] sm:$0xff]
      %v600 = vld [vmem:[%s583 + $0x8] sm:$0xff]
      %v601 = vld [vmem:[%s583 + $0x10] sm:$0xff]
      %v602 = vld [vmem:[%s583 + $0x18] sm:$0xf]
      %v603 = vld [vmem:[%s583 + $0x1c] sm:$0xff]
      %v604 = vld [vmem:[%s583 + $0x24] sm:$0xff]
      %v605 = vld [vmem:[%s583 + $0x2c] sm:$0xff]
      %v606 = vld [vmem:[%s583 + $0x34] sm:$0xf]
      %v607 = vld [vmem:[%s583 + $0x38] sm:$0xff]
      %v608 = vld [vmem:[%s583 + $0x40] sm:$0xff]
      %v609 = vld [vmem:[%s583 + $0x48] sm:$0xff]
      %v610 = vld [vmem:[%s583 + $0x50] sm:$0xf]
      %v611 = vld [vmem:[%s583 + $0x54] sm:$0xff]
      %v612 = vld [vmem:[%s583 + $0x5c] sm:$0xff]
      %v613 = vld [vmem:[%s583 + $0x64] sm:$0xff]
      %v614 = vld [vmem:[%s583 + $0x6c] sm:$0xf]
      %v615 = vld [vmem:[%s583 + $0x70] sm:$0xff]
      %v616 = vld [vmem:[%s583 + $0x78] sm:$0xff]
      %v617 = vld [vmem:[%s583 + $0x80] sm:$0xff]
      %v618 = vld [vmem:[%s583 + $0x88] sm:$0xf]
      %v619 = vld [vmem:[%s583 + $0x8c] sm:$0xff]
      %v620 = vld [vmem:[%s583 + $0x94] sm:$0xff]
      %v621 = vld [vmem:[%s583 + $0x9c] sm:$0xff]
      %v622 = vld [vmem:[%s583 + $0xa4] sm:$0xf]
      %v623 = vld [vmem:[%s583 + $0xa8] sm:$0xff]
      %v624 = vld [vmem:[%s583 + $0xb0] sm:$0xff]
      %v625 = vld [vmem:[%s583 + $0xb8] sm:$0xff]
      %v626 = vld [vmem:[%s583 + $0xc0] sm:$0xf]
      %v627 = vld [vmem:[%s583 + $0xc4] sm:$0xff]
      %v628 = vld [vmem:[%s583 + $0xcc] sm:$0xff]
      %v629 = vld [vmem:[%s583 + $0xd4] sm:$0xff]
      %v630 = vld [vmem:[%s583 + $0xdc] sm:$0xf]
      %v631 = vld [vmem:[%s583 + $0xe0] sm:$0xff]
      %v632 = vld [vmem:[%s583 + $0xe8] sm:$0xff]
      %v633 = vld [vmem:[%s583 + $0xf0] sm:$0xff]
      %v634 = vld [vmem:[%s583 + $0xf8] sm:$0xf]
      %v635 = vld [vmem:[%s583 + $0xfc] sm:$0xff]
      %v636 = vld [vmem:[%s583 + $0x104] sm:$0xff]
      %v637 = vld [vmem:[%s583 + $0x10c] sm:$0xff]
      %v638 = vld [vmem:[%s583 + $0x114] sm:$0xf]
      %v639 = vld [vmem:[%s583 + $0x118] sm:$0xff]
      %v640 = vld [vmem:[%s583 + $0x120] sm:$0xff]
      %v641 = vld [vmem:[%s583 + $0x128] sm:$0xff]
      %v642 = vld [vmem:[%s583 + $0x130] sm:$0xf]
      %v643 = vld [vmem:[%s583 + $0x134] sm:$0xff]
      %v644 = vld [vmem:[%s583 + $0x13c] sm:$0xff]
      %v645 = vld [vmem:[%s583 + $0x144] sm:$0xff]
      %v646 = vld [vmem:[%s583 + $0x14c] sm:$0xf]
      %v647 = vld [vmem:[%s583 + $0x150] sm:$0xff]
      %v648 = vld [vmem:[%s583 + $0x158] sm:$0xff]
      %v649 = vld [vmem:[%s583 + $0x160] sm:$0xff]
      %v650 = vld [vmem:[%s583 + $0x168] sm:$0xf]
      %v651 = vld [vmem:[%s583 + $0x16c] sm:$0xff]
      %v652 = vld [vmem:[%s583 + $0x174] sm:$0xff]
      %v653 = vld [vmem:[%s583 + $0x17c] sm:$0xff]
      %v654 = vld [vmem:[%s583 + $0x184] sm:$0xf]
      %v655 = vld [vmem:[%s583 + $0x188] sm:$0xff]
      %v656 = vld [vmem:[%s583 + $0x190] sm:$0xff]
      %v657 = vld [vmem:[%s583 + $0x198] sm:$0xff]
      %v658 = vld [vmem:[%s583 + $0x1a0] sm:$0xf]
      %v659 = vld [vmem:[%s583 + $0x1a4] sm:$0xff]
      %v660 = vld [vmem:[%s583 + $0x1ac] sm:$0xff]
      %v661 = vld [vmem:[%s583 + $0x1b4] sm:$0xff]
      %v662 = vld [vmem:[%s583 + $0x1bc] sm:$0xf]
      %v663 = vld [vmem:[%s1] sm:$0xf]
      %v664 = vld [vmem:[%s1 + $0x4] sm:$0xf]
      %v665 = vld [vmem:[%s1 + $0x8] sm:$0xf]
      %v666 = vld [vmem:[%s1 + $0xc] sm:$0xf]
      %v667 = vld [vmem:[%s1 + $0x10] sm:$0xf]
      %v668 = vld [vmem:[%s1 + $0x14] sm:$0xf]
      %v669 = vld [vmem:[%s1 + $0x18] sm:$0xf]
      %v670 = vld [vmem:[%s1 + $0x1c] sm:$0xf]
      %v671 = vld [vmem:[%s1 + $0x20] sm:$0xf]
      %v672 = vld [vmem:[%s1 + $0x24] sm:$0xf]
      %v673 = vld [vmem:[%s1 + $0x28] sm:$0xf]
      %v674 = vld [vmem:[%s1 + $0x2c] sm:$0xf]
      %v675 = vld [vmem:[%s1 + $0x30] sm:$0xf]
      %v676 = vld [vmem:[%s1 + $0x34] sm:$0xf]
      %v677 = vld [vmem:[%s1 + $0x38] sm:$0xf]
      %v678 = vld [vmem:[%s1 + $0x3c] sm:$0xf]
      %v679 = vld [vmem:[%s1 + $0x40] sm:$0xf]
      %v680 = vld [vmem:[%s1 + $0x44] sm:$0xf]
      %v681 = vld [vmem:[%s1 + $0x48] sm:$0xf]
      %v682 = vld [vmem:[%s1 + $0x4c] sm:$0xf]
      %v683 = vld [vmem:[%s1 + $0x50] sm:$0xf]
      %v684 = vld [vmem:[%s1 + $0x54] sm:$0xf]
      %v685 = vld [vmem:[%s1 + $0x58] sm:$0xf]
      %v686 = vld [vmem:[%s1 + $0x5c] sm:$0xf]
      %v687 = vld [vmem:[%s1 + $0x60] sm:$0xf]
      %v688 = vld [vmem:[%s1 + $0x64] sm:$0xf]
      %v689 = vld [vmem:[%s1 + $0x68] sm:$0xf]
      %v690 = vld [vmem:[%s1 + $0x6c] sm:$0xf]
      %v691 = vld [vmem:[%s1 + $0x70] sm:$0xf]
      %v692 = vld [vmem:[%s1 + $0x74] sm:$0xf]
      %v693 = vld [vmem:[%s1 + $0x78] sm:$0xf]
      %v694 = vld [vmem:[%s1 + $0x7c] sm:$0xf]
      %v695 = vld [vmem:[%s1 + $0x80] sm:$0xf]
      %v696 = vld [vmem:[%s1 + $0x84] sm:$0xf]
      %v697 = vld [vmem:[%s1 + $0x88] sm:$0xf]
      %v698 = vld [vmem:[%s1 + $0x8c] sm:$0xf]
      %v699 = vld [vmem:[%s1 + $0x90] sm:$0xf]
      %v700 = vld [vmem:[%s1 + $0x94] sm:$0xf]
      %v701 = vld [vmem:[%s1 + $0x98] sm:$0xf]
      %v702 = vld [vmem:[%s1 + $0x9c] sm:$0xf]
      %v703 = vld [vmem:[%s1 + $0xa0] sm:$0xf]
      %v704 = vld [vmem:[%s1 + $0xa4] sm:$0xf]
      %v705 = vld [vmem:[%s1 + $0xa8] sm:$0xf]
      %v706 = vld [vmem:[%s1 + $0xac] sm:$0xf]
      %v707 = vld [vmem:[%s1 + $0xb0] sm:$0xf]
      %v708 = vld [vmem:[%s1 + $0xb4] sm:$0xf]
      %v709 = vld [vmem:[%s1 + $0xb8] sm:$0xf]
      %v710 = vld [vmem:[%s1 + $0xbc] sm:$0xf]
      %v711 = vld [vmem:[%s1 + $0xc0] sm:$0xf]
      %v712 = vld [vmem:[%s1 + $0xc4] sm:$0xf]
      %v713 = vld [vmem:[%s1 + $0xc8] sm:$0xf]
      %v714 = vld [vmem:[%s1 + $0xcc] sm:$0xf]
      %v715 = vld [vmem:[%s1 + $0xd0] sm:$0xf]
      %v716 = vld [vmem:[%s1 + $0xd4] sm:$0xf]
      %v717 = vld [vmem:[%s1 + $0xd8] sm:$0xf]
      %v718 = vld [vmem:[%s1 + $0xdc] sm:$0xf]
      %v719 = vld [vmem:[%s1 + $0xe0] sm:$0xf]
      %v720 = vld [vmem:[%s1 + $0xe4] sm:$0xf]
      %v721 = vld [vmem:[%s1 + $0xe8] sm:$0xf]
      %v722 = vld [vmem:[%s1 + $0xec] sm:$0xf]
      %v723 = vld [vmem:[%s1 + $0xf0] sm:$0xf]
      %v724 = vld [vmem:[%s1 + $0xf4] sm:$0xf]
      %v725 = vld [vmem:[%s1 + $0xf8] sm:$0xf]
      %v726 = vld [vmem:[%s1 + $0xfc] sm:$0xf]
      %v727 = vld [vmem:[%s1 + $0x100] sm:$0xf]
      %v728 = vld [vmem:[%s1 + $0x104] sm:$0xf]
      %v729 = vld [vmem:[%s1 + $0x108] sm:$0xf]
      %v730 = vld [vmem:[%s1 + $0x10c] sm:$0xf]
      %v731 = vld [vmem:[%s1 + $0x110] sm:$0xf]
      %v732 = vld [vmem:[%s1 + $0x114] sm:$0xf]
      %v733 = vld [vmem:[%s1 + $0x118] sm:$0xf]
      %v734 = vld [vmem:[%s1 + $0x11c] sm:$0xf]
      %v735 = vld [vmem:[%s1 + $0x120] sm:$0xf]
      %v736 = vld [vmem:[%s1 + $0x124] sm:$0xf]
      %v737 = vld [vmem:[%s1 + $0x128] sm:$0xf]
      %v738 = vld [vmem:[%s1 + $0x12c] sm:$0xf]
      %v739 = vld [vmem:[%s1 + $0x130] sm:$0xf]
      %v740 = vld [vmem:[%s1 + $0x134] sm:$0xf]
      %v741 = vld [vmem:[%s1 + $0x138] sm:$0xf]
      %v742 = vld [vmem:[%s1 + $0x13c] sm:$0xf]
      %v743 = vld [vmem:[%s1 + $0x140] sm:$0xf]
      %v744 = vld [vmem:[%s1 + $0x144] sm:$0xf]
      %v745 = vld [vmem:[%s1 + $0x148] sm:$0xf]
      %v746 = vld [vmem:[%s1 + $0x14c] sm:$0xf]
      %v747 = vld [vmem:[%s1 + $0x150] sm:$0xf]
      %v748 = vld [vmem:[%s1 + $0x154] sm:$0xf]
      %v749 = vld [vmem:[%s1 + $0x158] sm:$0xf]
      %v750 = vld [vmem:[%s1 + $0x15c] sm:$0xf]
      %v751 = vld [vmem:[%s1 + $0x160] sm:$0xf]
      %v752 = vld [vmem:[%s1 + $0x164] sm:$0xf]
      %v753 = vld [vmem:[%s1 + $0x168] sm:$0xf]
      %v754 = vld [vmem:[%s1 + $0x16c] sm:$0xf]
      %v755 = vld [vmem:[%s1 + $0x170] sm:$0xf]
      %v756 = vld [vmem:[%s1 + $0x174] sm:$0xf]
      %v757 = vld [vmem:[%s1 + $0x178] sm:$0xf]
      %v758 = vld [vmem:[%s1 + $0x17c] sm:$0xf]
      %v759 = vld [vmem:[%s1 + $0x180] sm:$0xf]
      %v760 = vld [vmem:[%s1 + $0x184] sm:$0xf]
      %v761 = vld [vmem:[%s2] sm:$0x1]
      %v763 = vlaneseq
      %v764 = vshrl.u32 %v763, 7
      %v765 = vsub.s32 0, %v764
      %v766 = vrot.slane %v761, %v765
      %v832 = vunpack.c.l.b16 %v599
      %v833 = vunpack.c.h.b16 %v599
      %v834 = vunpack.c.l.b16 %v600
      %v835 = vunpack.c.h.b16 %v600
      %v836 = vunpack.c.l.b16 %v601
      %v837 = vunpack.c.h.b16 %v601
      %v838 = vunpack.c.l.b16 %v602
      %v839 = vunpack.c.l.b16 %v603
      %v840 = vunpack.c.h.b16 %v603
      %v841 = vunpack.c.l.b16 %v604
      %v842 = vunpack.c.h.b16 %v604
      %v843 = vunpack.c.l.b16 %v605
      %v844 = vunpack.c.h.b16 %v605
      %v845 = vunpack.c.l.b16 %v606
      %v846 = vunpack.c.l.b16 %v607
      %v847 = vunpack.c.h.b16 %v607
      %v848 = vunpack.c.l.b16 %v608
      %v849 = vunpack.c.h.b16 %v608
      %v850 = vunpack.c.l.b16 %v609
      %v851 = vunpack.c.h.b16 %v609
      %v852 = vunpack.c.l.b16 %v610
      %v853 = vunpack.c.l.b16 %v611
      %v854 = vunpack.c.h.b16 %v611
      %v855 = vunpack.c.l.b16 %v612
      %v856 = vunpack.c.h.b16 %v612
      %v857 = vunpack.c.l.b16 %v613
      %v858 = vunpack.c.h.b16 %v613
      %v859 = vunpack.c.l.b16 %v614
      %v860 = vunpack.c.l.b16 %v615
      %v861 = vunpack.c.h.b16 %v615
      %v862 = vunpack.c.l.b16 %v616
      %v863 = vunpack.c.h.b16 %v616
      %v864 = vunpack.c.l.b16 %v617
      %v865 = vunpack.c.h.b16 %v617
      %v866 = vunpack.c.l.b16 %v618
      %v867 = vunpack.c.l.b16 %v619
      %v868 = vunpack.c.h.b16 %v619
      %v869 = vunpack.c.l.b16 %v620
      %v870 = vunpack.c.h.b16 %v620
      %v871 = vunpack.c.l.b16 %v621
      %v872 = vunpack.c.h.b16 %v621
      %v873 = vunpack.c.l.b16 %v622
      %v874 = vunpack.c.l.b16 %v623
      %v875 = vunpack.c.h.b16 %v623
      %v876 = vunpack.c.l.b16 %v624
      %v877 = vunpack.c.h.b16 %v624
      %v878 = vunpack.c.l.b16 %v625
      %v879 = vunpack.c.h.b16 %v625
      %v880 = vunpack.c.l.b16 %v626
      %v881 = vunpack.c.l.b16 %v627
      %v882 = vunpack.c.h.b16 %v627
      %v883 = vunpack.c.l.b16 %v628
      %v884 = vunpack.c.h.b16 %v628
      %v885 = vunpack.c.l.b16 %v629
      %v886 = vunpack.c.h.b16 %v629
      %v887 = vunpack.c.l.b16 %v630
      %v888 = vunpack.c.l.b16 %v631
      %v889 = vunpack.c.h.b16 %v631
      %v890 = vunpack.c.l.b16 %v632
      %v891 = vunpack.c.h.b16 %v632
      %v892 = vunpack.c.l.b16 %v633
      %v893 = vunpack.c.h.b16 %v633
      %v894 = vunpack.c.l.b16 %v634
      %v895 = vunpack.c.l.b16 %v635
      %v896 = vunpack.c.h.b16 %v635
      %v897 = vunpack.c.l.b16 %v636
      %v898 = vunpack.c.h.b16 %v636
      %v899 = vunpack.c.l.b16 %v637
      %v900 = vunpack.c.h.b16 %v637
      %v901 = vunpack.c.l.b16 %v638
      %v902 = vunpack.c.l.b16 %v639
      %v903 = vunpack.c.h.b16 %v639
      %v904 = vunpack.c.l.b16 %v640
      %v905 = vunpack.c.h.b16 %v640
      %v906 = vunpack.c.l.b16 %v641
      %v907 = vunpack.c.h.b16 %v641
      %v908 = vunpack.c.l.b16 %v642
      %v909 = vunpack.c.l.b16 %v643
      %v910 = vunpack.c.h.b16 %v643
      %v911 = vunpack.c.l.b16 %v644
      %v912 = vunpack.c.h.b16 %v644
      %v913 = vunpack.c.l.b16 %v645
      %v914 = vunpack.c.h.b16 %v645
      %v915 = vunpack.c.l.b16 %v646
      %v916 = vunpack.c.l.b16 %v647
      %v917 = vunpack.c.h.b16 %v647
      %v918 = vunpack.c.l.b16 %v648
      %v919 = vunpack.c.h.b16 %v648
      %v920 = vunpack.c.l.b16 %v649
      %v921 = vunpack.c.h.b16 %v649
      %v922 = vunpack.c.l.b16 %v650
      %v923 = vunpack.c.l.b16 %v651
      %v924 = vunpack.c.h.b16 %v651
      %v925 = vunpack.c.l.b16 %v652
      %v926 = vunpack.c.h.b16 %v652
      %v927 = vunpack.c.l.b16 %v653
      %v928 = vunpack.c.h.b16 %v653
      %v929 = vunpack.c.l.b16 %v654
      %v930 = vunpack.c.l.b16 %v655
      %v931 = vunpack.c.h.b16 %v655
      %v932 = vunpack.c.l.b16 %v656
      %v933 = vunpack.c.h.b16 %v656
      %v934 = vunpack.c.l.b16 %v657
      %v935 = vunpack.c.h.b16 %v657
      %v936 = vunpack.c.l.b16 %v658
      %v937 = vunpack.c.l.b16 %v659
      %v938 = vunpack.c.h.b16 %v659
      %v939 = vunpack.c.l.b16 %v660
      %v940 = vunpack.c.h.b16 %v660
      %v941 = vunpack.c.l.b16 %v661
      %v942 = vunpack.c.h.b16 %v661
      %v943 = vunpack.c.l.b16 %v662
      %v944 = vpack.c.b16 %v839, %v832
      %v945 = vpack.c.b16 %v840, %v833
      %v946 = vpack.c.b16 %v841, %v834
      %v947 = vpack.c.b16 %v842, %v835
      %v948 = vpack.c.b16 %v843, %v836
      %v949 = vpack.c.b16 %v844, %v837
      %v950 = vpack.c.b16 %v845, %v838
      %v951 = vpack.c.b16 %v853, %v846
      %v952 = vpack.c.b16 %v854, %v847
      %v953 = vpack.c.b16 %v855, %v848
      %v954 = vpack.c.b16 %v856, %v849
      %v955 = vpack.c.b16 %v857, %v850
      %v956 = vpack.c.b16 %v858, %v851
      %v957 = vpack.c.b16 %v859, %v852
      %v958 = vpack.c.b16 %v867, %v860
      %v959 = vpack.c.b16 %v868, %v861
      %v960 = vpack.c.b16 %v869, %v862
      %v961 = vpack.c.b16 %v870, %v863
      %v962 = vpack.c.b16 %v871, %v864
      %v963 = vpack.c.b16 %v872, %v865
      %v964 = vpack.c.b16 %v873, %v866
      %v965 = vpack.c.b16 %v881, %v874
      %v966 = vpack.c.b16 %v882, %v875
      %v967 = vpack.c.b16 %v883, %v876
      %v968 = vpack.c.b16 %v884, %v877
      %v969 = vpack.c.b16 %v885, %v878
      %v970 = vpack.c.b16 %v886, %v879
      %v971 = vpack.c.b16 %v887, %v880
      %v972 = vpack.c.b16 %v895, %v888
      %v973 = vpack.c.b16 %v896, %v889
      %v974 = vpack.c.b16 %v897, %v890
      %v975 = vpack.c.b16 %v898, %v891
      %v976 = vpack.c.b16 %v899, %v892
      %v977 = vpack.c.b16 %v900, %v893
      %v978 = vpack.c.b16 %v901, %v894
      %v979 = vpack.c.b16 %v909, %v902
      %v980 = vpack.c.b16 %v910, %v903
      %v981 = vpack.c.b16 %v911, %v904
      %v982 = vpack.c.b16 %v912, %v905
      %v983 = vpack.c.b16 %v913, %v906
      %v984 = vpack.c.b16 %v914, %v907
      %v985 = vpack.c.b16 %v915, %v908
      %v986 = vpack.c.b16 %v923, %v916
      %v987 = vpack.c.b16 %v924, %v917
      %v988 = vpack.c.b16 %v925, %v918
      %v989 = vpack.c.b16 %v926, %v919
      %v990 = vpack.c.b16 %v927, %v920
      %v991 = vpack.c.b16 %v928, %v921
      %v992 = vpack.c.b16 %v929, %v922
      %v993 = vpack.c.b16 %v937, %v930
      %v994 = vpack.c.b16 %v938, %v931
      %v995 = vpack.c.b16 %v939, %v932
      %v996 = vpack.c.b16 %v940, %v933
      %v997 = vpack.c.b16 %v941, %v934
      %v998 = vpack.c.b16 %v942, %v935
      %v999 = vpack.c.b16 %v943, %v936
      %v1146 = vunpack.c.l.b16 %v663
      %v1147 = vunpack.c.l.b16 %v664
      %v1148 = vunpack.c.l.b16 %v665
      %v1149 = vunpack.c.l.b16 %v666
      %v1150 = vunpack.c.l.b16 %v667
      %v1151 = vunpack.c.l.b16 %v668
      %v1152 = vunpack.c.l.b16 %v669
      %v1153 = vunpack.c.l.b16 %v670
      %v1154 = vunpack.c.l.b16 %v671
      %v1155 = vunpack.c.l.b16 %v672
      %v1156 = vunpack.c.l.b16 %v673
      %v1157 = vunpack.c.l.b16 %v674
      %v1158 = vunpack.c.l.b16 %v675
      %v1159 = vunpack.c.l.b16 %v676
      %v1160 = vunpack.c.l.b16 %v677
      %v1161 = vunpack.c.l.b16 %v678
      %v1162 = vunpack.c.l.b16 %v679
      %v1163 = vunpack.c.l.b16 %v680
      %v1164 = vunpack.c.l.b16 %v681
      %v1165 = vunpack.c.l.b16 %v682
      %v1166 = vunpack.c.l.b16 %v683
      %v1167 = vunpack.c.l.b16 %v684
      %v1168 = vunpack.c.l.b16 %v685
      %v1169 = vunpack.c.l.b16 %v686
      %v1170 = vunpack.c.l.b16 %v687
      %v1171 = vunpack.c.l.b16 %v688
      %v1172 = vunpack.c.l.b16 %v689
      %v1173 = vunpack.c.l.b16 %v690
      %v1174 = vunpack.c.l.b16 %v691
      %v1175 = vunpack.c.l.b16 %v692
      %v1176 = vunpack.c.l.b16 %v693
      %v1177 = vunpack.c.l.b16 %v694
      %v1178 = vunpack.c.l.b16 %v695
      %v1179 = vunpack.c.l.b16 %v696
      %v1180 = vunpack.c.l.b16 %v697
      %v1181 = vunpack.c.l.b16 %v698
      %v1182 = vunpack.c.l.b16 %v699
      %v1183 = vunpack.c.l.b16 %v700
      %v1184 = vunpack.c.l.b16 %v701
      %v1185 = vunpack.c.l.b16 %v702
      %v1186 = vunpack.c.l.b16 %v703
      %v1187 = vunpack.c.l.b16 %v704
      %v1188 = vunpack.c.l.b16 %v705
      %v1189 = vunpack.c.l.b16 %v706
      %v1190 = vunpack.c.l.b16 %v707
      %v1191 = vunpack.c.l.b16 %v708
      %v1192 = vunpack.c.l.b16 %v709
      %v1193 = vunpack.c.l.b16 %v710
      %v1194 = vunpack.c.l.b16 %v711
      %v1195 = vunpack.c.l.b16 %v712
      %v1196 = vunpack.c.l.b16 %v713
      %v1197 = vunpack.c.l.b16 %v714
      %v1198 = vunpack.c.l.b16 %v715
      %v1199 = vunpack.c.l.b16 %v716
      %v1200 = vunpack.c.l.b16 %v717
      %v1201 = vunpack.c.l.b16 %v718
      %v1202 = vunpack.c.l.b16 %v719
      %v1203 = vunpack.c.l.b16 %v720
      %v1204 = vunpack.c.l.b16 %v721
      %v1205 = vunpack.c.l.b16 %v722
      %v1206 = vunpack.c.l.b16 %v723
      %v1207 = vunpack.c.l.b16 %v724
      %v1208 = vunpack.c.l.b16 %v725
      %v1209 = vunpack.c.l.b16 %v726
      %v1210 = vunpack.c.l.b16 %v727
      %v1211 = vunpack.c.l.b16 %v728
      %v1212 = vunpack.c.l.b16 %v729
      %v1213 = vunpack.c.l.b16 %v730
      %v1214 = vunpack.c.l.b16 %v731
      %v1215 = vunpack.c.l.b16 %v732
      %v1216 = vunpack.c.l.b16 %v733
      %v1217 = vunpack.c.l.b16 %v734
      %v1218 = vunpack.c.l.b16 %v735
      %v1219 = vunpack.c.l.b16 %v736
      %v1220 = vunpack.c.l.b16 %v737
      %v1221 = vunpack.c.l.b16 %v738
      %v1222 = vunpack.c.l.b16 %v739
      %v1223 = vunpack.c.l.b16 %v740
      %v1224 = vunpack.c.l.b16 %v741
      %v1225 = vunpack.c.l.b16 %v742
      %v1226 = vunpack.c.l.b16 %v743
      %v1227 = vunpack.c.l.b16 %v744
      %v1228 = vunpack.c.l.b16 %v745
      %v1229 = vunpack.c.l.b16 %v746
      %v1230 = vunpack.c.l.b16 %v747
      %v1231 = vunpack.c.l.b16 %v748
      %v1232 = vunpack.c.l.b16 %v749
      %v1233 = vunpack.c.l.b16 %v750
      %v1234 = vunpack.c.l.b16 %v751
      %v1235 = vunpack.c.l.b16 %v752
      %v1236 = vunpack.c.l.b16 %v753
      %v1237 = vunpack.c.l.b16 %v754
      %v1238 = vunpack.c.l.b16 %v755
      %v1239 = vunpack.c.l.b16 %v756
      %v1240 = vunpack.c.l.b16 %v757
      %v1241 = vunpack.c.l.b16 %v758
      %v1242 = vunpack.c.l.b16 %v759
      %v1243 = vunpack.c.l.b16 %v760
      %v1244 = vpack.c.b16 %v1147, %v1146
      %v1245 = vpack.c.b16 %v1149, %v1148
      %v1246 = vpack.c.b16 %v1151, %v1150
      %v1247 = vpack.c.b16 %v1153, %v1152
      %v1248 = vpack.c.b16 %v1155, %v1154
      %v1249 = vpack.c.b16 %v1157, %v1156
      %v1250 = vpack.c.b16 %v1159, %v1158
      %v1251 = vpack.c.b16 %v1161, %v1160
      %v1252 = vpack.c.b16 %v1163, %v1162
      %v1253 = vpack.c.b16 %v1165, %v1164
      %v1254 = vpack.c.b16 %v1167, %v1166
      %v1255 = vpack.c.b16 %v1169, %v1168
      %v1256 = vpack.c.b16 %v1171, %v1170
      %v1257 = vpack.c.b16 %v1173, %v1172
      %v1258 = vpack.c.b16 %v1175, %v1174
      %v1259 = vpack.c.b16 %v1177, %v1176
      %v1260 = vpack.c.b16 %v1179, %v1178
      %v1261 = vpack.c.b16 %v1181, %v1180
      %v1262 = vpack.c.b16 %v1183, %v1182
      %v1263 = vpack.c.b16 %v1185, %v1184
      %v1264 = vpack.c.b16 %v1187, %v1186
      %v1265 = vpack.c.b16 %v1189, %v1188
      %v1266 = vpack.c.b16 %v1191, %v1190
      %v1267 = vpack.c.b16 %v1193, %v1192
      %v1268 = vpack.c.b16 %v1195, %v1194
      %v1269 = vpack.c.b16 %v1197, %v1196
      %v1270 = vpack.c.b16 %v1199, %v1198
      %v1271 = vpack.c.b16 %v1201, %v1200
      %v1272 = vpack.c.b16 %v1203, %v1202
      %v1273 = vpack.c.b16 %v1205, %v1204
      %v1274 = vpack.c.b16 %v1207, %v1206
      %v1275 = vpack.c.b16 %v1209, %v1208
      %v1276 = vpack.c.b16 %v1211, %v1210
      %v1277 = vpack.c.b16 %v1213, %v1212
      %v1278 = vpack.c.b16 %v1215, %v1214
      %v1279 = vpack.c.b16 %v1217, %v1216
      %v1280 = vpack.c.b16 %v1219, %v1218
      %v1281 = vpack.c.b16 %v1221, %v1220
      %v1282 = vpack.c.b16 %v1223, %v1222
      %v1283 = vpack.c.b16 %v1225, %v1224
      %v1284 = vpack.c.b16 %v1227, %v1226
      %v1285 = vpack.c.b16 %v1229, %v1228
      %v1286 = vpack.c.b16 %v1231, %v1230
      %v1287 = vpack.c.b16 %v1233, %v1232
      %v1288 = vpack.c.b16 %v1235, %v1234
      %v1289 = vpack.c.b16 %v1237, %v1236
      %v1290 = vpack.c.b16 %v1239, %v1238
      %v1291 = vpack.c.b16 %v1241, %v1240
      %v1292 = vpack.c.b16 %v1243, %v1242
      %vm1342 = vcmask 130048
      %v1344 = vsel %vm1342, %v950, 0
      %v1347 = vsel %vm1342, %v957, 0
      %v1350 = vsel %vm1342, %v964, 0
      %v1353 = vsel %vm1342, %v971, 0
      %v1356 = vsel %vm1342, %v978, 0
      %v1359 = vsel %vm1342, %v985, 0
      %v1362 = vsel %vm1342, %v992, 0
      %v1365 = vsel %vm1342, %v999, 0
      %1367 = vmatprep.subr.bf16.mxu0 0
      %1368 = vmatpush1.bf16.msra.mxu0 %v1244
      %1369 = vmatprep.subr.bf16.mxu0 0
      %1370 = vmatpush1.bf16.msra.mxu0 %v1245
      %1371 = vmatprep.subr.bf16.mxu0 0
      %1372 = vmatpush1.bf16.msra.mxu0 %v1246
      %1373 = vmatprep.subr.bf16.mxu0 0
      %1374 = vmatpush1.bf16.msra.mxu0 %v1247
      %1375 = vmatprep.subr.bf16.mxu0 0
      %1376 = vmatpush1.bf16.msra.mxu0 %v1248
      %1377 = vmatprep.subr.bf16.mxu0 0
      %1378 = vmatpush1.bf16.msra.mxu0 %v1249
      %1379 = vmatprep.subr.bf16.mxu0 0
      %1380 = vmatpush1.bf16.msra.mxu0 %v1250
      %1381 = vmatprep.subr.bf16.mxu0 0
      %1382 = vmatpush1.bf16.msra.mxu0 %v1251
      %1383 = vmatprep.subr.bf16.mxu0 0
      %1384 = vmatpush1.bf16.msra.mxu0 %v1252
      %1385 = vmatprep.subr.bf16.mxu0 0
      %1386 = vmatpush1.bf16.msra.mxu0 %v1253
      %1387 = vmatprep.subr.bf16.mxu0 0
      %1388 = vmatpush1.bf16.msra.mxu0 %v1254
      %1389 = vmatprep.subr.bf16.mxu0 0
      %1390 = vmatpush1.bf16.msra.mxu0 %v1255
      %1391 = vmatprep.subr.bf16.mxu0 0
      %1392 = vmatpush1.bf16.msra.mxu0 %v1256
      %1393 = vmatprep.subr.bf16.mxu0 0
      %1394 = vmatpush1.bf16.msra.mxu0 %v1257
      %1395 = vmatprep.subr.bf16.mxu0 0
      %1396 = vmatpush1.bf16.msra.mxu0 %v1258
      %1397 = vmatprep.subr.bf16.mxu0 0
      %1398 = vmatpush1.bf16.msra.mxu0 %v1259
      %1399 = vmatprep.mubr.bf16.mxu0 %v945
      %1400 = vmatmul.mubr.bf16.gmra.mrb[0].mxu0 %v944
      %v1401 = vpop.f32.mrb[0].mxu0
      %v1402 = vadd.f32 %v766, %v1401
      %v1403 = vpop.f32.mrb[0].mxu0
      %v1404 = vpop.f32.mrb[0].mxu0
      %v1405 = vadd.f32 %v766, %v1404
      %v1406 = vpop.f32.mrb[0].mxu0
      %1407 = vmatprep.mubr.bf16.mxu0 %v952
      %1408 = vmatmul.mubr.bf16.gmra.mrb[0].mxu0 %v951
      %v1409 = vpop.f32.mrb[0].mxu0
      %v1410 = vadd.f32 %v766, %v1409
      %v1411 = vpop.f32.mrb[0].mxu0
      %v1412 = vpop.f32.mrb[0].mxu0
      %v1413 = vadd.f32 %v766, %v1412
      %v1414 = vpop.f32.mrb[0].mxu0
      %1415 = vmatprep.mubr.bf16.mxu0 %v959
      %1416 = vmatmul.mubr.bf16.gmra.mrb[0].mxu0 %v958
      %v1417 = vpop.f32.mrb[0].mxu0
      %v1418 = vadd.f32 %v766, %v1417
      %v1419 = vpop.f32.mrb[0].mxu0
      %v1420 = vpop.f32.mrb[0].mxu0
      %v1421 = vadd.f32 %v766, %v1420
      %v1422 = vpop.f32.mrb[0].mxu0
      %1423 = vmatprep.mubr.bf16.mxu0 %v966
      %1424 = vmatmul.mubr.bf16.gmra.mrb[0].mxu0 %v965
      %v1425 = vpop.f32.mrb[0].mxu0
      %v1426 = vadd.f32 %v766, %v1425
      %v1427 = vpop.f32.mrb[0].mxu0
      %v1428 = vpop.f32.mrb[0].mxu0
      %v1429 = vadd.f32 %v766, %v1428
      %v1430 = vpop.f32.mrb[0].mxu0
      %1431 = vmatprep.mubr.bf16.mxu0 %v973
      %1432 = vmatmul.mubr.bf16.gmra.mrb[0].mxu0 %v972
      %v1433 = vpop.f32.mrb[0].mxu0
      %v1434 = vadd.f32 %v766, %v1433
      %v1435 = vpop.f32.mrb[0].mxu0
      %v1436 = vpop.f32.mrb[0].mxu0
      %v1437 = vadd.f32 %v766, %v1436
      %v1438 = vpop.f32.mrb[0].mxu0
      %1439 = vmatprep.mubr.bf16.mxu0 %v980
      %1440 = vmatmul.mubr.bf16.gmra.mrb[0].mxu0 %v979
      %v1441 = vpop.f32.mrb[0].mxu0
      %v1442 = vadd.f32 %v766, %v1441
      %v1443 = vpop.f32.mrb[0].mxu0
      %v1444 = vpop.f32.mrb[0].mxu0
      %v1445 = vadd.f32 %v766, %v1444
      %v1446 = vpop.f32.mrb[0].mxu0
      %1447 = vmatprep.mubr.bf16.mxu0 %v987
      %1448 = vmatmul.mubr.bf16.gmra.mrb[0].mxu0 %v986
      %v1449 = vpop.f32.mrb[0].mxu0
      %v1450 = vadd.f32 %v766, %v1449
      %v1451 = vpop.f32.mrb[0].mxu0
      %v1452 = vpop.f32.mrb[0].mxu0
      %v1453 = vadd.f32 %v766, %v1452
      %v1454 = vpop.f32.mrb[0].mxu0
      %1455 = vmatprep.mubr.bf16.mxu0 %v994
      %1456 = vmatmul.mubr.bf16.gmra.mrb[0].mxu0 %v993
      %v1457 = vpop.f32.mrb[0].mxu0
      %v1458 = vadd.f32 %v766, %v1457
      %v1459 = vpop.f32.mrb[0].mxu0
      %v1460 = vpop.f32.mrb[0].mxu0
      %v1461 = vadd.f32 %v766, %v1460
      %v1462 = vpop.f32.mrb[0].mxu0
      %1463 = vdwg.mxu0
      %1464 = vmatprep.subr.bf16.mxu0 0
      %1465 = vmatpush1.bf16.msra.mxu0 %v1260
      %1466 = vmatprep.subr.bf16.mxu0 0
      %1467 = vmatpush1.bf16.msra.mxu0 %v1261
      %1468 = vmatprep.subr.bf16.mxu0 0
      %1469 = vmatpush1.bf16.msra.mxu0 %v1262
      %1470 = vmatprep.subr.bf16.mxu0 0
      %1471 = vmatpush1.bf16.msra.mxu0 %v1263
      %1472 = vmatprep.subr.bf16.mxu0 0
      %1473 = vmatpush1.bf16.msra.mxu0 %v1264
      %1474 = vmatprep.subr.bf16.mxu0 0
      %1475 = vmatpush1.bf16.msra.mxu0 %v1265
      %1476 = vmatprep.subr.bf16.mxu0 0
      %1477 = vmatpush1.bf16.msra.mxu0 %v1266
      %1478 = vmatprep.subr.bf16.mxu0 0
      %1479 = vmatpush1.bf16.msra.mxu0 %v1267
      %1480 = vmatprep.subr.bf16.mxu0 0
      %1481 = vmatpush1.bf16.msra.mxu0 %v1268
      %1482 = vmatprep.subr.bf16.mxu0 0
      %1483 = vmatpush1.bf16.msra.mxu0 %v1269
      %1484 = vmatprep.subr.bf16.mxu0 0
      %1485 = vmatpush1.bf16.msra.mxu0 %v1270
      %1486 = vmatprep.subr.bf16.mxu0 0
      %1487 = vmatpush1.bf16.msra.mxu0 %v1271
      %1488 = vmatprep.subr.bf16.mxu0 0
      %1489 = vmatpush1.bf16.msra.mxu0 %v1272
      %1490 = vmatprep.subr.bf16.mxu0 0
      %1491 = vmatpush1.bf16.msra.mxu0 %v1273
      %1492 = vmatprep.subr.bf16.mxu0 0
      %1493 = vmatpush1.bf16.msra.mxu0 %v1274
      %1494 = vmatprep.subr.bf16.mxu0 0
      %1495 = vmatpush1.bf16.msra.mxu0 %v1275
      %1496 = vmatprep.mubr.bf16.mxu0 %v947
      %1497 = vmatmul.mubr.bf16.gmra.mrb[0].mxu0 %v946
      %v1498 = vpop.f32.mrb[0].mxu0
      %v1499 = vadd.f32 %v1402, %v1498
      %v1500 = vpop.f32.mrb[0].mxu0
      %v1501 = vpop.f32.mrb[0].mxu0
      %v1502 = vadd.f32 %v1405, %v1501
      %v1503 = vpop.f32.mrb[0].mxu0
      %1504 = vmatprep.mubr.bf16.mxu0 %v954
      %1505 = vmatmul.mubr.bf16.gmra.mrb[0].mxu0 %v953
      %v1506 = vpop.f32.mrb[0].mxu0
      %v1507 = vadd.f32 %v1410, %v1506
      %v1508 = vpop.f32.mrb[0].mxu0
      %v1509 = vpop.f32.mrb[0].mxu0
      %v1510 = vadd.f32 %v1413, %v1509
      %v1511 = vpop.f32.mrb[0].mxu0
      %1512 = vmatprep.mubr.bf16.mxu0 %v961
      %1513 = vmatmul.mubr.bf16.gmra.mrb[0].mxu0 %v960
      %v1514 = vpop.f32.mrb[0].mxu0
      %v1515 = vadd.f32 %v1418, %v1514
      %v1516 = vpop.f32.mrb[0].mxu0
      %v1517 = vpop.f32.mrb[0].mxu0
      %v1518 = vadd.f32 %v1421, %v1517
      %v1519 = vpop.f32.mrb[0].mxu0
      %1520 = vmatprep.mubr.bf16.mxu0 %v968
      %1521 = vmatmul.mubr.bf16.gmra.mrb[0].mxu0 %v967
      %v1522 = vpop.f32.mrb[0].mxu0
      %v1523 = vadd.f32 %v1426, %v1522
      %v1524 = vpop.f32.mrb[0].mxu0
      %v1525 = vpop.f32.mrb[0].mxu0
      %v1526 = vadd.f32 %v1429, %v1525
      %v1527 = vpop.f32.mrb[0].mxu0
      %1528 = vmatprep.mubr.bf16.mxu0 %v975
      %1529 = vmatmul.mubr.bf16.gmra.mrb[0].mxu0 %v974
      %v1530 = vpop.f32.mrb[0].mxu0
      %v1531 = vadd.f32 %v1434, %v1530
      %v1532 = vpop.f32.mrb[0].mxu0
      %v1533 = vpop.f32.mrb[0].mxu0
      %v1534 = vadd.f32 %v1437, %v1533
      %v1535 = vpop.f32.mrb[0].mxu0
      %1536 = vmatprep.mubr.bf16.mxu0 %v982
      %1537 = vmatmul.mubr.bf16.gmra.mrb[0].mxu0 %v981
      %v1538 = vpop.f32.mrb[0].mxu0
      %v1539 = vadd.f32 %v1442, %v1538
      %v1540 = vpop.f32.mrb[0].mxu0
      %v1541 = vpop.f32.mrb[0].mxu0
      %v1542 = vadd.f32 %v1445, %v1541
      %v1543 = vpop.f32.mrb[0].mxu0
      %1544 = vmatprep.mubr.bf16.mxu0 %v989
      %1545 = vmatmul.mubr.bf16.gmra.mrb[0].mxu0 %v988
      %v1546 = vpop.f32.mrb[0].mxu0
      %v1547 = vadd.f32 %v1450, %v1546
      %v1548 = vpop.f32.mrb[0].mxu0
      %v1549 = vpop.f32.mrb[0].mxu0
      %v1550 = vadd.f32 %v1453, %v1549
      %v1551 = vpop.f32.mrb[0].mxu0
      %1552 = vmatprep.mubr.bf16.mxu0 %v996
      %1553 = vmatmul.mubr.bf16.gmra.mrb[0].mxu0 %v995
      %v1554 = vpop.f32.mrb[0].mxu0
      %v1555 = vadd.f32 %v1458, %v1554
      %v1556 = vpop.f32.mrb[0].mxu0
      %v1557 = vpop.f32.mrb[0].mxu0
      %v1558 = vadd.f32 %v1461, %v1557
      %v1559 = vpop.f32.mrb[0].mxu0
      %1560 = vdwg.mxu0
      %1561 = vmatprep.subr.bf16.mxu0 0
      %1562 = vmatpush1.bf16.msra.mxu0 %v1276
      %1563 = vmatprep.subr.bf16.mxu0 0
      %1564 = vmatpush1.bf16.msra.mxu0 %v1277
      %1565 = vmatprep.subr.bf16.mxu0 0
      %1566 = vmatpush1.bf16.msra.mxu0 %v1278
      %1567 = vmatprep.subr.bf16.mxu0 0
      %1568 = vmatpush1.bf16.msra.mxu0 %v1279
      %1569 = vmatprep.subr.bf16.mxu0 0
      %1570 = vmatpush1.bf16.msra.mxu0 %v1280
      %1571 = vmatprep.subr.bf16.mxu0 0
      %1572 = vmatpush1.bf16.msra.mxu0 %v1281
      %1573 = vmatprep.subr.bf16.mxu0 0
      %1574 = vmatpush1.bf16.msra.mxu0 %v1282
      %1575 = vmatprep.subr.bf16.mxu0 0
      %1576 = vmatpush1.bf16.msra.mxu0 %v1283
      %1577 = vmatprep.subr.bf16.mxu0 0
      %1578 = vmatpush1.bf16.msra.mxu0 %v1284
      %1579 = vmatprep.subr.bf16.mxu0 0
      %1580 = vmatpush1.bf16.msra.mxu0 %v1285
      %1581 = vmatprep.subr.bf16.mxu0 0
      %1582 = vmatpush1.bf16.msra.mxu0 %v1286
      %1583 = vmatprep.subr.bf16.mxu0 0
      %1584 = vmatpush1.bf16.msra.mxu0 %v1287
      %1585 = vmatprep.subr.bf16.mxu0 0
      %1586 = vmatpush1.bf16.msra.mxu0 %v1288
      %1587 = vmatprep.subr.bf16.mxu0 0
      %1588 = vmatpush1.bf16.msra.mxu0 %v1289
      %1589 = vmatprep.subr.bf16.mxu0 0
      %1590 = vmatpush1.bf16.msra.mxu0 %v1290
      %1591 = vmatprep.subr.bf16.mxu0 0
      %1592 = vmatpush1.bf16.msra.mxu0 %v1291
      %1593 = vmatprep.mubr.bf16.mxu0 %v949
      %1594 = vmatmul.mubr.bf16.gmra.mrb[0].mxu0 %v948
      %v1595 = vpop.f32.mrb[0].mxu0
      %v1596 = vadd.f32 %v1499, %v1595
      %v1597 = vpop.f32.mrb[0].mxu0
      %v1598 = vpop.f32.mrb[0].mxu0
      %v1599 = vadd.f32 %v1502, %v1598
      %v1600 = vpop.f32.mrb[0].mxu0
      %1601 = vmatprep.mubr.bf16.mxu0 %v956
      %1602 = vmatmul.mubr.bf16.gmra.mrb[0].mxu0 %v955
      %v1603 = vpop.f32.mrb[0].mxu0
      %v1604 = vadd.f32 %v1507, %v1603
      %v1605 = vpop.f32.mrb[0].mxu0
      %v1606 = vpop.f32.mrb[0].mxu0
      %v1607 = vadd.f32 %v1510, %v1606
      %v1608 = vpop.f32.mrb[0].mxu0
      %1609 = vmatprep.mubr.bf16.mxu0 %v963
      %1610 = vmatmul.mubr.bf16.gmra.mrb[0].mxu0 %v962
      %v1611 = vpop.f32.mrb[0].mxu0
      %v1612 = vadd.f32 %v1515, %v1611
      %v1613 = vpop.f32.mrb[0].mxu0
      %v1614 = vpop.f32.mrb[0].mxu0
      %v1615 = vadd.f32 %v1518, %v1614
      %v1616 = vpop.f32.mrb[0].mxu0
      %1617 = vmatprep.mubr.bf16.mxu0 %v970
      %1618 = vmatmul.mubr.bf16.gmra.mrb[0].mxu0 %v969
      %v1619 = vpop.f32.mrb[0].mxu0
      %v1620 = vadd.f32 %v1523, %v1619
      %v1621 = vpop.f32.mrb[0].mxu0
      %v1622 = vpop.f32.mrb[0].mxu0
      %v1623 = vadd.f32 %v1526, %v1622
      %v1624 = vpop.f32.mrb[0].mxu0
      %1625 = vmatprep.mubr.bf16.mxu0 %v977
      %1626 = vmatmul.mubr.bf16.gmra.mrb[0].mxu0 %v976
      %v1627 = vpop.f32.mrb[0].mxu0
      %v1628 = vadd.f32 %v1531, %v1627
      %v1629 = vpop.f32.mrb[0].mxu0
      %v1630 = vpop.f32.mrb[0].mxu0
      %v1631 = vadd.f32 %v1534, %v1630
      %v1632 = vpop.f32.mrb[0].mxu0
      %1633 = vmatprep.mubr.bf16.mxu0 %v984
      %1634 = vmatmul.mubr.bf16.gmra.mrb[0].mxu0 %v983
      %v1635 = vpop.f32.mrb[0].mxu0
      %v1636 = vadd.f32 %v1539, %v1635
      %v1637 = vpop.f32.mrb[0].mxu0
      %v1638 = vpop.f32.mrb[0].mxu0
      %v1639 = vadd.f32 %v1542, %v1638
      %v1640 = vpop.f32.mrb[0].mxu0
      %1641 = vmatprep.mubr.bf16.mxu0 %v991
      %1642 = vmatmul.mubr.bf16.gmra.mrb[0].mxu0 %v990
      %v1643 = vpop.f32.mrb[0].mxu0
      %v1644 = vadd.f32 %v1547, %v1643
      %v1645 = vpop.f32.mrb[0].mxu0
      %v1646 = vpop.f32.mrb[0].mxu0
      %v1647 = vadd.f32 %v1550, %v1646
      %v1648 = vpop.f32.mrb[0].mxu0
      %1649 = vmatprep.mubr.bf16.mxu0 %v998
      %1650 = vmatmul.mubr.bf16.gmra.mrb[0].mxu0 %v997
      %v1651 = vpop.f32.mrb[0].mxu0
      %v1652 = vadd.f32 %v1555, %v1651
      %v1653 = vpop.f32.mrb[0].mxu0
      %v1654 = vpop.f32.mrb[0].mxu0
      %v1655 = vadd.f32 %v1558, %v1654
      %v1656 = vpop.f32.mrb[0].mxu0
      %1657 = vdwg.mxu0
      %1658 = vmatprep.subr.bf16.mxu0 0
      %1659 = vmatpush1.bf16.msra.mxu0 %v1292
      %1660 = vmatprep.subr.bf16.mxu0 0
      %1661 = vmatpush1.bf16.msra.mxu0 0
      %1662 = vmatprep.subr.bf16.mxu0 0
      %1663 = vmatpush1.bf16.msra.mxu0 0
      %1664 = vmatprep.subr.bf16.mxu0 0
      %1665 = vmatpush1.bf16.msra.mxu0 0
      %1666 = vmatprep.subr.bf16.mxu0 0
      %1667 = vmatpush1.bf16.msra.mxu0 0
      %1668 = vmatprep.subr.bf16.mxu0 0
      %1669 = vmatpush1.bf16.msra.mxu0 0
      %1670 = vmatprep.subr.bf16.mxu0 0
      %1671 = vmatpush1.bf16.msra.mxu0 0
      %1672 = vmatprep.subr.bf16.mxu0 0
      %1673 = vmatpush1.bf16.msra.mxu0 0
      %1674 = vmatprep.subr.bf16.mxu0 0
      %1675 = vmatpush1.bf16.msra.mxu0 0
      %1676 = vmatprep.subr.bf16.mxu0 0
      %1677 = vmatpush1.bf16.msra.mxu0 0
      %1678 = vmatprep.subr.bf16.mxu0 0
      %1679 = vmatpush1.bf16.msra.mxu0 0
      %1680 = vmatprep.subr.bf16.mxu0 0
      %1681 = vmatpush1.bf16.msra.mxu0 0
      %1682 = vmatprep.subr.bf16.mxu0 0
      %1683 = vmatpush1.bf16.msra.mxu0 0
      %1684 = vmatprep.subr.bf16.mxu0 0
      %1685 = vmatpush1.bf16.msra.mxu0 0
      %1686 = vmatprep.subr.bf16.mxu0 0
      %1687 = vmatpush1.bf16.msra.mxu0 0
      %1688 = vmatprep.subr.bf16.mxu0 0
      %1689 = vmatpush1.bf16.msra.mxu0 0
      %1690 = vmatprep.mubr.bf16.mxu0 0
      %1691 = vmatmul.mubr.bf16.gmra.mrb[0].mxu0 %v1344
      %v1692 = vpop.f32.mrb[0].mxu0
      %v1693 = vadd.f32 %v1596, %v1692
      %v1694 = vpop.f32.mrb[0].mxu0
      %v1695 = vpop.f32.mrb[0].mxu0
      %v1696 = vadd.f32 %v1599, %v1695
      %v1697 = vpop.f32.mrb[0].mxu0
      %1698 = vmatprep.mubr.bf16.mxu0 0
      %1699 = vmatmul.mubr.bf16.gmra.mrb[0].mxu0 %v1347
      %v1700 = vpop.f32.mrb[0].mxu0
      %v1701 = vadd.f32 %v1604, %v1700
      %v1702 = vpop.f32.mrb[0].mxu0
      %v1703 = vpop.f32.mrb[0].mxu0
      %v1704 = vadd.f32 %v1607, %v1703
      %v1705 = vpop.f32.mrb[0].mxu0
      %1706 = vmatprep.mubr.bf16.mxu0 0
      %1707 = vmatmul.mubr.bf16.gmra.mrb[0].mxu0 %v1350
      %v1708 = vpop.f32.mrb[0].mxu0
      %v1709 = vadd.f32 %v1612, %v1708
      %v1710 = vpop.f32.mrb[0].mxu0
      %v1711 = vpop.f32.mrb[0].mxu0
      %v1712 = vadd.f32 %v1615, %v1711
      %v1713 = vpop.f32.mrb[0].mxu0
      %1714 = vmatprep.mubr.bf16.mxu0 0
      %1715 = vmatmul.mubr.bf16.gmra.mrb[0].mxu0 %v1353
      %v1716 = vpop.f32.mrb[0].mxu0
      %v1717 = vadd.f32 %v1620, %v1716
      %v1718 = vpop.f32.mrb[0].mxu0
      %v1719 = vpop.f32.mrb[0].mxu0
      %v1720 = vadd.f32 %v1623, %v1719
      %v1721 = vpop.f32.mrb[0].mxu0
      %1722 = vmatprep.mubr.bf16.mxu0 0
      %1723 = vmatmul.mubr.bf16.gmra.mrb[0].mxu0 %v1356
      %v1724 = vpop.f32.mrb[0].mxu0
      %v1725 = vadd.f32 %v1628, %v1724
      %v1726 = vpop.f32.mrb[0].mxu0
      %v1727 = vpop.f32.mrb[0].mxu0
      %v1728 = vadd.f32 %v1631, %v1727
      %v1729 = vpop.f32.mrb[0].mxu0
      %1730 = vmatprep.mubr.bf16.mxu0 0
      %1731 = vmatmul.mubr.bf16.gmra.mrb[0].mxu0 %v1359
      %v1732 = vpop.f32.mrb[0].mxu0
      %v1733 = vadd.f32 %v1636, %v1732
      %v1734 = vpop.f32.mrb[0].mxu0
      %v1735 = vpop.f32.mrb[0].mxu0
      %v1736 = vadd.f32 %v1639, %v1735
      %v1737 = vpop.f32.mrb[0].mxu0
      %1738 = vmatprep.mubr.bf16.mxu0 0
      %1739 = vmatmul.mubr.bf16.gmra.mrb[0].mxu0 %v1362
      %v1740 = vpop.f32.mrb[0].mxu0
      %v1741 = vadd.f32 %v1644, %v1740
      %v1742 = vpop.f32.mrb[0].mxu0
      %v1743 = vpop.f32.mrb[0].mxu0
      %v1744 = vadd.f32 %v1647, %v1743
      %v1745 = vpop.f32.mrb[0].mxu0
      %1746 = vmatprep.mubr.bf16.mxu0 0
      %1747 = vmatmul.mubr.bf16.gmra.mrb[0].mxu0 %v1365
      %v1748 = vpop.f32.mrb[0].mxu0
      %v1749 = vadd.f32 %v1652, %v1748
      %v1750 = vpop.f32.mrb[0].mxu0
      %v1751 = vpop.f32.mrb[0].mxu0
      %v1752 = vadd.f32 %v1655, %v1751
      %v1753 = vpop.f32.mrb[0].mxu0
      %1754 = vdwg.mxu0
      %v1755 = vmax.f32 %v1693, 0.0
      %v1756 = vmax.f32 %v1696, 0.0
      %v1757 = vmax.f32 %v1701, 0.0
      %v1758 = vmax.f32 %v1704, 0.0
      %v1759 = vmax.f32 %v1709, 0.0
      %v1760 = vmax.f32 %v1712, 0.0
      %v1761 = vmax.f32 %v1717, 0.0
      %v1762 = vmax.f32 %v1720, 0.0
      %v1763 = vmax.f32 %v1725, 0.0
      %v1764 = vmax.f32 %v1728, 0.0
      %v1765 = vmax.f32 %v1733, 0.0
      %v1766 = vmax.f32 %v1736, 0.0
      %v1767 = vmax.f32 %v1741, 0.0
      %v1768 = vmax.f32 %v1744, 0.0
      %v1769 = vmax.f32 %v1749, 0.0
      %v1770 = vmax.f32 %v1752, 0.0
      %v1771 = vpack.c.bf16 %v1756, %v1755
      %v1772 = vpack.c.bf16 %v1758, %v1757
      %v1773 = vpack.c.bf16 %v1760, %v1759
      %v1774 = vpack.c.bf16 %v1762, %v1761
      %v1775 = vpack.c.bf16 %v1764, %v1763
      %v1776 = vpack.c.bf16 %v1766, %v1765
      %v1777 = vpack.c.bf16 %v1768, %v1767
      %v1778 = vpack.c.bf16 %v1770, %v1769
      %v1779 = vld [vmem:[%s3] sm:$0xf]
      %v1780 = vld [vmem:[%s3 + $0x4] sm:$0xf]
      %v1781 = vld [vmem:[%s3 + $0x8] sm:$0xf]
      %v1782 = vld [vmem:[%s3 + $0xc] sm:$0xf]
      %v1783 = vld [vmem:[%s3 + $0x10] sm:$0xf]
      %v1784 = vld [vmem:[%s3 + $0x14] sm:$0xf]
      %v1785 = vld [vmem:[%s3 + $0x18] sm:$0xf]
      %v1786 = vld [vmem:[%s3 + $0x1c] sm:$0xf]
      %v1787 = vld [vmem:[%s3 + $0x20] sm:$0xf]
      %v1788 = vld [vmem:[%s3 + $0x24] sm:$0xf]
      %v1789 = vld [vmem:[%s3 + $0x28] sm:$0xf]
      %v1790 = vld [vmem:[%s3 + $0x2c] sm:$0xf]
      %v1791 = vld [vmem:[%s3 + $0x30] sm:$0xf]
      %v1792 = vld [vmem:[%s3 + $0x34] sm:$0xf]
      %v1793 = vld [vmem:[%s3 + $0x38] sm:$0xf]
      %v1794 = vld [vmem:[%s3 + $0x3c] sm:$0xf]
      %v1795 = vld [vmem:[%s4] sm:$0x1]
      %v1797 = vlaneseq
      %v1798 = vshrl.u32 %v1797, 7
      %v1799 = vsub.s32 0, %v1798
      %v1800 = vrot.slane %v1795, %v1799
      %v1818 = vunpack.c.l.b16 %v1779
      %v1819 = vunpack.c.l.b16 %v1780
      %v1820 = vunpack.c.l.b16 %v1781
      %v1821 = vunpack.c.l.b16 %v1782
      %v1822 = vunpack.c.l.b16 %v1783
      %v1823 = vunpack.c.l.b16 %v1784
      %v1824 = vunpack.c.l.b16 %v1785
      %v1825 = vunpack.c.l.b16 %v1786
      %v1826 = vunpack.c.l.b16 %v1787
      %v1827 = vunpack.c.l.b16 %v1788
      %v1828 = vunpack.c.l.b16 %v1789
      %v1829 = vunpack.c.l.b16 %v1790
      %v1830 = vunpack.c.l.b16 %v1791
      %v1831 = vunpack.c.l.b16 %v1792
      %v1832 = vunpack.c.l.b16 %v1793
      %v1833 = vunpack.c.l.b16 %v1794
      %v1834 = vpack.c.b16 %v1819, %v1818
      %v1835 = vpack.c.b16 %v1821, %v1820
      %v1836 = vpack.c.b16 %v1823, %v1822
      %v1837 = vpack.c.b16 %v1825, %v1824
      %v1838 = vpack.c.b16 %v1827, %v1826
      %v1839 = vpack.c.b16 %v1829, %v1828
      %v1840 = vpack.c.b16 %v1831, %v1830
      %v1841 = vpack.c.b16 %v1833, %v1832
      %1850 = vmatprep.subr.bf16.mxu0 0
      %1851 = vmatpush1.bf16.msra.mxu0 %v1834
      %1852 = vmatprep.subr.bf16.mxu0 0
      %1853 = vmatpush1.bf16.msra.mxu0 %v1835
      %1854 = vmatprep.subr.bf16.mxu0 0
      %1855 = vmatpush1.bf16.msra.mxu0 %v1836
      %1856 = vmatprep.subr.bf16.mxu0 0
      %1857 = vmatpush1.bf16.msra.mxu0 %v1837
      %1858 = vmatprep.subr.bf16.mxu0 0
      %1859 = vmatpush1.bf16.msra.mxu0 %v1838
      %1860 = vmatprep.subr.bf16.mxu0 0
      %1861 = vmatpush1.bf16.msra.mxu0 %v1839
      %1862 = vmatprep.subr.bf16.mxu0 0
      %1863 = vmatpush1.bf16.msra.mxu0 %v1840
      %1864 = vmatprep.subr.bf16.mxu0 0
      %1865 = vmatpush1.bf16.msra.mxu0 %v1841
      %1866 = vmatprep.subr.bf16.mxu0 0
      %1867 = vmatpush1.bf16.msra.mxu0 0
      %1868 = vmatprep.subr.bf16.mxu0 0
      %1869 = vmatpush1.bf16.msra.mxu0 0
      %1870 = vmatprep.subr.bf16.mxu0 0
      %1871 = vmatpush1.bf16.msra.mxu0 0
      %1872 = vmatprep.subr.bf16.mxu0 0
      %1873 = vmatpush1.bf16.msra.mxu0 0
      %1874 = vmatprep.subr.bf16.mxu0 0
      %1875 = vmatpush1.bf16.msra.mxu0 0
      %1876 = vmatprep.subr.bf16.mxu0 0
      %1877 = vmatpush1.bf16.msra.mxu0 0
      %1878 = vmatprep.subr.bf16.mxu0 0
      %1879 = vmatpush1.bf16.msra.mxu0 0
      %1880 = vmatprep.subr.bf16.mxu0 0
      %1881 = vmatpush1.bf16.msra.mxu0 0
      %1882 = vmatprep.mubr.bf16.mxu0 0
      %1883 = vmatmul.mubr.bf16.gmra.mrb[0].mxu0 %v1771
      %v1884 = vpop.f32.mrb[0].mxu0
      %v1885 = vadd.f32 %v1800, %v1884
      %v1886 = vpop.f32.mrb[0].mxu0
      %v1887 = vpop.f32.mrb[0].mxu0
      %v1888 = vadd.f32 %v1800, %v1887
      %v1889 = vpop.f32.mrb[0].mxu0
      %1890 = vmatprep.mubr.bf16.mxu0 0
      %1891 = vmatmul.mubr.bf16.gmra.mrb[0].mxu0 %v1772
      %v1892 = vpop.f32.mrb[0].mxu0
      %v1893 = vadd.f32 %v1800, %v1892
      %v1894 = vpop.f32.mrb[0].mxu0
      %v1895 = vpop.f32.mrb[0].mxu0
      %v1896 = vadd.f32 %v1800, %v1895
      %v1897 = vpop.f32.mrb[0].mxu0
      %1898 = vmatprep.mubr.bf16.mxu0 0
      %1899 = vmatmul.mubr.bf16.gmra.mrb[0].mxu0 %v1773
      %v1900 = vpop.f32.mrb[0].mxu0
      %v1901 = vadd.f32 %v1800, %v1900
      %v1902 = vpop.f32.mrb[0].mxu0
      %v1903 = vpop.f32.mrb[0].mxu0
      %v1904 = vadd.f32 %v1800, %v1903
      %v1905 = vpop.f32.mrb[0].mxu0
      %1906 = vmatprep.mubr.bf16.mxu0 0
      %1907 = vmatmul.mubr.bf16.gmra.mrb[0].mxu0 %v1774
      %v1908 = vpop.f32.mrb[0].mxu0
      %v1909 = vadd.f32 %v1800, %v1908
      %v1910 = vpop.f32.mrb[0].mxu0
      %v1911 = vpop.f32.mrb[0].mxu0
      %v1912 = vadd.f32 %v1800, %v1911
      %v1913 = vpop.f32.mrb[0].mxu0
      %1914 = vmatprep.mubr.bf16.mxu0 0
      %1915 = vmatmul.mubr.bf16.gmra.mrb[0].mxu0 %v1775
      %v1916 = vpop.f32.mrb[0].mxu0
      %v1917 = vadd.f32 %v1800, %v1916
      %v1918 = vpop.f32.mrb[0].mxu0
      %v1919 = vpop.f32.mrb[0].mxu0
      %v1920 = vadd.f32 %v1800, %v1919
      %v1921 = vpop.f32.mrb[0].mxu0
      %1922 = vmatprep.mubr.bf16.mxu0 0
      %1923 = vmatmul.mubr.bf16.gmra.mrb[0].mxu0 %v1776
      %v1924 = vpop.f32.mrb[0].mxu0
      %v1925 = vadd.f32 %v1800, %v1924
      %v1926 = vpop.f32.mrb[0].mxu0
      %v1927 = vpop.f32.mrb[0].mxu0
      %v1928 = vadd.f32 %v1800, %v1927
      %v1929 = vpop.f32.mrb[0].mxu0
      %1930 = vmatprep.mubr.bf16.mxu0 0
      %1931 = vmatmul.mubr.bf16.gmra.mrb[0].mxu0 %v1777
      %v1932 = vpop.f32.mrb[0].mxu0
      %v1933 = vadd.f32 %v1800, %v1932
      %v1934 = vpop.f32.mrb[0].mxu0
      %v1935 = vpop.f32.mrb[0].mxu0
      %v1936 = vadd.f32 %v1800, %v1935
      %v1937 = vpop.f32.mrb[0].mxu0
      %1938 = vmatprep.mubr.bf16.mxu0 0
      %1939 = vmatmul.mubr.bf16.gmra.mrb[0].mxu0 %v1778
      %v1940 = vpop.f32.mrb[0].mxu0
      %v1941 = vadd.f32 %v1800, %v1940
      %v1942 = vpop.f32.mrb[0].mxu0
      %v1943 = vpop.f32.mrb[0].mxu0
      %v1944 = vadd.f32 %v1800, %v1943
      %v1945 = vpop.f32.mrb[0].mxu0
      %1946 = vdwg.mxu0
      %v1947 = vmax.f32 %v1885, 0.0
      %v1948 = vmax.f32 %v1888, 0.0
      %v1949 = vmax.f32 %v1893, 0.0
      %v1950 = vmax.f32 %v1896, 0.0
      %v1951 = vmax.f32 %v1901, 0.0
      %v1952 = vmax.f32 %v1904, 0.0
      %v1953 = vmax.f32 %v1909, 0.0
      %v1954 = vmax.f32 %v1912, 0.0
      %v1955 = vmax.f32 %v1917, 0.0
      %v1956 = vmax.f32 %v1920, 0.0
      %v1957 = vmax.f32 %v1925, 0.0
      %v1958 = vmax.f32 %v1928, 0.0
      %v1959 = vmax.f32 %v1933, 0.0
      %v1960 = vmax.f32 %v1936, 0.0
      %v1961 = vmax.f32 %v1941, 0.0
      %v1962 = vmax.f32 %v1944, 0.0
      %v1963 = vpack.c.bf16 %v1948, %v1947
      %v1964 = vpack.c.bf16 %v1950, %v1949
      %v1965 = vpack.c.bf16 %v1952, %v1951
      %v1966 = vpack.c.bf16 %v1954, %v1953
      %v1967 = vpack.c.bf16 %v1956, %v1955
      %v1968 = vpack.c.bf16 %v1958, %v1957
      %v1969 = vpack.c.bf16 %v1960, %v1959
      %v1970 = vpack.c.bf16 %v1962, %v1961
      %v1971 = vld [vmem:[%s5] sm:$0xf]
      %v1972 = vld [vmem:[%s5 + $0x4] sm:$0xf]
      %v1973 = vld [vmem:[%s5 + $0x8] sm:$0xf]
      %v1974 = vld [vmem:[%s5 + $0xc] sm:$0xf]
      %v1975 = vld [vmem:[%s5 + $0x10] sm:$0xf]
      %v1976 = vld [vmem:[%s5 + $0x14] sm:$0xf]
      %v1977 = vld [vmem:[%s5 + $0x18] sm:$0xf]
      %v1978 = vld [vmem:[%s5 + $0x1c] sm:$0xf]
      %v1979 = vld [vmem:[%s6] sm:$0x1]
      %v1981 = vlaneseq
      %v1982 = vshrl.u32 %v1981, 7
      %v1983 = vsub.s32 0, %v1982
      %v1984 = vrot.slane %v1979, %v1983
      %v1994 = vunpack.c.l.b16 %v1971
      %v1995 = vunpack.c.l.b16 %v1972
      %v1996 = vunpack.c.l.b16 %v1973
      %v1997 = vunpack.c.l.b16 %v1974
      %v1998 = vunpack.c.l.b16 %v1975
      %v1999 = vunpack.c.l.b16 %v1976
      %v2000 = vunpack.c.l.b16 %v1977
      %v2001 = vunpack.c.l.b16 %v1978
      %v2002 = vpack.c.b16 %v1995, %v1994
      %v2003 = vpack.c.b16 %v1997, %v1996
      %v2004 = vpack.c.b16 %v1999, %v1998
      %v2005 = vpack.c.b16 %v2001, %v2000
      %vm2010 = vcmask 523264
      %v2012 = vsel %vm2010, %v1963, 0
      %v2015 = vsel %vm2010, %v1964, 0
      %v2018 = vsel %vm2010, %v1965, 0
      %v2021 = vsel %vm2010, %v1966, 0
      %v2024 = vsel %vm2010, %v1967, 0
      %v2027 = vsel %vm2010, %v1968, 0
      %v2030 = vsel %vm2010, %v1969, 0
      %v2033 = vsel %vm2010, %v1970, 0
      %2035 = vmatprep.subr.bf16.mxu0 0
      %2036 = vmatpush1.bf16.msra.mxu0 %v2002
      %2037 = vmatprep.subr.bf16.mxu0 0
      %2038 = vmatpush1.bf16.msra.mxu0 %v2003
      %2039 = vmatprep.subr.bf16.mxu0 0
      %2040 = vmatpush1.bf16.msra.mxu0 %v2004
      %2041 = vmatprep.subr.bf16.mxu0 0
      %2042 = vmatpush1.bf16.msra.mxu0 %v2005
      %2043 = vmatprep.subr.bf16.mxu0 0
      %2044 = vmatpush1.bf16.msra.mxu0 0
      %2045 = vmatprep.subr.bf16.mxu0 0
      %2046 = vmatpush1.bf16.msra.mxu0 0
      %2047 = vmatprep.subr.bf16.mxu0 0
      %2048 = vmatpush1.bf16.msra.mxu0 0
      %2049 = vmatprep.subr.bf16.mxu0 0
      %2050 = vmatpush1.bf16.msra.mxu0 0
      %2051 = vmatprep.subr.bf16.mxu0 0
      %2052 = vmatpush1.bf16.msra.mxu0 0
      %2053 = vmatprep.subr.bf16.mxu0 0
      %2054 = vmatpush1.bf16.msra.mxu0 0
      %2055 = vmatprep.subr.bf16.mxu0 0
      %2056 = vmatpush1.bf16.msra.mxu0 0
      %2057 = vmatprep.subr.bf16.mxu0 0
      %2058 = vmatpush1.bf16.msra.mxu0 0
      %2059 = vmatprep.subr.bf16.mxu0 0
      %2060 = vmatpush1.bf16.msra.mxu0 0
      %2061 = vmatprep.subr.bf16.mxu0 0
      %2062 = vmatpush1.bf16.msra.mxu0 0
      %2063 = vmatprep.subr.bf16.mxu0 0
      %2064 = vmatpush1.bf16.msra.mxu0 0
      %2065 = vmatprep.subr.bf16.mxu0 0
      %2066 = vmatpush1.bf16.msra.mxu0 0
      %2067 = vmatprep.mubr.bf16.mxu0 0
      %2068 = vmatmul.mubr.bf16.gmra.mrb[0].mxu0 %v2012
      %v2069 = vpop.f32.mrb[0].mxu0
      %v2070 = vadd.f32 %v1984, %v2069
      %v2071 = vpop.f32.mrb[0].mxu0
      %v2072 = vpop.f32.mrb[0].mxu0
      %v2073 = vadd.f32 %v1984, %v2072
      %v2074 = vpop.f32.mrb[0].mxu0
      %2075 = vmatprep.mubr.bf16.mxu0 0
      %2076 = vmatmul.mubr.bf16.gmra.mrb[0].mxu0 %v2015
      %v2077 = vpop.f32.mrb[0].mxu0
      %v2078 = vadd.f32 %v1984, %v2077
      %v2079 = vpop.f32.mrb[0].mxu0
      %v2080 = vpop.f32.mrb[0].mxu0
      %v2081 = vadd.f32 %v1984, %v2080
      %v2082 = vpop.f32.mrb[0].mxu0
      %2083 = vmatprep.mubr.bf16.mxu0 0
      %2084 = vmatmul.mubr.bf16.gmra.mrb[0].mxu0 %v2018
      %v2085 = vpop.f32.mrb[0].mxu0
      %v2086 = vadd.f32 %v1984, %v2085
      %v2087 = vpop.f32.mrb[0].mxu0
      %v2088 = vpop.f32.mrb[0].mxu0
      %v2089 = vadd.f32 %v1984, %v2088
      %v2090 = vpop.f32.mrb[0].mxu0
      %2091 = vmatprep.mubr.bf16.mxu0 0
      %2092 = vmatmul.mubr.bf16.gmra.mrb[0].mxu0 %v2021
      %v2093 = vpop.f32.mrb[0].mxu0
      %v2094 = vadd.f32 %v1984, %v2093
      %v2095 = vpop.f32.mrb[0].mxu0
      %v2096 = vpop.f32.mrb[0].mxu0
      %v2097 = vadd.f32 %v1984, %v2096
      %v2098 = vpop.f32.mrb[0].mxu0
      %2099 = vmatprep.mubr.bf16.mxu0 0
      %2100 = vmatmul.mubr.bf16.gmra.mrb[0].mxu0 %v2024
      %v2101 = vpop.f32.mrb[0].mxu0
      %v2102 = vadd.f32 %v1984, %v2101
      %v2103 = vpop.f32.mrb[0].mxu0
      %v2104 = vpop.f32.mrb[0].mxu0
      %v2105 = vadd.f32 %v1984, %v2104
      %v2106 = vpop.f32.mrb[0].mxu0
      %2107 = vmatprep.mubr.bf16.mxu0 0
      %2108 = vmatmul.mubr.bf16.gmra.mrb[0].mxu0 %v2027
      %v2109 = vpop.f32.mrb[0].mxu0
      %v2110 = vadd.f32 %v1984, %v2109
      %v2111 = vpop.f32.mrb[0].mxu0
      %v2112 = vpop.f32.mrb[0].mxu0
      %v2113 = vadd.f32 %v1984, %v2112
      %v2114 = vpop.f32.mrb[0].mxu0
      %2115 = vmatprep.mubr.bf16.mxu0 0
      %2116 = vmatmul.mubr.bf16.gmra.mrb[0].mxu0 %v2030
      %v2117 = vpop.f32.mrb[0].mxu0
      %v2118 = vadd.f32 %v1984, %v2117
      %v2119 = vpop.f32.mrb[0].mxu0
      %v2120 = vpop.f32.mrb[0].mxu0
      %v2121 = vadd.f32 %v1984, %v2120
      %v2122 = vpop.f32.mrb[0].mxu0
      %2123 = vmatprep.mubr.bf16.mxu0 0
      %2124 = vmatmul.mubr.bf16.gmra.mrb[0].mxu0 %v2033
      %v2125 = vpop.f32.mrb[0].mxu0
      %v2126 = vadd.f32 %v1984, %v2125
      %v2127 = vpop.f32.mrb[0].mxu0
      %v2128 = vpop.f32.mrb[0].mxu0
      %v2129 = vadd.f32 %v1984, %v2128
      %v2130 = vpop.f32.mrb[0].mxu0
      %2131 = vdwg.mxu0
      %v2132 = vmax.f32 %v2070, 0.0
      %v2133 = vmax.f32 %v2073, 0.0
      %v2134 = vmax.f32 %v2078, 0.0
      %v2135 = vmax.f32 %v2081, 0.0
      %v2136 = vmax.f32 %v2086, 0.0
      %v2137 = vmax.f32 %v2089, 0.0
      %v2138 = vmax.f32 %v2094, 0.0
      %v2139 = vmax.f32 %v2097, 0.0
      %v2140 = vmax.f32 %v2102, 0.0
      %v2141 = vmax.f32 %v2105, 0.0
      %v2142 = vmax.f32 %v2110, 0.0
      %v2143 = vmax.f32 %v2113, 0.0
      %v2144 = vmax.f32 %v2118, 0.0
      %v2145 = vmax.f32 %v2121, 0.0
      %v2146 = vmax.f32 %v2126, 0.0
      %v2147 = vmax.f32 %v2129, 0.0
      %v2148 = vpack.c.bf16 %v2133, %v2132
      %v2149 = vpack.c.bf16 %v2135, %v2134
      %v2150 = vpack.c.bf16 %v2137, %v2136
      %v2151 = vpack.c.bf16 %v2139, %v2138
      %v2152 = vpack.c.bf16 %v2141, %v2140
      %v2153 = vpack.c.bf16 %v2143, %v2142
      %v2154 = vpack.c.bf16 %v2145, %v2144
      %v2155 = vpack.c.bf16 %v2147, %v2146
      %v2156 = vld [vmem:[%s7] sm:$0xf]
      %v2157 = vld [vmem:[%s7 + $0x4] sm:$0x3]
      %v2158 = vld [vmem:[%s8] sm:$0x1]
      %v2160 = vlaneseq
      %v2161 = vshrl.u32 %v2160, 7
      %v2162 = vsub.s32 0, %v2161
      %v2163 = vrot.slane %v2158, %v2162
      %v2167 = vunpack.c.l.b16 %v2156
      %v2168 = vunpack.c.l.b16 %v2157
      %v2169 = vpack.c.b16 %v2168, %v2167
      %vm2170 = vcmask 97280
      %v2172 = vsel %vm2170, %v2148, 0
      %v2175 = vsel %vm2170, %v2149, 0
      %v2178 = vsel %vm2170, %v2150, 0
      %v2181 = vsel %vm2170, %v2151, 0
      %v2184 = vsel %vm2170, %v2152, 0
      %v2187 = vsel %vm2170, %v2153, 0
      %v2190 = vsel %vm2170, %v2154, 0
      %v2193 = vsel %vm2170, %v2155, 0
      %vm2195 = vcmask 1045504
      %v2197 = vsel %vm2195, %v2169, 0
      %2199 = vmatprep.subr.bf16.mxu0 0
      %2200 = vmatpush1.bf16.msra.mxu0 %v2197
      %2201 = vmatprep.subr.bf16.mxu0 0
      %2202 = vmatpush1.bf16.msra.mxu0 0
      %2203 = vmatprep.subr.bf16.mxu0 0
      %2204 = vmatpush1.bf16.msra.mxu0 0
      %2205 = vmatprep.subr.bf16.mxu0 0
      %2206 = vmatpush1.bf16.msra.mxu0 0
      %2207 = vmatprep.subr.bf16.mxu0 0
      %2208 = vmatpush1.bf16.msra.mxu0 0
      %2209 = vmatprep.subr.bf16.mxu0 0
      %2210 = vmatpush1.bf16.msra.mxu0 0
      %2211 = vmatprep.subr.bf16.mxu0 0
      %2212 = vmatpush1.bf16.msra.mxu0 0
      %2213 = vmatprep.subr.bf16.mxu0 0
      %2214 = vmatpush1.bf16.msra.mxu0 0
      %2215 = vmatprep.subr.bf16.mxu0 0
      %2216 = vmatpush1.bf16.msra.mxu0 0
      %2217 = vmatprep.subr.bf16.mxu0 0
      %2218 = vmatpush1.bf16.msra.mxu0 0
      %2219 = vmatprep.subr.bf16.mxu0 0
      %2220 = vmatpush1.bf16.msra.mxu0 0
      %2221 = vmatprep.subr.bf16.mxu0 0
      %2222 = vmatpush1.bf16.msra.mxu0 0
      %2223 = vmatprep.subr.bf16.mxu0 0
      %2224 = vmatpush1.bf16.msra.mxu0 0
      %2225 = vmatprep.subr.bf16.mxu0 0
      %2226 = vmatpush1.bf16.msra.mxu0 0
      %2227 = vmatprep.subr.bf16.mxu0 0
      %2228 = vmatpush1.bf16.msra.mxu0 0
      %2229 = vmatprep.subr.bf16.mxu0 0
      %2230 = vmatpush1.bf16.msra.mxu0 0
      %2231 = vmatprep.mubr.bf16.mxu0 0
      %2232 = vmatmul.mubr.bf16.gmra.mrb[0].mxu0 %v2172
      %v2233 = vpop.f32.mrb[0].mxu0
      %v2234 = vadd.f32 %v2163, %v2233
      %v2235 = vpop.f32.mrb[0].mxu0
      %v2236 = vpop.f32.mrb[0].mxu0
      %v2237 = vadd.f32 %v2163, %v2236
      %v2238 = vpop.f32.mrb[0].mxu0
      %2239 = vmatprep.mubr.bf16.mxu0 0
      %2240 = vmatmul.mubr.bf16.gmra.mrb[0].mxu0 %v2175
      %v2241 = vpop.f32.mrb[0].mxu0
      %v2242 = vadd.f32 %v2163, %v2241
      %v2243 = vpop.f32.mrb[0].mxu0
      %v2244 = vpop.f32.mrb[0].mxu0
      %v2245 = vadd.f32 %v2163, %v2244
      %v2246 = vpop.f32.mrb[0].mxu0
      %2247 = vmatprep.mubr.bf16.mxu0 0
      %2248 = vmatmul.mubr.bf16.gmra.mrb[0].mxu0 %v2178
      %v2249 = vpop.f32.mrb[0].mxu0
      %v2250 = vadd.f32 %v2163, %v2249
      %v2251 = vpop.f32.mrb[0].mxu0
      %v2252 = vpop.f32.mrb[0].mxu0
      %v2253 = vadd.f32 %v2163, %v2252
      %v2254 = vpop.f32.mrb[0].mxu0
      %2255 = vmatprep.mubr.bf16.mxu0 0
      %2256 = vmatmul.mubr.bf16.gmra.mrb[0].mxu0 %v2181
      %v2257 = vpop.f32.mrb[0].mxu0
      %v2258 = vadd.f32 %v2163, %v2257
      %v2259 = vpop.f32.mrb[0].mxu0
      %v2260 = vpop.f32.mrb[0].mxu0
      %v2261 = vadd.f32 %v2163, %v2260
      %v2262 = vpop.f32.mrb[0].mxu0
      %2263 = vmatprep.mubr.bf16.mxu0 0
      %2264 = vmatmul.mubr.bf16.gmra.mrb[0].mxu0 %v2184
      %v2265 = vpop.f32.mrb[0].mxu0
      %v2266 = vadd.f32 %v2163, %v2265
      %v2267 = vpop.f32.mrb[0].mxu0
      %v2268 = vpop.f32.mrb[0].mxu0
      %v2269 = vadd.f32 %v2163, %v2268
      %v2270 = vpop.f32.mrb[0].mxu0
      %2271 = vmatprep.mubr.bf16.mxu0 0
      %2272 = vmatmul.mubr.bf16.gmra.mrb[0].mxu0 %v2187
      %v2273 = vpop.f32.mrb[0].mxu0
      %v2274 = vadd.f32 %v2163, %v2273
      %v2275 = vpop.f32.mrb[0].mxu0
      %v2276 = vpop.f32.mrb[0].mxu0
      %v2277 = vadd.f32 %v2163, %v2276
      %v2278 = vpop.f32.mrb[0].mxu0
      %2279 = vmatprep.mubr.bf16.mxu0 0
      %2280 = vmatmul.mubr.bf16.gmra.mrb[0].mxu0 %v2190
      %v2281 = vpop.f32.mrb[0].mxu0
      %v2282 = vadd.f32 %v2163, %v2281
      %v2283 = vpop.f32.mrb[0].mxu0
      %v2284 = vpop.f32.mrb[0].mxu0
      %v2285 = vadd.f32 %v2163, %v2284
      %v2286 = vpop.f32.mrb[0].mxu0
      %2287 = vmatprep.mubr.bf16.mxu0 0
      %2288 = vmatmul.mubr.bf16.gmra.mrb[0].mxu0 %v2193
      %v2289 = vpop.f32.mrb[0].mxu0
      %v2290 = vadd.f32 %v2163, %v2289
      %v2291 = vpop.f32.mrb[0].mxu0
      %v2292 = vpop.f32.mrb[0].mxu0
      %v2293 = vadd.f32 %v2163, %v2292
      %v2294 = vpop.f32.mrb[0].mxu0
      %2295 = vdwg.mxu0
      %v2296 = vpack.c.bf16 %v2237, %v2234
      %v2297 = vpack.c.bf16 %v2245, %v2242
      %v2298 = vpack.c.bf16 %v2253, %v2250
      %v2299 = vpack.c.bf16 %v2261, %v2258
      %v2300 = vpack.c.bf16 %v2269, %v2266
      %v2301 = vpack.c.bf16 %v2277, %v2274
      %v2302 = vpack.c.bf16 %v2285, %v2282
      %v2303 = vpack.c.bf16 %v2293, %v2290
      %v2312 = vunpack.c.l.b16 %v2296
      %v2313 = vunpack.c.h.b16 %v2296
      %v2314 = vunpack.c.l.b16 %v2297
      %v2315 = vunpack.c.h.b16 %v2297
      %v2316 = vunpack.c.l.b16 %v2298
      %v2317 = vunpack.c.h.b16 %v2298
      %v2318 = vunpack.c.l.b16 %v2299
      %v2319 = vunpack.c.h.b16 %v2299
      %v2320 = vunpack.c.l.b16 %v2300
      %v2321 = vunpack.c.h.b16 %v2300
      %v2322 = vunpack.c.l.b16 %v2301
      %v2323 = vunpack.c.h.b16 %v2301
      %v2324 = vunpack.c.l.b16 %v2302
      %v2325 = vunpack.c.h.b16 %v2302
      %v2326 = vunpack.c.l.b16 %v2303
      %v2327 = vunpack.c.h.b16 %v2303
      %v2328 = vpack.c.b16 %v2312, %v2312
      %v2329 = vpack.c.b16 %v2313, %v2313
      %v2330 = vpack.c.b16 %v2314, %v2314
      %v2331 = vpack.c.b16 %v2315, %v2315
      %v2332 = vpack.c.b16 %v2316, %v2316
      %v2333 = vpack.c.b16 %v2317, %v2317
      %v2334 = vpack.c.b16 %v2318, %v2318
      %v2335 = vpack.c.b16 %v2319, %v2319
      %v2336 = vpack.c.b16 %v2320, %v2320
      %v2337 = vpack.c.b16 %v2321, %v2321
      %v2338 = vpack.c.b16 %v2322, %v2322
      %v2339 = vpack.c.b16 %v2323, %v2323
      %v2340 = vpack.c.b16 %v2324, %v2324
      %v2341 = vpack.c.b16 %v2325, %v2325
      %v2342 = vpack.c.b16 %v2326, %v2326
      %v2343 = vpack.c.b16 %v2327, %v2327
      %vm2360 = vcmask 19456
      %2361 = vst.msk [vmem:[%s589] sm:$0xf] %vm2360, %v2328
      %2362 = vst.msk [vmem:[%s589 + $0x4] sm:$0xf] %vm2360, %v2329
      %2363 = vst.msk [vmem:[%s589 + $0x8] sm:$0xf] %vm2360, %v2330
      %2364 = vst.msk [vmem:[%s589 + $0xc] sm:$0xf] %vm2360, %v2331
      %2365 = vst.msk [vmem:[%s589 + $0x10] sm:$0xf] %vm2360, %v2332
      %2366 = vst.msk [vmem:[%s589 + $0x14] sm:$0xf] %vm2360, %v2333
      %2367 = vst.msk [vmem:[%s589 + $0x18] sm:$0xf] %vm2360, %v2334
      %2368 = vst.msk [vmem:[%s589 + $0x1c] sm:$0xf] %vm2360, %v2335
      %2369 = vst.msk [vmem:[%s589 + $0x20] sm:$0xf] %vm2360, %v2336
      %2370 = vst.msk [vmem:[%s589 + $0x24] sm:$0xf] %vm2360, %v2337
      %2371 = vst.msk [vmem:[%s589 + $0x28] sm:$0xf] %vm2360, %v2338
      %2372 = vst.msk [vmem:[%s589 + $0x2c] sm:$0xf] %vm2360, %v2339
      %2373 = vst.msk [vmem:[%s589 + $0x30] sm:$0xf] %vm2360, %v2340
      %2374 = vst.msk [vmem:[%s589 + $0x34] sm:$0xf] %vm2360, %v2341
      %2375 = vst.msk [vmem:[%s589 + $0x38] sm:$0xf] %vm2360, %v2342
      %2376 = vst.msk [vmem:[%s589 + $0x3c] sm:$0xf] %vm2360, %v2343
      %v2377 = vld [vmem:[%s9] sm:$0xf]
      %v2378 = vld [vmem:[%s9 + $0x4] sm:$0xf]
      %v2379 = vld [vmem:[%s9 + $0x8] sm:$0xf]
      %v2380 = vld [vmem:[%s9 + $0xc] sm:$0xf]
      %v2381 = vld [vmem:[%s9 + $0x10] sm:$0xf]
      %v2382 = vld [vmem:[%s9 + $0x14] sm:$0xf]
      %v2383 = vld [vmem:[%s9 + $0x18] sm:$0xf]
      %v2384 = vld [vmem:[%s9 + $0x1c] sm:$0xf]
      %v2385 = vld [vmem:[%s9 + $0x20] sm:$0xf]
      %v2386 = vld [vmem:[%s9 + $0x24] sm:$0xf]
      %v2387 = vld [vmem:[%s9 + $0x28] sm:$0xf]
      %v2388 = vld [vmem:[%s9 + $0x2c] sm:$0xf]
      %v2389 = vld [vmem:[%s9 + $0x30] sm:$0xf]
      %v2390 = vld [vmem:[%s9 + $0x34] sm:$0xf]
      %v2391 = vld [vmem:[%s9 + $0x38] sm:$0xf]
      %v2392 = vld [vmem:[%s9 + $0x3c] sm:$0xf]
      %v2393 = vld [vmem:[%s10] sm:$0x1]
      %v2395 = vlaneseq
      %v2396 = vshrl.u32 %v2395, 7
      %v2397 = vsub.s32 0, %v2396
      %v2398 = vrot.slane %v2393, %v2397
      %v2416 = vunpack.c.l.b16 %v2377
      %v2417 = vunpack.c.l.b16 %v2378
      %v2418 = vunpack.c.l.b16 %v2379
      %v2419 = vunpack.c.l.b16 %v2380
      %v2420 = vunpack.c.l.b16 %v2381
      %v2421 = vunpack.c.l.b16 %v2382
      %v2422 = vunpack.c.l.b16 %v2383
      %v2423 = vunpack.c.l.b16 %v2384
      %v2424 = vunpack.c.l.b16 %v2385
      %v2425 = vunpack.c.l.b16 %v2386
      %v2426 = vunpack.c.l.b16 %v2387
      %v2427 = vunpack.c.l.b16 %v2388
      %v2428 = vunpack.c.l.b16 %v2389
      %v2429 = vunpack.c.l.b16 %v2390
      %v2430 = vunpack.c.l.b16 %v2391
      %v2431 = vunpack.c.l.b16 %v2392
      %v2432 = vpack.c.b16 %v2417, %v2416
      %v2433 = vpack.c.b16 %v2419, %v2418
      %v2434 = vpack.c.b16 %v2421, %v2420
      %v2435 = vpack.c.b16 %v2423, %v2422
      %v2436 = vpack.c.b16 %v2425, %v2424
      %v2437 = vpack.c.b16 %v2427, %v2426
      %v2438 = vpack.c.b16 %v2429, %v2428
      %v2439 = vpack.c.b16 %v2431, %v2430
      %2448 = vmatprep.subr.bf16.mxu0 0
      %2449 = vmatpush1.bf16.msra.mxu0 %v2432
      %2450 = vmatprep.subr.bf16.mxu0 0
      %2451 = vmatpush1.bf16.msra.mxu0 %v2433
      %2452 = vmatprep.subr.bf16.mxu0 0
      %2453 = vmatpush1.bf16.msra.mxu0 %v2434
      %2454 = vmatprep.subr.bf16.mxu0 0
      %2455 = vmatpush1.bf16.msra.mxu0 %v2435
      %2456 = vmatprep.subr.bf16.mxu0 0
      %2457 = vmatpush1.bf16.msra.mxu0 %v2436
      %2458 = vmatprep.subr.bf16.mxu0 0
      %2459 = vmatpush1.bf16.msra.mxu0 %v2437
      %2460 = vmatprep.subr.bf16.mxu0 0
      %2461 = vmatpush1.bf16.msra.mxu0 %v2438
      %2462 = vmatprep.subr.bf16.mxu0 0
      %2463 = vmatpush1.bf16.msra.mxu0 %v2439
      %2464 = vmatprep.subr.bf16.mxu0 0
      %2465 = vmatpush1.bf16.msra.mxu0 0
      %2466 = vmatprep.subr.bf16.mxu0 0
      %2467 = vmatpush1.bf16.msra.mxu0 0
      %2468 = vmatprep.subr.bf16.mxu0 0
      %2469 = vmatpush1.bf16.msra.mxu0 0
      %2470 = vmatprep.subr.bf16.mxu0 0
      %2471 = vmatpush1.bf16.msra.mxu0 0
      %2472 = vmatprep.subr.bf16.mxu0 0
      %2473 = vmatpush1.bf16.msra.mxu0 0
      %2474 = vmatprep.subr.bf16.mxu0 0
      %2475 = vmatpush1.bf16.msra.mxu0 0
      %2476 = vmatprep.subr.bf16.mxu0 0
      %2477 = vmatpush1.bf16.msra.mxu0 0
      %2478 = vmatprep.subr.bf16.mxu0 0
      %2479 = vmatpush1.bf16.msra.mxu0 0
      %2480 = vmatprep.mubr.bf16.mxu0 0
      %2481 = vmatmul.mubr.bf16.gmra.mrb[0].mxu0 %v2296
      %v2482 = vpop.f32.mrb[0].mxu0
      %v2483 = vadd.f32 %v2398, %v2482
      %v2484 = vpop.f32.mrb[0].mxu0
      %v2485 = vpop.f32.mrb[0].mxu0
      %v2486 = vadd.f32 %v2398, %v2485
      %v2487 = vpop.f32.mrb[0].mxu0
      %2488 = vmatprep.mubr.bf16.mxu0 0
      %2489 = vmatmul.mubr.bf16.gmra.mrb[0].mxu0 %v2297
      %v2490 = vpop.f32.mrb[0].mxu0
      %v2491 = vadd.f32 %v2398, %v2490
      %v2492 = vpop.f32.mrb[0].mxu0
      %v2493 = vpop.f32.mrb[0].mxu0
      %v2494 = vadd.f32 %v2398, %v2493
      %v2495 = vpop.f32.mrb[0].mxu0
      %2496 = vmatprep.mubr.bf16.mxu0 0
      %2497 = vmatmul.mubr.bf16.gmra.mrb[0].mxu0 %v2298
      %v2498 = vpop.f32.mrb[0].mxu0
      %v2499 = vadd.f32 %v2398, %v2498
      %v2500 = vpop.f32.mrb[0].mxu0
      %v2501 = vpop.f32.mrb[0].mxu0
      %v2502 = vadd.f32 %v2398, %v2501
      %v2503 = vpop.f32.mrb[0].mxu0
      %2504 = vmatprep.mubr.bf16.mxu0 0
      %2505 = vmatmul.mubr.bf16.gmra.mrb[0].mxu0 %v2299
      %v2506 = vpop.f32.mrb[0].mxu0
      %v2507 = vadd.f32 %v2398, %v2506
      %v2508 = vpop.f32.mrb[0].mxu0
      %v2509 = vpop.f32.mrb[0].mxu0
      %v2510 = vadd.f32 %v2398, %v2509
      %v2511 = vpop.f32.mrb[0].mxu0
      %2512 = vmatprep.mubr.bf16.mxu0 0
      %2513 = vmatmul.mubr.bf16.gmra.mrb[0].mxu0 %v2300
      %v2514 = vpop.f32.mrb[0].mxu0
      %v2515 = vadd.f32 %v2398, %v2514
      %v2516 = vpop.f32.mrb[0].mxu0
      %v2517 = vpop.f32.mrb[0].mxu0
      %v2518 = vadd.f32 %v2398, %v2517
      %v2519 = vpop.f32.mrb[0].mxu0
      %2520 = vmatprep.mubr.bf16.mxu0 0
      %2521 = vmatmul.mubr.bf16.gmra.mrb[0].mxu0 %v2301
      %v2522 = vpop.f32.mrb[0].mxu0
      %v2523 = vadd.f32 %v2398, %v2522
      %v2524 = vpop.f32.mrb[0].mxu0
      %v2525 = vpop.f32.mrb[0].mxu0
      %v2526 = vadd.f32 %v2398, %v2525
      %v2527 = vpop.f32.mrb[0].mxu0
      %2528 = vmatprep.mubr.bf16.mxu0 0
      %2529 = vmatmul.mubr.bf16.gmra.mrb[0].mxu0 %v2302
      %v2530 = vpop.f32.mrb[0].mxu0
      %v2531 = vadd.f32 %v2398, %v2530
      %v2532 = vpop.f32.mrb[0].mxu0
      %v2533 = vpop.f32.mrb[0].mxu0
      %v2534 = vadd.f32 %v2398, %v2533
      %v2535 = vpop.f32.mrb[0].mxu0
      %2536 = vmatprep.mubr.bf16.mxu0 0
      %2537 = vmatmul.mubr.bf16.gmra.mrb[0].mxu0 %v2303
      %v2538 = vpop.f32.mrb[0].mxu0
      %v2539 = vadd.f32 %v2398, %v2538
      %v2540 = vpop.f32.mrb[0].mxu0
      %v2541 = vpop.f32.mrb[0].mxu0
      %v2542 = vadd.f32 %v2398, %v2541
      %v2543 = vpop.f32.mrb[0].mxu0
      %2544 = vdwg.mxu0
      %v2545 = vmax.f32 %v2483, 0.0
      %v2546 = vmax.f32 %v2486, 0.0
      %v2547 = vmax.f32 %v2491, 0.0
      %v2548 = vmax.f32 %v2494, 0.0
      %v2549 = vmax.f32 %v2499, 0.0
      %v2550 = vmax.f32 %v2502, 0.0
      %v2551 = vmax.f32 %v2507, 0.0
      %v2552 = vmax.f32 %v2510, 0.0
      %v2553 = vmax.f32 %v2515, 0.0
      %v2554 = vmax.f32 %v2518, 0.0
      %v2555 = vmax.f32 %v2523, 0.0
      %v2556 = vmax.f32 %v2526, 0.0
      %v2557 = vmax.f32 %v2531, 0.0
      %v2558 = vmax.f32 %v2534, 0.0
      %v2559 = vmax.f32 %v2539, 0.0
      %v2560 = vmax.f32 %v2542, 0.0
      %v2561 = vpack.c.bf16 %v2546, %v2545
      %v2562 = vpack.c.bf16 %v2548, %v2547
      %v2563 = vpack.c.bf16 %v2550, %v2549
      %v2564 = vpack.c.bf16 %v2552, %v2551
      %v2565 = vpack.c.bf16 %v2554, %v2553
      %v2566 = vpack.c.bf16 %v2556, %v2555
      %v2567 = vpack.c.bf16 %v2558, %v2557
      %v2568 = vpack.c.bf16 %v2560, %v2559
      %v2569 = vld [vmem:[%s11] sm:$0xf]
      %v2570 = vld [vmem:[%s11 + $0x4] sm:$0x3]
      %v2571 = vld [vmem:[%s12] sm:$0x1]
      %v2573 = vlaneseq
      %v2574 = vshrl.u32 %v2573, 7
      %v2575 = vsub.s32 0, %v2574
      %v2576 = vrot.slane %v2571, %v2575
      %v2580 = vunpack.c.l.b16 %v2569
      %v2581 = vunpack.c.l.b16 %v2570
      %v2582 = vpack.c.b16 %v2581, %v2580
      %v2584 = vsel %vm2170, %v2561, 0
      %v2587 = vsel %vm2170, %v2562, 0
      %v2590 = vsel %vm2170, %v2563, 0
      %v2593 = vsel %vm2170, %v2564, 0
      %v2596 = vsel %vm2170, %v2565, 0
      %v2599 = vsel %vm2170, %v2566, 0
      %v2602 = vsel %vm2170, %v2567, 0
      %v2605 = vsel %vm2170, %v2568, 0
      %v2608 = vsel %vm2195, %v2582, 0
      %2610 = vmatprep.subr.bf16.mxu0 0
      %2611 = vmatpush1.bf16.msra.mxu0 %v2608
      %2612 = vmatprep.subr.bf16.mxu0 0
      %2613 = vmatpush1.bf16.msra.mxu0 0
      %2614 = vmatprep.subr.bf16.mxu0 0
      %2615 = vmatpush1.bf16.msra.mxu0 0
      %2616 = vmatprep.subr.bf16.mxu0 0
      %2617 = vmatpush1.bf16.msra.mxu0 0
      %2618 = vmatprep.subr.bf16.mxu0 0
      %2619 = vmatpush1.bf16.msra.mxu0 0
      %2620 = vmatprep.subr.bf16.mxu0 0
      %2621 = vmatpush1.bf16.msra.mxu0 0
      %2622 = vmatprep.subr.bf16.mxu0 0
      %2623 = vmatpush1.bf16.msra.mxu0 0
      %2624 = vmatprep.subr.bf16.mxu0 0
      %2625 = vmatpush1.bf16.msra.mxu0 0
      %2626 = vmatprep.subr.bf16.mxu0 0
      %2627 = vmatpush1.bf16.msra.mxu0 0
      %2628 = vmatprep.subr.bf16.mxu0 0
      %2629 = vmatpush1.bf16.msra.mxu0 0
      %2630 = vmatprep.subr.bf16.mxu0 0
      %2631 = vmatpush1.bf16.msra.mxu0 0
      %2632 = vmatprep.subr.bf16.mxu0 0
      %2633 = vmatpush1.bf16.msra.mxu0 0
      %2634 = vmatprep.subr.bf16.mxu0 0
      %2635 = vmatpush1.bf16.msra.mxu0 0
      %2636 = vmatprep.subr.bf16.mxu0 0
      %2637 = vmatpush1.bf16.msra.mxu0 0
      %2638 = vmatprep.subr.bf16.mxu0 0
      %2639 = vmatpush1.bf16.msra.mxu0 0
      %2640 = vmatprep.subr.bf16.mxu0 0
      %2641 = vmatpush1.bf16.msra.mxu0 0
      %2642 = vmatprep.mubr.bf16.mxu0 0
      %2643 = vmatmul.mubr.bf16.gmra.mrb[0].mxu0 %v2584
      %v2644 = vpop.f32.mrb[0].mxu0
      %v2645 = vadd.f32 %v2576, %v2644
      %v2646 = vpop.f32.mrb[0].mxu0
      %v2647 = vpop.f32.mrb[0].mxu0
      %v2648 = vadd.f32 %v2576, %v2647
      %v2649 = vpop.f32.mrb[0].mxu0
      %2650 = vmatprep.mubr.bf16.mxu0 0
      %2651 = vmatmul.mubr.bf16.gmra.mrb[0].mxu0 %v2587
      %v2652 = vpop.f32.mrb[0].mxu0
      %v2653 = vadd.f32 %v2576, %v2652
      %v2654 = vpop.f32.mrb[0].mxu0
      %v2655 = vpop.f32.mrb[0].mxu0
      %v2656 = vadd.f32 %v2576, %v2655
      %v2657 = vpop.f32.mrb[0].mxu0
      %2658 = vmatprep.mubr.bf16.mxu0 0
      %2659 = vmatmul.mubr.bf16.gmra.mrb[0].mxu0 %v2590
      %v2660 = vpop.f32.mrb[0].mxu0
      %v2661 = vadd.f32 %v2576, %v2660
      %v2662 = vpop.f32.mrb[0].mxu0
      %v2663 = vpop.f32.mrb[0].mxu0
      %v2664 = vadd.f32 %v2576, %v2663
      %v2665 = vpop.f32.mrb[0].mxu0
      %2666 = vmatprep.mubr.bf16.mxu0 0
      %2667 = vmatmul.mubr.bf16.gmra.mrb[0].mxu0 %v2593
      %v2668 = vpop.f32.mrb[0].mxu0
      %v2669 = vadd.f32 %v2576, %v2668
      %v2670 = vpop.f32.mrb[0].mxu0
      %v2671 = vpop.f32.mrb[0].mxu0
      %v2672 = vadd.f32 %v2576, %v2671
      %v2673 = vpop.f32.mrb[0].mxu0
      %2674 = vmatprep.mubr.bf16.mxu0 0
      %2675 = vmatmul.mubr.bf16.gmra.mrb[0].mxu0 %v2596
      %v2676 = vpop.f32.mrb[0].mxu0
      %v2677 = vadd.f32 %v2576, %v2676
      %v2678 = vpop.f32.mrb[0].mxu0
      %v2679 = vpop.f32.mrb[0].mxu0
      %v2680 = vadd.f32 %v2576, %v2679
      %v2681 = vpop.f32.mrb[0].mxu0
      %2682 = vmatprep.mubr.bf16.mxu0 0
      %2683 = vmatmul.mubr.bf16.gmra.mrb[0].mxu0 %v2599
      %v2684 = vpop.f32.mrb[0].mxu0
      %v2685 = vadd.f32 %v2576, %v2684
      %v2686 = vpop.f32.mrb[0].mxu0
      %v2687 = vpop.f32.mrb[0].mxu0
      %v2688 = vadd.f32 %v2576, %v2687
      %v2689 = vpop.f32.mrb[0].mxu0
      %2690 = vmatprep.mubr.bf16.mxu0 0
      %2691 = vmatmul.mubr.bf16.gmra.mrb[0].mxu0 %v2602
      %v2692 = vpop.f32.mrb[0].mxu0
      %v2693 = vadd.f32 %v2576, %v2692
      %v2694 = vpop.f32.mrb[0].mxu0
      %v2695 = vpop.f32.mrb[0].mxu0
      %v2696 = vadd.f32 %v2576, %v2695
      %v2697 = vpop.f32.mrb[0].mxu0
      %2698 = vmatprep.mubr.bf16.mxu0 0
      %2699 = vmatmul.mubr.bf16.gmra.mrb[0].mxu0 %v2605
      %v2700 = vpop.f32.mrb[0].mxu0
      %v2701 = vadd.f32 %v2576, %v2700
      %v2702 = vpop.f32.mrb[0].mxu0
      %v2703 = vpop.f32.mrb[0].mxu0
      %v2704 = vadd.f32 %v2576, %v2703
      %v2705 = vpop.f32.mrb[0].mxu0
      %2706 = vdwg.mxu0
      %v2707 = vmax.f32 %v2645, 0.0
      %v2708 = vmax.f32 %v2648, 0.0
      %v2709 = vmax.f32 %v2653, 0.0
      %v2710 = vmax.f32 %v2656, 0.0
      %v2711 = vmax.f32 %v2661, 0.0
      %v2712 = vmax.f32 %v2664, 0.0
      %v2713 = vmax.f32 %v2669, 0.0
      %v2714 = vmax.f32 %v2672, 0.0
      %v2715 = vmax.f32 %v2677, 0.0
      %v2716 = vmax.f32 %v2680, 0.0
      %v2717 = vmax.f32 %v2685, 0.0
      %v2718 = vmax.f32 %v2688, 0.0
      %v2719 = vmax.f32 %v2693, 0.0
      %v2720 = vmax.f32 %v2696, 0.0
      %v2721 = vmax.f32 %v2701, 0.0
      %v2722 = vmax.f32 %v2704, 0.0
      %v2723 = vpack.c.bf16 %v2708, %v2707
      %v2724 = vpack.c.bf16 %v2710, %v2709
      %v2725 = vpack.c.bf16 %v2712, %v2711
      %v2726 = vpack.c.bf16 %v2714, %v2713
      %v2727 = vpack.c.bf16 %v2716, %v2715
      %v2728 = vpack.c.bf16 %v2718, %v2717
      %v2729 = vpack.c.bf16 %v2720, %v2719
      %v2730 = vpack.c.bf16 %v2722, %v2721
      %v2731 = vld [vmem:[%s13] sm:$0xf]
      %v2732 = vld [vmem:[%s13 + $0x4] sm:$0xf]
      %v2733 = vld [vmem:[%s13 + $0x8] sm:$0xf]
      %v2734 = vld [vmem:[%s13 + $0xc] sm:$0xf]
      %v2735 = vld [vmem:[%s13 + $0x10] sm:$0xf]
      %v2736 = vld [vmem:[%s13 + $0x14] sm:$0xf]
      %v2737 = vld [vmem:[%s13 + $0x18] sm:$0xf]
      %v2738 = vld [vmem:[%s13 + $0x1c] sm:$0xf]
      %v2739 = vld [vmem:[%s14] sm:$0x1]
      %v2741 = vlaneseq
      %v2742 = vshrl.u32 %v2741, 7
      %v2743 = vsub.s32 0, %v2742
      %v2744 = vrot.slane %v2739, %v2743
      %v2754 = vunpack.c.l.b16 %v2731
      %v2755 = vunpack.c.l.b16 %v2732
      %v2756 = vunpack.c.l.b16 %v2733
      %v2757 = vunpack.c.l.b16 %v2734
      %v2758 = vunpack.c.l.b16 %v2735
      %v2759 = vunpack.c.l.b16 %v2736
      %v2760 = vunpack.c.l.b16 %v2737
      %v2761 = vunpack.c.l.b16 %v2738
      %v2762 = vpack.c.b16 %v2755, %v2754
      %v2763 = vpack.c.b16 %v2757, %v2756
      %v2764 = vpack.c.b16 %v2759, %v2758
      %v2765 = vpack.c.b16 %v2761, %v2760
      %v2771 = vsel %vm2010, %v2723, 0
      %v2774 = vsel %vm2010, %v2724, 0
      %v2777 = vsel %vm2010, %v2725, 0
      %v2780 = vsel %vm2010, %v2726, 0
      %v2783 = vsel %vm2010, %v2727, 0
      %v2786 = vsel %vm2010, %v2728, 0
      %v2789 = vsel %vm2010, %v2729, 0
      %v2792 = vsel %vm2010, %v2730, 0
      %2794 = vmatprep.subr.bf16.mxu0 0
      %2795 = vmatpush1.bf16.msra.mxu0 %v2762
      %2796 = vmatprep.subr.bf16.mxu0 0
      %2797 = vmatpush1.bf16.msra.mxu0 %v2763
      %2798 = vmatprep.subr.bf16.mxu0 0
      %2799 = vmatpush1.bf16.msra.mxu0 %v2764
      %2800 = vmatprep.subr.bf16.mxu0 0
      %2801 = vmatpush1.bf16.msra.mxu0 %v2765
      %2802 = vmatprep.subr.bf16.mxu0 0
      %2803 = vmatpush1.bf16.msra.mxu0 0
      %2804 = vmatprep.subr.bf16.mxu0 0
      %2805 = vmatpush1.bf16.msra.mxu0 0
      %2806 = vmatprep.subr.bf16.mxu0 0
      %2807 = vmatpush1.bf16.msra.mxu0 0
      %2808 = vmatprep.subr.bf16.mxu0 0
      %2809 = vmatpush1.bf16.msra.mxu0 0
      %2810 = vmatprep.subr.bf16.mxu0 0
      %2811 = vmatpush1.bf16.msra.mxu0 0
      %2812 = vmatprep.subr.bf16.mxu0 0
      %2813 = vmatpush1.bf16.msra.mxu0 0
      %2814 = vmatprep.subr.bf16.mxu0 0
      %2815 = vmatpush1.bf16.msra.mxu0 0
      %2816 = vmatprep.subr.bf16.mxu0 0
      %2817 = vmatpush1.bf16.msra.mxu0 0
      %2818 = vmatprep.subr.bf16.mxu0 0
      %2819 = vmatpush1.bf16.msra.mxu0 0
      %2820 = vmatprep.subr.bf16.mxu0 0
      %2821 = vmatpush1.bf16.msra.mxu0 0
      %2822 = vmatprep.subr.bf16.mxu0 0
      %2823 = vmatpush1.bf16.msra.mxu0 0
      %2824 = vmatprep.subr.bf16.mxu0 0
      %2825 = vmatpush1.bf16.msra.mxu0 0
      %2826 = vmatprep.mubr.bf16.mxu0 0
      %2827 = vmatmul.mubr.bf16.gmra.mrb[0].mxu0 %v2771
      %v2828 = vpop.f32.mrb[0].mxu0
      %v2829 = vadd.f32 %v2744, %v2828
      %v2830 = vpop.f32.mrb[0].mxu0
      %v2831 = vpop.f32.mrb[0].mxu0
      %v2832 = vadd.f32 %v2744, %v2831
      %v2833 = vpop.f32.mrb[0].mxu0
      %2834 = vmatprep.mubr.bf16.mxu0 0
      %2835 = vmatmul.mubr.bf16.gmra.mrb[0].mxu0 %v2774
      %v2836 = vpop.f32.mrb[0].mxu0
      %v2837 = vadd.f32 %v2744, %v2836
      %v2838 = vpop.f32.mrb[0].mxu0
      %v2839 = vpop.f32.mrb[0].mxu0
      %v2840 = vadd.f32 %v2744, %v2839
      %v2841 = vpop.f32.mrb[0].mxu0
      %2842 = vmatprep.mubr.bf16.mxu0 0
      %2843 = vmatmul.mubr.bf16.gmra.mrb[0].mxu0 %v2777
      %v2844 = vpop.f32.mrb[0].mxu0
      %v2845 = vadd.f32 %v2744, %v2844
      %v2846 = vpop.f32.mrb[0].mxu0
      %v2847 = vpop.f32.mrb[0].mxu0
      %v2848 = vadd.f32 %v2744, %v2847
      %v2849 = vpop.f32.mrb[0].mxu0
      %2850 = vmatprep.mubr.bf16.mxu0 0
      %2851 = vmatmul.mubr.bf16.gmra.mrb[0].mxu0 %v2780
      %v2852 = vpop.f32.mrb[0].mxu0
      %v2853 = vadd.f32 %v2744, %v2852
      %v2854 = vpop.f32.mrb[0].mxu0
      %v2855 = vpop.f32.mrb[0].mxu0
      %v2856 = vadd.f32 %v2744, %v2855
      %v2857 = vpop.f32.mrb[0].mxu0
      %2858 = vmatprep.mubr.bf16.mxu0 0
      %2859 = vmatmul.mubr.bf16.gmra.mrb[0].mxu0 %v2783
      %v2860 = vpop.f32.mrb[0].mxu0
      %v2861 = vadd.f32 %v2744, %v2860
      %v2862 = vpop.f32.mrb[0].mxu0
      %v2863 = vpop.f32.mrb[0].mxu0
      %v2864 = vadd.f32 %v2744, %v2863
      %v2865 = vpop.f32.mrb[0].mxu0
      %2866 = vmatprep.mubr.bf16.mxu0 0
      %2867 = vmatmul.mubr.bf16.gmra.mrb[0].mxu0 %v2786
      %v2868 = vpop.f32.mrb[0].mxu0
      %v2869 = vadd.f32 %v2744, %v2868
      %v2870 = vpop.f32.mrb[0].mxu0
      %v2871 = vpop.f32.mrb[0].mxu0
      %v2872 = vadd.f32 %v2744, %v2871
      %v2873 = vpop.f32.mrb[0].mxu0
      %2874 = vmatprep.mubr.bf16.mxu0 0
      %2875 = vmatmul.mubr.bf16.gmra.mrb[0].mxu0 %v2789
      %v2876 = vpop.f32.mrb[0].mxu0
      %v2877 = vadd.f32 %v2744, %v2876
      %v2878 = vpop.f32.mrb[0].mxu0
      %v2879 = vpop.f32.mrb[0].mxu0
      %v2880 = vadd.f32 %v2744, %v2879
      %v2881 = vpop.f32.mrb[0].mxu0
      %2882 = vmatprep.mubr.bf16.mxu0 0
      %2883 = vmatmul.mubr.bf16.gmra.mrb[0].mxu0 %v2792
      %v2884 = vpop.f32.mrb[0].mxu0
      %v2885 = vadd.f32 %v2744, %v2884
      %v2886 = vpop.f32.mrb[0].mxu0
      %v2887 = vpop.f32.mrb[0].mxu0
      %v2888 = vadd.f32 %v2744, %v2887
      %v2889 = vpop.f32.mrb[0].mxu0
      %2890 = vdwg.mxu0
      %v2891 = vmax.f32 %v2829, 0.0
      %v2892 = vmax.f32 %v2832, 0.0
      %v2893 = vmax.f32 %v2837, 0.0
      %v2894 = vmax.f32 %v2840, 0.0
      %v2895 = vmax.f32 %v2845, 0.0
      %v2896 = vmax.f32 %v2848, 0.0
      %v2897 = vmax.f32 %v2853, 0.0
      %v2898 = vmax.f32 %v2856, 0.0
      %v2899 = vmax.f32 %v2861, 0.0
      %v2900 = vmax.f32 %v2864, 0.0
      %v2901 = vmax.f32 %v2869, 0.0
      %v2902 = vmax.f32 %v2872, 0.0
      %v2903 = vmax.f32 %v2877, 0.0
      %v2904 = vmax.f32 %v2880, 0.0
      %v2905 = vmax.f32 %v2885, 0.0
      %v2906 = vmax.f32 %v2888, 0.0
      %v2907 = vpack.c.bf16 %v2892, %v2891
      %v2908 = vpack.c.bf16 %v2894, %v2893
      %v2909 = vpack.c.bf16 %v2896, %v2895
      %v2910 = vpack.c.bf16 %v2898, %v2897
      %v2911 = vpack.c.bf16 %v2900, %v2899
      %v2912 = vpack.c.bf16 %v2902, %v2901
      %v2913 = vpack.c.bf16 %v2904, %v2903
      %v2914 = vpack.c.bf16 %v2906, %v2905
      %v2915 = vld [vmem:[%s15] sm:$0xff]
      %v2916 = vld [vmem:[%s15 + $0x8] sm:$0xff]
      %v2917 = vld [vmem:[%s15 + $0x10] sm:$0xff]
      %v2918 = vld [vmem:[%s15 + $0x18] sm:$0xf]
      %v2919 = vld [vmem:[%s15 + $0x1c] sm:$0xff]
      %v2920 = vld [vmem:[%s15 + $0x24] sm:$0xff]
      %v2921 = vld [vmem:[%s15 + $0x2c] sm:$0xff]
      %v2922 = vld [vmem:[%s15 + $0x34] sm:$0xf]
      %v2923 = vld [vmem:[%s15 + $0x38] sm:$0xff]
      %v2924 = vld [vmem:[%s15 + $0x40] sm:$0xff]
      %v2925 = vld [vmem:[%s15 + $0x48] sm:$0xff]
      %v2926 = vld [vmem:[%s15 + $0x50] sm:$0xf]
      %v2927 = vld [vmem:[%s15 + $0x54] sm:$0xff]
      %v2928 = vld [vmem:[%s15 + $0x5c] sm:$0xff]
      %v2929 = vld [vmem:[%s15 + $0x64] sm:$0xff]
      %v2930 = vld [vmem:[%s15 + $0x6c] sm:$0xf]
      %v2931 = vld [vmem:[%s15 + $0x70] sm:$0xff]
      %v2932 = vld [vmem:[%s15 + $0x78] sm:$0xff]
      %v2933 = vld [vmem:[%s15 + $0x80] sm:$0xff]
      %v2934 = vld [vmem:[%s15 + $0x88] sm:$0xf]
      %v2935 = vld [vmem:[%s15 + $0x8c] sm:$0xff]
      %v2936 = vld [vmem:[%s15 + $0x94] sm:$0xff]
      %v2937 = vld [vmem:[%s15 + $0x9c] sm:$0xff]
      %v2938 = vld [vmem:[%s15 + $0xa4] sm:$0xf]
      %v2939 = vld [vmem:[%s15 + $0xa8] sm:$0xff]
      %v2940 = vld [vmem:[%s15 + $0xb0] sm:$0xff]
      %v2941 = vld [vmem:[%s15 + $0xb8] sm:$0xff]
      %v2942 = vld [vmem:[%s15 + $0xc0] sm:$0xf]
      %v2943 = vld [vmem:[%s15 + $0xc4] sm:$0xff]
      %v2944 = vld [vmem:[%s15 + $0xcc] sm:$0xff]
      %v2945 = vld [vmem:[%s15 + $0xd4] sm:$0xff]
      %v2946 = vld [vmem:[%s15 + $0xdc] sm:$0xf]
      %v2947 = vld [vmem:[%s15 + $0xe0] sm:$0xff]
      %v2948 = vld [vmem:[%s15 + $0xe8] sm:$0xff]
      %v2949 = vld [vmem:[%s15 + $0xf0] sm:$0xff]
      %v2950 = vld [vmem:[%s15 + $0xf8] sm:$0xf]
      %v2951 = vld [vmem:[%s15 + $0xfc] sm:$0xff]
      %v2952 = vld [vmem:[%s15 + $0x104] sm:$0xff]
      %v2953 = vld [vmem:[%s15 + $0x10c] sm:$0xff]
      %v2954 = vld [vmem:[%s15 + $0x114] sm:$0xf]
      %v2955 = vld [vmem:[%s15 + $0x118] sm:$0xff]
      %v2956 = vld [vmem:[%s15 + $0x120] sm:$0xff]
      %v2957 = vld [vmem:[%s15 + $0x128] sm:$0xff]
      %v2958 = vld [vmem:[%s15 + $0x130] sm:$0xf]
      %v2959 = vld [vmem:[%s15 + $0x134] sm:$0xff]
      %v2960 = vld [vmem:[%s15 + $0x13c] sm:$0xff]
      %v2961 = vld [vmem:[%s15 + $0x144] sm:$0xff]
      %v2962 = vld [vmem:[%s15 + $0x14c] sm:$0xf]
      %v2963 = vld [vmem:[%s15 + $0x150] sm:$0xff]
      %v2964 = vld [vmem:[%s15 + $0x158] sm:$0xff]
      %v2965 = vld [vmem:[%s15 + $0x160] sm:$0xff]
      %v2966 = vld [vmem:[%s15 + $0x168] sm:$0xf]
      %v2967 = vld [vmem:[%s15 + $0x16c] sm:$0xff]
      %v2968 = vld [vmem:[%s15 + $0x174] sm:$0xff]
      %v2969 = vld [vmem:[%s15 + $0x17c] sm:$0xff]
      %v2970 = vld [vmem:[%s15 + $0x184] sm:$0xf]
      %v2971 = vld [vmem:[%s15 + $0x188] sm:$0xff]
      %v2972 = vld [vmem:[%s15 + $0x190] sm:$0xff]
      %v2973 = vld [vmem:[%s15 + $0x198] sm:$0xff]
      %v2974 = vld [vmem:[%s15 + $0x1a0] sm:$0xf]
      %v2975 = vld [vmem:[%s15 + $0x1a4] sm:$0xff]
      %v2976 = vld [vmem:[%s15 + $0x1ac] sm:$0xff]
      %v2977 = vld [vmem:[%s15 + $0x1b4] sm:$0xff]
      %v2978 = vld [vmem:[%s15 + $0x1bc] sm:$0xf]
      %v2979 = vld [vmem:[%s16] sm:$0x7f]
      %v2981 = vlaneseq
      %v2982 = vshrl.u32 %v2981, 7
      %v2983 = vsub.s32 0, %v2982
      %v2984 = vrot.slane %v2979, %v2983
      %v2985 = vlaneseq
      %v2986 = vshrl.u32 %v2985, 7
      %v2987 = vsub.s32 1, %v2986
      %v2988 = vrot.slane %v2979, %v2987
      %v2989 = vlaneseq
      %v2990 = vshrl.u32 %v2989, 7
      %v2991 = vsub.s32 2, %v2990
      %v2992 = vrot.slane %v2979, %v2991
      %v2993 = vlaneseq
      %v2994 = vshrl.u32 %v2993, 7
      %v2995 = vsub.s32 3, %v2994
      %v2996 = vrot.slane %v2979, %v2995
      %v2997 = vlaneseq
      %v2998 = vshrl.u32 %v2997, 7
      %v2999 = vsub.s32 4, %v2998
      %v3000 = vrot.slane %v2979, %v2999
      %v3001 = vlaneseq
      %v3002 = vshrl.u32 %v3001, 7
      %v3003 = vsub.s32 5, %v3002
      %v3004 = vrot.slane %v2979, %v3003
      %v3005 = vlaneseq
      %v3006 = vshrl.u32 %v3005, 7
      %v3007 = vsub.s32 6, %v3006
      %v3008 = vrot.slane %v2979, %v3007
      %v3080 = vunpack.c.l.b16 %v2915
      %v3081 = vunpack.c.h.b16 %v2915
      %v3082 = vunpack.c.l.b16 %v2916
      %v3083 = vunpack.c.h.b16 %v2916
      %v3084 = vunpack.c.l.b16 %v2917
      %v3085 = vunpack.c.h.b16 %v2917
      %v3086 = vunpack.c.l.b16 %v2918
      %v3087 = vunpack.c.l.b16 %v2919
      %v3088 = vunpack.c.h.b16 %v2919
      %v3089 = vunpack.c.l.b16 %v2920
      %v3090 = vunpack.c.h.b16 %v2920
      %v3091 = vunpack.c.l.b16 %v2921
      %v3092 = vunpack.c.h.b16 %v2921
      %v3093 = vunpack.c.l.b16 %v2922
      %v3094 = vunpack.c.l.b16 %v2923
      %v3095 = vunpack.c.h.b16 %v2923
      %v3096 = vunpack.c.l.b16 %v2924
      %v3097 = vunpack.c.h.b16 %v2924
      %v3098 = vunpack.c.l.b16 %v2925
      %v3099 = vunpack.c.h.b16 %v2925
      %v3100 = vunpack.c.l.b16 %v2926
      %v3101 = vunpack.c.l.b16 %v2927
      %v3102 = vunpack.c.h.b16 %v2927
      %v3103 = vunpack.c.l.b16 %v2928
      %v3104 = vunpack.c.h.b16 %v2928
      %v3105 = vunpack.c.l.b16 %v2929
      %v3106 = vunpack.c.h.b16 %v2929
      %v3107 = vunpack.c.l.b16 %v2930
      %v3108 = vunpack.c.l.b16 %v2931
      %v3109 = vunpack.c.h.b16 %v2931
      %v3110 = vunpack.c.l.b16 %v2932
      %v3111 = vunpack.c.h.b16 %v2932
      %v3112 = vunpack.c.l.b16 %v2933
      %v3113 = vunpack.c.h.b16 %v2933
      %v3114 = vunpack.c.l.b16 %v2934
      %v3115 = vunpack.c.l.b16 %v2935
      %v3116 = vunpack.c.h.b16 %v2935
      %v3117 = vunpack.c.l.b16 %v2936
      %v3118 = vunpack.c.h.b16 %v2936
      %v3119 = vunpack.c.l.b16 %v2937
      %v3120 = vunpack.c.h.b16 %v2937
      %v3121 = vunpack.c.l.b16 %v2938
      %v3122 = vunpack.c.l.b16 %v2939
      %v3123 = vunpack.c.h.b16 %v2939
      %v3124 = vunpack.c.l.b16 %v2940
      %v3125 = vunpack.c.h.b16 %v2940
      %v3126 = vunpack.c.l.b16 %v2941
      %v3127 = vunpack.c.h.b16 %v2941
      %v3128 = vunpack.c.l.b16 %v2942
      %v3129 = vunpack.c.l.b16 %v2943
      %v3130 = vunpack.c.h.b16 %v2943
      %v3131 = vunpack.c.l.b16 %v2944
      %v3132 = vunpack.c.h.b16 %v2944
      %v3133 = vunpack.c.l.b16 %v2945
      %v3134 = vunpack.c.h.b16 %v2945
      %v3135 = vunpack.c.l.b16 %v2946
      %v3136 = vunpack.c.l.b16 %v2947
      %v3137 = vunpack.c.h.b16 %v2947
      %v3138 = vunpack.c.l.b16 %v2948
      %v3139 = vunpack.c.h.b16 %v2948
      %v3140 = vunpack.c.l.b16 %v2949
      %v3141 = vunpack.c.h.b16 %v2949
      %v3142 = vunpack.c.l.b16 %v2950
      %v3143 = vunpack.c.l.b16 %v2951
      %v3144 = vunpack.c.h.b16 %v2951
      %v3145 = vunpack.c.l.b16 %v2952
      %v3146 = vunpack.c.h.b16 %v2952
      %v3147 = vunpack.c.l.b16 %v2953
      %v3148 = vunpack.c.h.b16 %v2953
      %v3149 = vunpack.c.l.b16 %v2954
      %v3150 = vunpack.c.l.b16 %v2955
      %v3151 = vunpack.c.h.b16 %v2955
      %v3152 = vunpack.c.l.b16 %v2956
      %v3153 = vunpack.c.h.b16 %v2956
      %v3154 = vunpack.c.l.b16 %v2957
      %v3155 = vunpack.c.h.b16 %v2957
      %v3156 = vunpack.c.l.b16 %v2958
      %v3157 = vunpack.c.l.b16 %v2959
      %v3158 = vunpack.c.h.b16 %v2959
      %v3159 = vunpack.c.l.b16 %v2960
      %v3160 = vunpack.c.h.b16 %v2960
      %v3161 = vunpack.c.l.b16 %v2961
      %v3162 = vunpack.c.h.b16 %v2961
      %v3163 = vunpack.c.l.b16 %v2962
      %v3164 = vunpack.c.l.b16 %v2963
      %v3165 = vunpack.c.h.b16 %v2963
      %v3166 = vunpack.c.l.b16 %v2964
      %v3167 = vunpack.c.h.b16 %v2964
      %v3168 = vunpack.c.l.b16 %v2965
      %v3169 = vunpack.c.h.b16 %v2965
      %v3170 = vunpack.c.l.b16 %v2966
      %v3171 = vunpack.c.l.b16 %v2967
      %v3172 = vunpack.c.h.b16 %v2967
      %v3173 = vunpack.c.l.b16 %v2968
      %v3174 = vunpack.c.h.b16 %v2968
      %v3175 = vunpack.c.l.b16 %v2969
      %v3176 = vunpack.c.h.b16 %v2969
      %v3177 = vunpack.c.l.b16 %v2970
      %v3178 = vunpack.c.l.b16 %v2971
      %v3179 = vunpack.c.h.b16 %v2971
      %v3180 = vunpack.c.l.b16 %v2972
      %v3181 = vunpack.c.h.b16 %v2972
      %v3182 = vunpack.c.l.b16 %v2973
      %v3183 = vunpack.c.h.b16 %v2973
      %v3184 = vunpack.c.l.b16 %v2974
      %v3185 = vunpack.c.l.b16 %v2975
      %v3186 = vunpack.c.h.b16 %v2975
      %v3187 = vunpack.c.l.b16 %v2976
      %v3188 = vunpack.c.h.b16 %v2976
      %v3189 = vunpack.c.l.b16 %v2977
      %v3190 = vunpack.c.h.b16 %v2977
      %v3191 = vunpack.c.l.b16 %v2978
      %v3192 = vpack.c.b16 %v3087, %v3080
      %v3193 = vpack.c.b16 %v3088, %v3081
      %v3194 = vpack.c.b16 %v3089, %v3082
      %v3195 = vpack.c.b16 %v3090, %v3083
      %v3196 = vpack.c.b16 %v3091, %v3084
      %v3197 = vpack.c.b16 %v3092, %v3085
      %v3198 = vpack.c.b16 %v3093, %v3086
      %v3199 = vpack.c.b16 %v3101, %v3094
      %v3200 = vpack.c.b16 %v3102, %v3095
      %v3201 = vpack.c.b16 %v3103, %v3096
      %v3202 = vpack.c.b16 %v3104, %v3097
      %v3203 = vpack.c.b16 %v3105, %v3098
      %v3204 = vpack.c.b16 %v3106, %v3099
      %v3205 = vpack.c.b16 %v3107, %v3100
      %v3206 = vpack.c.b16 %v3115, %v3108
      %v3207 = vpack.c.b16 %v3116, %v3109
      %v3208 = vpack.c.b16 %v3117, %v3110
      %v3209 = vpack.c.b16 %v3118, %v3111
      %v3210 = vpack.c.b16 %v3119, %v3112
      %v3211 = vpack.c.b16 %v3120, %v3113
      %v3212 = vpack.c.b16 %v3121, %v3114
      %v3213 = vpack.c.b16 %v3129, %v3122
      %v3214 = vpack.c.b16 %v3130, %v3123
      %v3215 = vpack.c.b16 %v3131, %v3124
      %v3216 = vpack.c.b16 %v3132, %v3125
      %v3217 = vpack.c.b16 %v3133, %v3126
      %v3218 = vpack.c.b16 %v3134, %v3127
      %v3219 = vpack.c.b16 %v3135, %v3128
      %v3220 = vpack.c.b16 %v3143, %v3136
      %v3221 = vpack.c.b16 %v3144, %v3137
      %v3222 = vpack.c.b16 %v3145, %v3138
      %v3223 = vpack.c.b16 %v3146, %v3139
      %v3224 = vpack.c.b16 %v3147, %v3140
      %v3225 = vpack.c.b16 %v3148, %v3141
      %v3226 = vpack.c.b16 %v3149, %v3142
      %v3227 = vpack.c.b16 %v3157, %v3150
      %v3228 = vpack.c.b16 %v3158, %v3151
      %v3229 = vpack.c.b16 %v3159, %v3152
      %v3230 = vpack.c.b16 %v3160, %v3153
      %v3231 = vpack.c.b16 %v3161, %v3154
      %v3232 = vpack.c.b16 %v3162, %v3155
      %v3233 = vpack.c.b16 %v3163, %v3156
      %v3234 = vpack.c.b16 %v3171, %v3164
      %v3235 = vpack.c.b16 %v3172, %v3165
      %v3236 = vpack.c.b16 %v3173, %v3166
      %v3237 = vpack.c.b16 %v3174, %v3167
      %v3238 = vpack.c.b16 %v3175, %v3168
      %v3239 = vpack.c.b16 %v3176, %v3169
      %v3240 = vpack.c.b16 %v3177, %v3170
      %v3241 = vpack.c.b16 %v3185, %v3178
      %v3242 = vpack.c.b16 %v3186, %v3179
      %v3243 = vpack.c.b16 %v3187, %v3180
      %v3244 = vpack.c.b16 %v3188, %v3181
      %v3245 = vpack.c.b16 %v3189, %v3182
      %v3246 = vpack.c.b16 %v3190, %v3183
      %v3247 = vpack.c.b16 %v3191, %v3184
      %3304 = vmatprep.subr.bf16.mxu0 %v3193
      %3305 = vmatpush1.bf16.msra.mxu0 %v3192
      %3306 = vmatprep.subr.bf16.mxu0 %v3200
      %3307 = vmatpush1.bf16.msra.mxu0 %v3199
      %3308 = vmatprep.subr.bf16.mxu0 %v3207
      %3309 = vmatpush1.bf16.msra.mxu0 %v3206
      %3310 = vmatprep.subr.bf16.mxu0 %v3214
      %3311 = vmatpush1.bf16.msra.mxu0 %v3213
      %3312 = vmatprep.subr.bf16.mxu0 %v3221
      %3313 = vmatpush1.bf16.msra.mxu0 %v3220
      %3314 = vmatprep.subr.bf16.mxu0 %v3228
      %3315 = vmatpush1.bf16.msra.mxu0 %v3227
      %3316 = vmatprep.subr.bf16.mxu0 %v3235
      %3317 = vmatpush1.bf16.msra.mxu0 %v3234
      %3318 = vmatprep.subr.bf16.mxu0 %v3242
      %3319 = vmatpush1.bf16.msra.mxu0 %v3241
      %3320 = vmatprep.subr.bf16.mxu0 0
      %3321 = vmatpush1.bf16.msra.mxu0 0
      %3322 = vmatprep.subr.bf16.mxu0 0
      %3323 = vmatpush1.bf16.msra.mxu0 0
      %3324 = vmatprep.subr.bf16.mxu0 0
      %3325 = vmatpush1.bf16.msra.mxu0 0
      %3326 = vmatprep.subr.bf16.mxu0 0
      %3327 = vmatpush1.bf16.msra.mxu0 0
      %3328 = vmatprep.subr.bf16.mxu0 0
      %3329 = vmatpush1.bf16.msra.mxu0 0
      %3330 = vmatprep.subr.bf16.mxu0 0
      %3331 = vmatpush1.bf16.msra.mxu0 0
      %3332 = vmatprep.subr.bf16.mxu0 0
      %3333 = vmatpush1.bf16.msra.mxu0 0
      %3334 = vmatprep.subr.bf16.mxu0 0
      %3335 = vmatpush1.bf16.msra.mxu0 0
      %3336 = vmatprep.mubr.bf16.mxu0 0
      %3337 = vmatmul.mubr.bf16.gmra.mrb[0].mxu0 %v2907
      %v3338 = vpop.f32.mrb[0].mxu0
      %v3339 = vadd.f32 %v2984, %v3338
      %v3340 = vpop.f32.mrb[0].mxu0
      %v3341 = vadd.f32 %v2988, %v3340
      %v3342 = vpop.f32.mrb[0].mxu0
      %v3343 = vadd.f32 %v2984, %v3342
      %v3344 = vpop.f32.mrb[0].mxu0
      %v3345 = vadd.f32 %v2988, %v3344
      %3346 = vmatprep.mubr.bf16.mxu0 0
      %3347 = vmatmul.mubr.bf16.gmra.mrb[0].mxu0 %v2908
      %v3348 = vpop.f32.mrb[0].mxu0
      %v3349 = vadd.f32 %v2984, %v3348
      %v3350 = vpop.f32.mrb[0].mxu0
      %v3351 = vadd.f32 %v2988, %v3350
      %v3352 = vpop.f32.mrb[0].mxu0
      %v3353 = vadd.f32 %v2984, %v3352
      %v3354 = vpop.f32.mrb[0].mxu0
      %v3355 = vadd.f32 %v2988, %v3354
      %3356 = vmatprep.mubr.bf16.mxu0 0
      %3357 = vmatmul.mubr.bf16.gmra.mrb[0].mxu0 %v2909
      %v3358 = vpop.f32.mrb[0].mxu0
      %v3359 = vadd.f32 %v2984, %v3358
      %v3360 = vpop.f32.mrb[0].mxu0
      %v3361 = vadd.f32 %v2988, %v3360
      %v3362 = vpop.f32.mrb[0].mxu0
      %v3363 = vadd.f32 %v2984, %v3362
      %v3364 = vpop.f32.mrb[0].mxu0
      %v3365 = vadd.f32 %v2988, %v3364
      %3366 = vmatprep.mubr.bf16.mxu0 0
      %3367 = vmatmul.mubr.bf16.gmra.mrb[0].mxu0 %v2910
      %v3368 = vpop.f32.mrb[0].mxu0
      %v3369 = vadd.f32 %v2984, %v3368
      %v3370 = vpop.f32.mrb[0].mxu0
      %v3371 = vadd.f32 %v2988, %v3370
      %v3372 = vpop.f32.mrb[0].mxu0
      %v3373 = vadd.f32 %v2984, %v3372
      %v3374 = vpop.f32.mrb[0].mxu0
      %v3375 = vadd.f32 %v2988, %v3374
      %3376 = vmatprep.mubr.bf16.mxu0 0
      %3377 = vmatmul.mubr.bf16.gmra.mrb[0].mxu0 %v2911
      %v3378 = vpop.f32.mrb[0].mxu0
      %v3379 = vadd.f32 %v2984, %v3378
      %v3380 = vpop.f32.mrb[0].mxu0
      %v3381 = vadd.f32 %v2988, %v3380
      %v3382 = vpop.f32.mrb[0].mxu0
      %v3383 = vadd.f32 %v2984, %v3382
      %v3384 = vpop.f32.mrb[0].mxu0
      %v3385 = vadd.f32 %v2988, %v3384
      %3386 = vmatprep.mubr.bf16.mxu0 0
      %3387 = vmatmul.mubr.bf16.gmra.mrb[0].mxu0 %v2912
      %v3388 = vpop.f32.mrb[0].mxu0
      %v3389 = vadd.f32 %v2984, %v3388
      %v3390 = vpop.f32.mrb[0].mxu0
      %v3391 = vadd.f32 %v2988, %v3390
      %v3392 = vpop.f32.mrb[0].mxu0
      %v3393 = vadd.f32 %v2984, %v3392
      %v3394 = vpop.f32.mrb[0].mxu0
      %v3395 = vadd.f32 %v2988, %v3394
      %3396 = vmatprep.mubr.bf16.mxu0 0
      %3397 = vmatmul.mubr.bf16.gmra.mrb[0].mxu0 %v2913
      %v3398 = vpop.f32.mrb[0].mxu0
      %v3399 = vadd.f32 %v2984, %v3398
      %v3400 = vpop.f32.mrb[0].mxu0
      %v3401 = vadd.f32 %v2988, %v3400
      %v3402 = vpop.f32.mrb[0].mxu0
      %v3403 = vadd.f32 %v2984, %v3402
      %v3404 = vpop.f32.mrb[0].mxu0
      %v3405 = vadd.f32 %v2988, %v3404
      %3406 = vmatprep.mubr.bf16.mxu0 0
      %3407 = vmatmul.mubr.bf16.gmra.mrb[0].mxu0 %v2914
      %v3408 = vpop.f32.mrb[0].mxu0
      %v3409 = vadd.f32 %v2984, %v3408
      %v3410 = vpop.f32.mrb[0].mxu0
      %v3411 = vadd.f32 %v2988, %v3410
      %v3412 = vpop.f32.mrb[0].mxu0
      %v3413 = vadd.f32 %v2984, %v3412
      %v3414 = vpop.f32.mrb[0].mxu0
      %v3415 = vadd.f32 %v2988, %v3414
      %3416 = vdwg.mxu0
      %3417 = vmatprep.subr.bf16.mxu0 %v3195
      %3418 = vmatpush1.bf16.msra.mxu0 %v3194
      %3419 = vmatprep.subr.bf16.mxu0 %v3202
      %3420 = vmatpush1.bf16.msra.mxu0 %v3201
      %3421 = vmatprep.subr.bf16.mxu0 %v3209
      %3422 = vmatpush1.bf16.msra.mxu0 %v3208
      %3423 = vmatprep.subr.bf16.mxu0 %v3216
      %3424 = vmatpush1.bf16.msra.mxu0 %v3215
      %3425 = vmatprep.subr.bf16.mxu0 %v3223
      %3426 = vmatpush1.bf16.msra.mxu0 %v3222
      %3427 = vmatprep.subr.bf16.mxu0 %v3230
      %3428 = vmatpush1.bf16.msra.mxu0 %v3229
      %3429 = vmatprep.subr.bf16.mxu0 %v3237
      %3430 = vmatpush1.bf16.msra.mxu0 %v3236
      %3431 = vmatprep.subr.bf16.mxu0 %v3244
      %3432 = vmatpush1.bf16.msra.mxu0 %v3243
      %3433 = vmatprep.subr.bf16.mxu0 0
      %3434 = vmatpush1.bf16.msra.mxu0 0
      %3435 = vmatprep.subr.bf16.mxu0 0
      %3436 = vmatpush1.bf16.msra.mxu0 0
      %3437 = vmatprep.subr.bf16.mxu0 0
      %3438 = vmatpush1.bf16.msra.mxu0 0
      %3439 = vmatprep.subr.bf16.mxu0 0
      %3440 = vmatpush1.bf16.msra.mxu0 0
      %3441 = vmatprep.subr.bf16.mxu0 0
      %3442 = vmatpush1.bf16.msra.mxu0 0
      %3443 = vmatprep.subr.bf16.mxu0 0
      %3444 = vmatpush1.bf16.msra.mxu0 0
      %3445 = vmatprep.subr.bf16.mxu0 0
      %3446 = vmatpush1.bf16.msra.mxu0 0
      %3447 = vmatprep.subr.bf16.mxu0 0
      %3448 = vmatpush1.bf16.msra.mxu0 0
      %3449 = vmatprep.mubr.bf16.mxu0 0
      %3450 = vmatmul.mubr.bf16.gmra.mrb[0].mxu0 %v2907
      %v3451 = vpop.f32.mrb[0].mxu0
      %v3452 = vadd.f32 %v2992, %v3451
      %v3453 = vpop.f32.mrb[0].mxu0
      %v3454 = vadd.f32 %v2996, %v3453
      %v3455 = vpop.f32.mrb[0].mxu0
      %v3456 = vadd.f32 %v2992, %v3455
      %v3457 = vpop.f32.mrb[0].mxu0
      %v3458 = vadd.f32 %v2996, %v3457
      %3459 = vmatprep.mubr.bf16.mxu0 0
      %3460 = vmatmul.mubr.bf16.gmra.mrb[0].mxu0 %v2908
      %v3461 = vpop.f32.mrb[0].mxu0
      %v3462 = vadd.f32 %v2992, %v3461
      %v3463 = vpop.f32.mrb[0].mxu0
      %v3464 = vadd.f32 %v2996, %v3463
      %v3465 = vpop.f32.mrb[0].mxu0
      %v3466 = vadd.f32 %v2992, %v3465
      %v3467 = vpop.f32.mrb[0].mxu0
      %v3468 = vadd.f32 %v2996, %v3467
      %3469 = vmatprep.mubr.bf16.mxu0 0
      %3470 = vmatmul.mubr.bf16.gmra.mrb[0].mxu0 %v2909
      %v3471 = vpop.f32.mrb[0].mxu0
      %v3472 = vadd.f32 %v2992, %v3471
      %v3473 = vpop.f32.mrb[0].mxu0
      %v3474 = vadd.f32 %v2996, %v3473
      %v3475 = vpop.f32.mrb[0].mxu0
      %v3476 = vadd.f32 %v2992, %v3475
      %v3477 = vpop.f32.mrb[0].mxu0
      %v3478 = vadd.f32 %v2996, %v3477
      %3479 = vmatprep.mubr.bf16.mxu0 0
      %3480 = vmatmul.mubr.bf16.gmra.mrb[0].mxu0 %v2910
      %v3481 = vpop.f32.mrb[0].mxu0
      %v3482 = vadd.f32 %v2992, %v3481
      %v3483 = vpop.f32.mrb[0].mxu0
      %v3484 = vadd.f32 %v2996, %v3483
      %v3485 = vpop.f32.mrb[0].mxu0
      %v3486 = vadd.f32 %v2992, %v3485
      %v3487 = vpop.f32.mrb[0].mxu0
      %v3488 = vadd.f32 %v2996, %v3487
      %3489 = vmatprep.mubr.bf16.mxu0 0
      %3490 = vmatmul.mubr.bf16.gmra.mrb[0].mxu0 %v2911
      %v3491 = vpop.f32.mrb[0].mxu0
      %v3492 = vadd.f32 %v2992, %v3491
      %v3493 = vpop.f32.mrb[0].mxu0
      %v3494 = vadd.f32 %v2996, %v3493
      %v3495 = vpop.f32.mrb[0].mxu0
      %v3496 = vadd.f32 %v2992, %v3495
      %v3497 = vpop.f32.mrb[0].mxu0
      %v3498 = vadd.f32 %v2996, %v3497
      %3499 = vmatprep.mubr.bf16.mxu0 0
      %3500 = vmatmul.mubr.bf16.gmra.mrb[0].mxu0 %v2912
      %v3501 = vpop.f32.mrb[0].mxu0
      %v3502 = vadd.f32 %v2992, %v3501
      %v3503 = vpop.f32.mrb[0].mxu0
      %v3504 = vadd.f32 %v2996, %v3503
      %v3505 = vpop.f32.mrb[0].mxu0
      %v3506 = vadd.f32 %v2992, %v3505
      %v3507 = vpop.f32.mrb[0].mxu0
      %v3508 = vadd.f32 %v2996, %v3507
      %3509 = vmatprep.mubr.bf16.mxu0 0
      %3510 = vmatmul.mubr.bf16.gmra.mrb[0].mxu0 %v2913
      %v3511 = vpop.f32.mrb[0].mxu0
      %v3512 = vadd.f32 %v2992, %v3511
      %v3513 = vpop.f32.mrb[0].mxu0
      %v3514 = vadd.f32 %v2996, %v3513
      %v3515 = vpop.f32.mrb[0].mxu0
      %v3516 = vadd.f32 %v2992, %v3515
      %v3517 = vpop.f32.mrb[0].mxu0
      %v3518 = vadd.f32 %v2996, %v3517
      %3519 = vmatprep.mubr.bf16.mxu0 0
      %3520 = vmatmul.mubr.bf16.gmra.mrb[0].mxu0 %v2914
      %v3521 = vpop.f32.mrb[0].mxu0
      %v3522 = vadd.f32 %v2992, %v3521
      %v3523 = vpop.f32.mrb[0].mxu0
      %v3524 = vadd.f32 %v2996, %v3523
      %v3525 = vpop.f32.mrb[0].mxu0
      %v3526 = vadd.f32 %v2992, %v3525
      %v3527 = vpop.f32.mrb[0].mxu0
      %v3528 = vadd.f32 %v2996, %v3527
      %3529 = vdwg.mxu0
      %3530 = vmatprep.subr.bf16.mxu0 %v3197
      %3531 = vmatpush1.bf16.msra.mxu0 %v3196
      %3532 = vmatprep.subr.bf16.mxu0 %v3204
      %3533 = vmatpush1.bf16.msra.mxu0 %v3203
      %3534 = vmatprep.subr.bf16.mxu0 %v3211
      %3535 = vmatpush1.bf16.msra.mxu0 %v3210
      %3536 = vmatprep.subr.bf16.mxu0 %v3218
      %3537 = vmatpush1.bf16.msra.mxu0 %v3217
      %3538 = vmatprep.subr.bf16.mxu0 %v3225
      %3539 = vmatpush1.bf16.msra.mxu0 %v3224
      %3540 = vmatprep.subr.bf16.mxu0 %v3232
      %3541 = vmatpush1.bf16.msra.mxu0 %v3231
      %3542 = vmatprep.subr.bf16.mxu0 %v3239
      %3543 = vmatpush1.bf16.msra.mxu0 %v3238
      %3544 = vmatprep.subr.bf16.mxu0 %v3246
      %3545 = vmatpush1.bf16.msra.mxu0 %v3245
      %3546 = vmatprep.subr.bf16.mxu0 0
      %3547 = vmatpush1.bf16.msra.mxu0 0
      %3548 = vmatprep.subr.bf16.mxu0 0
      %3549 = vmatpush1.bf16.msra.mxu0 0
      %3550 = vmatprep.subr.bf16.mxu0 0
      %3551 = vmatpush1.bf16.msra.mxu0 0
      %3552 = vmatprep.subr.bf16.mxu0 0
      %3553 = vmatpush1.bf16.msra.mxu0 0
      %3554 = vmatprep.subr.bf16.mxu0 0
      %3555 = vmatpush1.bf16.msra.mxu0 0
      %3556 = vmatprep.subr.bf16.mxu0 0
      %3557 = vmatpush1.bf16.msra.mxu0 0
      %3558 = vmatprep.subr.bf16.mxu0 0
      %3559 = vmatpush1.bf16.msra.mxu0 0
      %3560 = vmatprep.subr.bf16.mxu0 0
      %3561 = vmatpush1.bf16.msra.mxu0 0
      %3562 = vmatprep.mubr.bf16.mxu0 0
      %3563 = vmatmul.mubr.bf16.gmra.mrb[0].mxu0 %v2907
      %v3564 = vpop.f32.mrb[0].mxu0
      %v3565 = vadd.f32 %v3000, %v3564
      %v3566 = vpop.f32.mrb[0].mxu0
      %v3567 = vadd.f32 %v3004, %v3566
      %v3568 = vpop.f32.mrb[0].mxu0
      %v3569 = vadd.f32 %v3000, %v3568
      %v3570 = vpop.f32.mrb[0].mxu0
      %v3571 = vadd.f32 %v3004, %v3570
      %3572 = vmatprep.mubr.bf16.mxu0 0
      %3573 = vmatmul.mubr.bf16.gmra.mrb[0].mxu0 %v2908
      %v3574 = vpop.f32.mrb[0].mxu0
      %v3575 = vadd.f32 %v3000, %v3574
      %v3576 = vpop.f32.mrb[0].mxu0
      %v3577 = vadd.f32 %v3004, %v3576
      %v3578 = vpop.f32.mrb[0].mxu0
      %v3579 = vadd.f32 %v3000, %v3578
      %v3580 = vpop.f32.mrb[0].mxu0
      %v3581 = vadd.f32 %v3004, %v3580
      %3582 = vmatprep.mubr.bf16.mxu0 0
      %3583 = vmatmul.mubr.bf16.gmra.mrb[0].mxu0 %v2909
      %v3584 = vpop.f32.mrb[0].mxu0
      %v3585 = vadd.f32 %v3000, %v3584
      %v3586 = vpop.f32.mrb[0].mxu0
      %v3587 = vadd.f32 %v3004, %v3586
      %v3588 = vpop.f32.mrb[0].mxu0
      %v3589 = vadd.f32 %v3000, %v3588
      %v3590 = vpop.f32.mrb[0].mxu0
      %v3591 = vadd.f32 %v3004, %v3590
      %3592 = vmatprep.mubr.bf16.mxu0 0
      %3593 = vmatmul.mubr.bf16.gmra.mrb[0].mxu0 %v2910
      %v3594 = vpop.f32.mrb[0].mxu0
      %v3595 = vadd.f32 %v3000, %v3594
      %v3596 = vpop.f32.mrb[0].mxu0
      %v3597 = vadd.f32 %v3004, %v3596
      %v3598 = vpop.f32.mrb[0].mxu0
      %v3599 = vadd.f32 %v3000, %v3598
      %v3600 = vpop.f32.mrb[0].mxu0
      %v3601 = vadd.f32 %v3004, %v3600
      %3602 = vmatprep.mubr.bf16.mxu0 0
      %3603 = vmatmul.mubr.bf16.gmra.mrb[0].mxu0 %v2911
      %v3604 = vpop.f32.mrb[0].mxu0
      %v3605 = vadd.f32 %v3000, %v3604
      %v3606 = vpop.f32.mrb[0].mxu0
      %v3607 = vadd.f32 %v3004, %v3606
      %v3608 = vpop.f32.mrb[0].mxu0
      %v3609 = vadd.f32 %v3000, %v3608
      %v3610 = vpop.f32.mrb[0].mxu0
      %v3611 = vadd.f32 %v3004, %v3610
      %3612 = vmatprep.mubr.bf16.mxu0 0
      %3613 = vmatmul.mubr.bf16.gmra.mrb[0].mxu0 %v2912
      %v3614 = vpop.f32.mrb[0].mxu0
      %v3615 = vadd.f32 %v3000, %v3614
      %v3616 = vpop.f32.mrb[0].mxu0
      %v3617 = vadd.f32 %v3004, %v3616
      %v3618 = vpop.f32.mrb[0].mxu0
      %v3619 = vadd.f32 %v3000, %v3618
      %v3620 = vpop.f32.mrb[0].mxu0
      %v3621 = vadd.f32 %v3004, %v3620
      %3622 = vmatprep.mubr.bf16.mxu0 0
      %3623 = vmatmul.mubr.bf16.gmra.mrb[0].mxu0 %v2913
      %v3624 = vpop.f32.mrb[0].mxu0
      %v3625 = vadd.f32 %v3000, %v3624
      %v3626 = vpop.f32.mrb[0].mxu0
      %v3627 = vadd.f32 %v3004, %v3626
      %v3628 = vpop.f32.mrb[0].mxu0
      %v3629 = vadd.f32 %v3000, %v3628
      %v3630 = vpop.f32.mrb[0].mxu0
      %v3631 = vadd.f32 %v3004, %v3630
      %3632 = vmatprep.mubr.bf16.mxu0 0
      %3633 = vmatmul.mubr.bf16.gmra.mrb[0].mxu0 %v2914
      %v3634 = vpop.f32.mrb[0].mxu0
      %v3635 = vadd.f32 %v3000, %v3634
      %v3636 = vpop.f32.mrb[0].mxu0
      %v3637 = vadd.f32 %v3004, %v3636
      %v3638 = vpop.f32.mrb[0].mxu0
      %v3639 = vadd.f32 %v3000, %v3638
      %v3640 = vpop.f32.mrb[0].mxu0
      %v3641 = vadd.f32 %v3004, %v3640
      %3642 = vdwg.mxu0
      %3643 = vmatprep.subr.bf16.mxu0 0
      %3644 = vmatpush1.bf16.msra.mxu0 %v3198
      %3645 = vmatprep.subr.bf16.mxu0 0
      %3646 = vmatpush1.bf16.msra.mxu0 %v3205
      %3647 = vmatprep.subr.bf16.mxu0 0
      %3648 = vmatpush1.bf16.msra.mxu0 %v3212
      %3649 = vmatprep.subr.bf16.mxu0 0
      %3650 = vmatpush1.bf16.msra.mxu0 %v3219
      %3651 = vmatprep.subr.bf16.mxu0 0
      %3652 = vmatpush1.bf16.msra.mxu0 %v3226
      %3653 = vmatprep.subr.bf16.mxu0 0
      %3654 = vmatpush1.bf16.msra.mxu0 %v3233
      %3655 = vmatprep.subr.bf16.mxu0 0
      %3656 = vmatpush1.bf16.msra.mxu0 %v3240
      %3657 = vmatprep.subr.bf16.mxu0 0
      %3658 = vmatpush1.bf16.msra.mxu0 %v3247
      %3659 = vmatprep.subr.bf16.mxu0 0
      %3660 = vmatpush1.bf16.msra.mxu0 0
      %3661 = vmatprep.subr.bf16.mxu0 0
      %3662 = vmatpush1.bf16.msra.mxu0 0
      %3663 = vmatprep.subr.bf16.mxu0 0
      %3664 = vmatpush1.bf16.msra.mxu0 0
      %3665 = vmatprep.subr.bf16.mxu0 0
      %3666 = vmatpush1.bf16.msra.mxu0 0
      %3667 = vmatprep.subr.bf16.mxu0 0
      %3668 = vmatpush1.bf16.msra.mxu0 0
      %3669 = vmatprep.subr.bf16.mxu0 0
      %3670 = vmatpush1.bf16.msra.mxu0 0
      %3671 = vmatprep.subr.bf16.mxu0 0
      %3672 = vmatpush1.bf16.msra.mxu0 0
      %3673 = vmatprep.subr.bf16.mxu0 0
      %3674 = vmatpush1.bf16.msra.mxu0 0
      %3675 = vmatprep.mubr.bf16.mxu0 0
      %3676 = vmatmul.mubr.bf16.gmra.mrb[0].mxu0 %v2907
      %v3677 = vpop.f32.mrb[0].mxu0
      %v3678 = vadd.f32 %v3008, %v3677
      %v3679 = vpop.f32.mrb[0].mxu0
      %v3680 = vpop.f32.mrb[0].mxu0
      %v3681 = vadd.f32 %v3008, %v3680
      %v3682 = vpop.f32.mrb[0].mxu0
      %3683 = vmatprep.mubr.bf16.mxu0 0
      %3684 = vmatmul.mubr.bf16.gmra.mrb[0].mxu0 %v2908
      %v3685 = vpop.f32.mrb[0].mxu0
      %v3686 = vadd.f32 %v3008, %v3685
      %v3687 = vpop.f32.mrb[0].mxu0
      %v3688 = vpop.f32.mrb[0].mxu0
      %v3689 = vadd.f32 %v3008, %v3688
      %v3690 = vpop.f32.mrb[0].mxu0
      %3691 = vmatprep.mubr.bf16.mxu0 0
      %3692 = vmatmul.mubr.bf16.gmra.mrb[0].mxu0 %v2909
      %v3693 = vpop.f32.mrb[0].mxu0
      %v3694 = vadd.f32 %v3008, %v3693
      %v3695 = vpop.f32.mrb[0].mxu0
      %v3696 = vpop.f32.mrb[0].mxu0
      %v3697 = vadd.f32 %v3008, %v3696
      %v3698 = vpop.f32.mrb[0].mxu0
      %3699 = vmatprep.mubr.bf16.mxu0 0
      %3700 = vmatmul.mubr.bf16.gmra.mrb[0].mxu0 %v2910
      %v3701 = vpop.f32.mrb[0].mxu0
      %v3702 = vadd.f32 %v3008, %v3701
      %v3703 = vpop.f32.mrb[0].mxu0
      %v3704 = vpop.f32.mrb[0].mxu0
      %v3705 = vadd.f32 %v3008, %v3704
      %v3706 = vpop.f32.mrb[0].mxu0
      %3707 = vmatprep.mubr.bf16.mxu0 0
      %3708 = vmatmul.mubr.bf16.gmra.mrb[0].mxu0 %v2911
      %v3709 = vpop.f32.mrb[0].mxu0
      %v3710 = vadd.f32 %v3008, %v3709
      %v3711 = vpop.f32.mrb[0].mxu0
      %v3712 = vpop.f32.mrb[0].mxu0
      %v3713 = vadd.f32 %v3008, %v3712
      %v3714 = vpop.f32.mrb[0].mxu0
      %3715 = vmatprep.mubr.bf16.mxu0 0
      %3716 = vmatmul.mubr.bf16.gmra.mrb[0].mxu0 %v2912
      %v3717 = vpop.f32.mrb[0].mxu0
      %v3718 = vadd.f32 %v3008, %v3717
      %v3719 = vpop.f32.mrb[0].mxu0
      %v3720 = vpop.f32.mrb[0].mxu0
      %v3721 = vadd.f32 %v3008, %v3720
      %v3722 = vpop.f32.mrb[0].mxu0
      %3723 = vmatprep.mubr.bf16.mxu0 0
      %3724 = vmatmul.mubr.bf16.gmra.mrb[0].mxu0 %v2913
      %v3725 = vpop.f32.mrb[0].mxu0
      %v3726 = vadd.f32 %v3008, %v3725
      %v3727 = vpop.f32.mrb[0].mxu0
      %v3728 = vpop.f32.mrb[0].mxu0
      %v3729 = vadd.f32 %v3008, %v3728
      %v3730 = vpop.f32.mrb[0].mxu0
      %3731 = vmatprep.mubr.bf16.mxu0 0
      %3732 = vmatmul.mubr.bf16.gmra.mrb[0].mxu0 %v2914
      %v3733 = vpop.f32.mrb[0].mxu0
      %v3734 = vadd.f32 %v3008, %v3733
      %v3735 = vpop.f32.mrb[0].mxu0
      %v3736 = vpop.f32.mrb[0].mxu0
      %v3737 = vadd.f32 %v3008, %v3736
      %v3738 = vpop.f32.mrb[0].mxu0
      %3739 = vdwg.mxu0
      %v3740 = vxor.u32 %v3339, 2147483648
      %v3741 = vxor.u32 %v3341, 2147483648
      %v3742 = vxor.u32 %v3452, 2147483648
      %v3743 = vxor.u32 %v3454, 2147483648
      %v3744 = vxor.u32 %v3565, 2147483648
      %v3745 = vxor.u32 %v3567, 2147483648
      %v3746 = vxor.u32 %v3678, 2147483648
      %v3747 = vxor.u32 %v3343, 2147483648
      %v3748 = vxor.u32 %v3345, 2147483648
      %v3749 = vxor.u32 %v3456, 2147483648
      %v3750 = vxor.u32 %v3458, 2147483648
      %v3751 = vxor.u32 %v3569, 2147483648
      %v3752 = vxor.u32 %v3571, 2147483648
      %v3753 = vxor.u32 %v3681, 2147483648
      %v3754 = vxor.u32 %v3349, 2147483648
      %v3755 = vxor.u32 %v3351, 2147483648
      %v3756 = vxor.u32 %v3462, 2147483648
      %v3757 = vxor.u32 %v3464, 2147483648
      %v3758 = vxor.u32 %v3575, 2147483648
      %v3759 = vxor.u32 %v3577, 2147483648
      %v3760 = vxor.u32 %v3686, 2147483648
      %v3761 = vxor.u32 %v3353, 2147483648
      %v3762 = vxor.u32 %v3355, 2147483648
      %v3763 = vxor.u32 %v3466, 2147483648
      %v3764 = vxor.u32 %v3468, 2147483648
      %v3765 = vxor.u32 %v3579, 2147483648
      %v3766 = vxor.u32 %v3581, 2147483648
      %v3767 = vxor.u32 %v3689, 2147483648
      %v3768 = vxor.u32 %v3359, 2147483648
      %v3769 = vxor.u32 %v3361, 2147483648
      %v3770 = vxor.u32 %v3472, 2147483648
      %v3771 = vxor.u32 %v3474, 2147483648
      %v3772 = vxor.u32 %v3585, 2147483648
      %v3773 = vxor.u32 %v3587, 2147483648
      %v3774 = vxor.u32 %v3694, 2147483648
      %v3775 = vxor.u32 %v3363, 2147483648
      %v3776 = vxor.u32 %v3365, 2147483648
      %v3777 = vxor.u32 %v3476, 2147483648
      %v3778 = vxor.u32 %v3478, 2147483648
      %v3779 = vxor.u32 %v3589, 2147483648
      %v3780 = vxor.u32 %v3591, 2147483648
      %v3781 = vxor.u32 %v3697, 2147483648
      %v3782 = vxor.u32 %v3369, 2147483648
      %v3783 = vxor.u32 %v3371, 2147483648
      %v3784 = vxor.u32 %v3482, 2147483648
      %v3785 = vxor.u32 %v3484, 2147483648
      %v3786 = vxor.u32 %v3595, 2147483648
      %v3787 = vxor.u32 %v3597, 2147483648
      %v3788 = vxor.u32 %v3702, 2147483648
      %v3789 = vxor.u32 %v3373, 2147483648
      %v3790 = vxor.u32 %v3375, 2147483648
      %v3791 = vxor.u32 %v3486, 2147483648
      %v3792 = vxor.u32 %v3488, 2147483648
      %v3793 = vxor.u32 %v3599, 2147483648
      %v3794 = vxor.u32 %v3601, 2147483648
      %v3795 = vxor.u32 %v3705, 2147483648
      %v3796 = vxor.u32 %v3379, 2147483648
      %v3797 = vxor.u32 %v3381, 2147483648
      %v3798 = vxor.u32 %v3492, 2147483648
      %v3799 = vxor.u32 %v3494, 2147483648
      %v3800 = vxor.u32 %v3605, 2147483648
      %v3801 = vxor.u32 %v3607, 2147483648
      %v3802 = vxor.u32 %v3710, 2147483648
      %v3803 = vxor.u32 %v3383, 2147483648
      %v3804 = vxor.u32 %v3385, 2147483648
      %v3805 = vxor.u32 %v3496, 2147483648
      %v3806 = vxor.u32 %v3498, 2147483648
      %v3807 = vxor.u32 %v3609, 2147483648
      %v3808 = vxor.u32 %v3611, 2147483648
      %v3809 = vxor.u32 %v3713, 2147483648
      %v3810 = vxor.u32 %v3389, 2147483648
      %v3811 = vxor.u32 %v3391, 2147483648
      %v3812 = vxor.u32 %v3502, 2147483648
      %v3813 = vxor.u32 %v3504, 2147483648
      %v3814 = vxor.u32 %v3615, 2147483648
      %v3815 = vxor.u32 %v3617, 2147483648
      %v3816 = vxor.u32 %v3718, 2147483648
      %v3817 = vxor.u32 %v3393, 2147483648
      %v3818 = vxor.u32 %v3395, 2147483648
      %v3819 = vxor.u32 %v3506, 2147483648
      %v3820 = vxor.u32 %v3508, 2147483648
      %v3821 = vxor.u32 %v3619, 2147483648
      %v3822 = vxor.u32 %v3621, 2147483648
      %v3823 = vxor.u32 %v3721, 2147483648
      %v3824 = vxor.u32 %v3399, 2147483648
      %v3825 = vxor.u32 %v3401, 2147483648
      %v3826 = vxor.u32 %v3512, 2147483648
      %v3827 = vxor.u32 %v3514, 2147483648
      %v3828 = vxor.u32 %v3625, 2147483648
      %v3829 = vxor.u32 %v3627, 2147483648
      %v3830 = vxor.u32 %v3726, 2147483648
      %v3831 = vxor.u32 %v3403, 2147483648
      %v3832 = vxor.u32 %v3405, 2147483648
      %v3833 = vxor.u32 %v3516, 2147483648
      %v3834 = vxor.u32 %v3518, 2147483648
      %v3835 = vxor.u32 %v3629, 2147483648
      %v3836 = vxor.u32 %v3631, 2147483648
      %v3837 = vxor.u32 %v3729, 2147483648
      %v3838 = vxor.u32 %v3409, 2147483648
      %v3839 = vxor.u32 %v3411, 2147483648
      %v3840 = vxor.u32 %v3522, 2147483648
      %v3841 = vxor.u32 %v3524, 2147483648
      %v3842 = vxor.u32 %v3635, 2147483648
      %v3843 = vxor.u32 %v3637, 2147483648
      %v3844 = vxor.u32 %v3734, 2147483648
      %v3845 = vxor.u32 %v3413, 2147483648
      %v3846 = vxor.u32 %v3415, 2147483648
      %v3847 = vxor.u32 %v3526, 2147483648
      %v3848 = vxor.u32 %v3528, 2147483648
      %v3849 = vxor.u32 %v3639, 2147483648
      %v3850 = vxor.u32 %v3641, 2147483648
      %v3851 = vxor.u32 %v3737, 2147483648
      %v3852 = vmul.f32 %v3740, 1.442695
      %v3853 = vpow.pop %v3852
      %v3854 = vmul.f32 %v3741, 1.442695
      %v3855 = vpow.pop %v3854
      %v3856 = vmul.f32 %v3742, 1.442695
      %v3857 = vpow.pop %v3856
      %v3858 = vmul.f32 %v3743, 1.442695
      %v3859 = vpow.pop %v3858
      %v3860 = vmul.f32 %v3744, 1.442695
      %v3861 = vpow.pop %v3860
      %v3862 = vmul.f32 %v3745, 1.442695
      %v3863 = vpow.pop %v3862
      %v3864 = vmul.f32 %v3746, 1.442695
      %v3865 = vpow.pop %v3864
      %v3866 = vmul.f32 %v3747, 1.442695
      %v3867 = vpow.pop %v3866
      %v3868 = vmul.f32 %v3748, 1.442695
      %v3869 = vpow.pop %v3868
      %v3870 = vmul.f32 %v3749, 1.442695
      %v3871 = vpow.pop %v3870
      %v3872 = vmul.f32 %v3750, 1.442695
      %v3873 = vpow.pop %v3872
      %v3874 = vmul.f32 %v3751, 1.442695
      %v3875 = vpow.pop %v3874
      %v3876 = vmul.f32 %v3752, 1.442695
      %v3877 = vpow.pop %v3876
      %v3878 = vmul.f32 %v3753, 1.442695
      %v3879 = vpow.pop %v3878
      %v3880 = vmul.f32 %v3754, 1.442695
      %v3881 = vpow.pop %v3880
      %v3882 = vmul.f32 %v3755, 1.442695
      %v3883 = vpow.pop %v3882
      %v3884 = vmul.f32 %v3756, 1.442695
      %v3885 = vpow.pop %v3884
      %v3886 = vmul.f32 %v3757, 1.442695
      %v3887 = vpow.pop %v3886
      %v3888 = vmul.f32 %v3758, 1.442695
      %v3889 = vpow.pop %v3888
      %v3890 = vmul.f32 %v3759, 1.442695
      %v3891 = vpow.pop %v3890
      %v3892 = vmul.f32 %v3760, 1.442695
      %v3893 = vpow.pop %v3892
      %v3894 = vmul.f32 %v3761, 1.442695
      %v3895 = vpow.pop %v3894
      %v3896 = vmul.f32 %v3762, 1.442695
      %v3897 = vpow.pop %v3896
      %v3898 = vmul.f32 %v3763, 1.442695
      %v3899 = vpow.pop %v3898
      %v3900 = vmul.f32 %v3764, 1.442695
      %v3901 = vpow.pop %v3900
      %v3902 = vmul.f32 %v3765, 1.442695
      %v3903 = vpow.pop %v3902
      %v3904 = vmul.f32 %v3766, 1.442695
      %v3905 = vpow.pop %v3904
      %v3906 = vmul.f32 %v3767, 1.442695
      %v3907 = vpow.pop %v3906
      %v3908 = vmul.f32 %v3768, 1.442695
      %v3909 = vpow.pop %v3908
      %v3910 = vmul.f32 %v3769, 1.442695
      %v3911 = vpow.pop %v3910
      %v3912 = vmul.f32 %v3770, 1.442695
      %v3913 = vpow.pop %v3912
      %v3914 = vmul.f32 %v3771, 1.442695
      %v3915 = vpow.pop %v3914
      %v3916 = vmul.f32 %v3772, 1.442695
      %v3917 = vpow.pop %v3916
      %v3918 = vmul.f32 %v3773, 1.442695
      %v3919 = vpow.pop %v3918
      %v3920 = vmul.f32 %v3774, 1.442695
      %v3921 = vpow.pop %v3920
      %v3922 = vmul.f32 %v3775, 1.442695
      %v3923 = vpow.pop %v3922
      %v3924 = vmul.f32 %v3776, 1.442695
      %v3925 = vpow.pop %v3924
      %v3926 = vmul.f32 %v3777, 1.442695
      %v3927 = vpow.pop %v3926
      %v3928 = vmul.f32 %v3778, 1.442695
      %v3929 = vpow.pop %v3928
      %v3930 = vmul.f32 %v3779, 1.442695
      %v3931 = vpow.pop %v3930
      %v3932 = vmul.f32 %v3780, 1.442695
      %v3933 = vpow.pop %v3932
      %v3934 = vmul.f32 %v3781, 1.442695
      %v3935 = vpow.pop %v3934
      %v3936 = vmul.f32 %v3782, 1.442695
      %v3937 = vpow.pop %v3936
      %v3938 = vmul.f32 %v3783, 1.442695
      %v3939 = vpow.pop %v3938
      %v3940 = vmul.f32 %v3784, 1.442695
      %v3941 = vpow.pop %v3940
      %v3942 = vmul.f32 %v3785, 1.442695
      %v3943 = vpow.pop %v3942
      %v3944 = vmul.f32 %v3786, 1.442695
      %v3945 = vpow.pop %v3944
      %v3946 = vmul.f32 %v3787, 1.442695
      %v3947 = vpow.pop %v3946
      %v3948 = vmul.f32 %v3788, 1.442695
      %v3949 = vpow.pop %v3948
      %v3950 = vmul.f32 %v3789, 1.442695
      %v3951 = vpow.pop %v3950
      %v3952 = vmul.f32 %v3790, 1.442695
      %v3953 = vpow.pop %v3952
      %v3954 = vmul.f32 %v3791, 1.442695
      %v3955 = vpow.pop %v3954
      %v3956 = vmul.f32 %v3792, 1.442695
      %v3957 = vpow.pop %v3956
      %v3958 = vmul.f32 %v3793, 1.442695
      %v3959 = vpow.pop %v3958
      %v3960 = vmul.f32 %v3794, 1.442695
      %v3961 = vpow.pop %v3960
      %v3962 = vmul.f32 %v3795, 1.442695
      %v3963 = vpow.pop %v3962
      %v3964 = vmul.f32 %v3796, 1.442695
      %v3965 = vpow.pop %v3964
      %v3966 = vmul.f32 %v3797, 1.442695
      %v3967 = vpow.pop %v3966
      %v3968 = vmul.f32 %v3798, 1.442695
      %v3969 = vpow.pop %v3968
      %v3970 = vmul.f32 %v3799, 1.442695
      %v3971 = vpow.pop %v3970
      %v3972 = vmul.f32 %v3800, 1.442695
      %v3973 = vpow.pop %v3972
      %v3974 = vmul.f32 %v3801, 1.442695
      %v3975 = vpow.pop %v3974
      %v3976 = vmul.f32 %v3802, 1.442695
      %v3977 = vpow.pop %v3976
      %v3978 = vmul.f32 %v3803, 1.442695
      %v3979 = vpow.pop %v3978
      %v3980 = vmul.f32 %v3804, 1.442695
      %v3981 = vpow.pop %v3980
      %v3982 = vmul.f32 %v3805, 1.442695
      %v3983 = vpow.pop %v3982
      %v3984 = vmul.f32 %v3806, 1.442695
      %v3985 = vpow.pop %v3984
      %v3986 = vmul.f32 %v3807, 1.442695
      %v3987 = vpow.pop %v3986
      %v3988 = vmul.f32 %v3808, 1.442695
      %v3989 = vpow.pop %v3988
      %v3990 = vmul.f32 %v3809, 1.442695
      %v3991 = vpow.pop %v3990
      %v3992 = vmul.f32 %v3810, 1.442695
      %v3993 = vpow.pop %v3992
      %v3994 = vmul.f32 %v3811, 1.442695
      %v3995 = vpow.pop %v3994
      %v3996 = vmul.f32 %v3812, 1.442695
      %v3997 = vpow.pop %v3996
      %v3998 = vmul.f32 %v3813, 1.442695
      %v3999 = vpow.pop %v3998
      %v4000 = vmul.f32 %v3814, 1.442695
      %v4001 = vpow.pop %v4000
      %v4002 = vmul.f32 %v3815, 1.442695
      %v4003 = vpow.pop %v4002
      %v4004 = vmul.f32 %v3816, 1.442695
      %v4005 = vpow.pop %v4004
      %v4006 = vmul.f32 %v3817, 1.442695
      %v4007 = vpow.pop %v4006
      %v4008 = vmul.f32 %v3818, 1.442695
      %v4009 = vpow.pop %v4008
      %v4010 = vmul.f32 %v3819, 1.442695
      %v4011 = vpow.pop %v4010
      %v4012 = vmul.f32 %v3820, 1.442695
      %v4013 = vpow.pop %v4012
      %v4014 = vmul.f32 %v3821, 1.442695
      %v4015 = vpow.pop %v4014
      %v4016 = vmul.f32 %v3822, 1.442695
      %v4017 = vpow.pop %v4016
      %v4018 = vmul.f32 %v3823, 1.442695
      %v4019 = vpow.pop %v4018
      %v4020 = vmul.f32 %v3824, 1.442695
      %v4021 = vpow.pop %v4020
      %v4022 = vmul.f32 %v3825, 1.442695
      %v4023 = vpow.pop %v4022
      %v4024 = vmul.f32 %v3826, 1.442695
      %v4025 = vpow.pop %v4024
      %v4026 = vmul.f32 %v3827, 1.442695
      %v4027 = vpow.pop %v4026
      %v4028 = vmul.f32 %v3828, 1.442695
      %v4029 = vpow.pop %v4028
      %v4030 = vmul.f32 %v3829, 1.442695
      %v4031 = vpow.pop %v4030
      %v4032 = vmul.f32 %v3830, 1.442695
      %v4033 = vpow.pop %v4032
      %v4034 = vmul.f32 %v3831, 1.442695
      %v4035 = vpow.pop %v4034
      %v4036 = vmul.f32 %v3832, 1.442695
      %v4037 = vpow.pop %v4036
      %v4038 = vmul.f32 %v3833, 1.442695
      %v4039 = vpow.pop %v4038
      %v4040 = vmul.f32 %v3834, 1.442695
      %v4041 = vpow.pop %v4040
      %v4042 = vmul.f32 %v3835, 1.442695
      %v4043 = vpow.pop %v4042
      %v4044 = vmul.f32 %v3836, 1.442695
      %v4045 = vpow.pop %v4044
      %v4046 = vmul.f32 %v3837, 1.442695
      %v4047 = vpow.pop %v4046
      %v4048 = vmul.f32 %v3838, 1.442695
      %v4049 = vpow.pop %v4048
      %v4050 = vmul.f32 %v3839, 1.442695
      %v4051 = vpow.pop %v4050
      %v4052 = vmul.f32 %v3840, 1.442695
      %v4053 = vpow.pop %v4052
      %v4054 = vmul.f32 %v3841, 1.442695
      %v4055 = vpow.pop %v4054
      %v4056 = vmul.f32 %v3842, 1.442695
      %v4057 = vpow.pop %v4056
      %v4058 = vmul.f32 %v3843, 1.442695
      %v4059 = vpow.pop %v4058
      %v4060 = vmul.f32 %v3844, 1.442695
      %v4061 = vpow.pop %v4060
      %v4062 = vmul.f32 %v3845, 1.442695
      %v4063 = vpow.pop %v4062
      %v4064 = vmul.f32 %v3846, 1.442695
      %v4065 = vpow.pop %v4064
      %v4066 = vmul.f32 %v3847, 1.442695
      %v4067 = vpow.pop %v4066
      %v4068 = vmul.f32 %v3848, 1.442695
      %v4069 = vpow.pop %v4068
      %v4070 = vmul.f32 %v3849, 1.442695
      %v4071 = vpow.pop %v4070
      %v4072 = vmul.f32 %v3850, 1.442695
      %v4073 = vpow.pop %v4072
      %v4074 = vmul.f32 %v3851, 1.442695
      %v4075 = vpow.pop %v4074
      %v4076 = vadd.f32 %v3853, 1.0
      %v4077 = vadd.f32 %v3855, 1.0
      %v4078 = vadd.f32 %v3857, 1.0
      %v4079 = vadd.f32 %v3859, 1.0
      %v4080 = vadd.f32 %v3861, 1.0
      %v4081 = vadd.f32 %v3863, 1.0
      %v4082 = vadd.f32 %v3865, 1.0
      %v4083 = vadd.f32 %v3867, 1.0
      %v4084 = vadd.f32 %v3869, 1.0
      %v4085 = vadd.f32 %v3871, 1.0
      %v4086 = vadd.f32 %v3873, 1.0
      %v4087 = vadd.f32 %v3875, 1.0
      %v4088 = vadd.f32 %v3877, 1.0
      %v4089 = vadd.f32 %v3879, 1.0
      %v4090 = vadd.f32 %v3881, 1.0
      %v4091 = vadd.f32 %v3883, 1.0
      %v4092 = vadd.f32 %v3885, 1.0
      %v4093 = vadd.f32 %v3887, 1.0
      %v4094 = vadd.f32 %v3889, 1.0
      %v4095 = vadd.f32 %v3891, 1.0
      %v4096 = vadd.f32 %v3893, 1.0
      %v4097 = vadd.f32 %v3895, 1.0
      %v4098 = vadd.f32 %v3897, 1.0
      %v4099 = vadd.f32 %v3899, 1.0
      %v4100 = vadd.f32 %v3901, 1.0
      %v4101 = vadd.f32 %v3903, 1.0
      %v4102 = vadd.f32 %v3905, 1.0
      %v4103 = vadd.f32 %v3907, 1.0
      %v4104 = vadd.f32 %v3909, 1.0
      %v4105 = vadd.f32 %v3911, 1.0
      %v4106 = vadd.f32 %v3913, 1.0
      %v4107 = vadd.f32 %v3915, 1.0
      %v4108 = vadd.f32 %v3917, 1.0
      %v4109 = vadd.f32 %v3919, 1.0
      %v4110 = vadd.f32 %v3921, 1.0
      %v4111 = vadd.f32 %v3923, 1.0
      %v4112 = vadd.f32 %v3925, 1.0
      %v4113 = vadd.f32 %v3927, 1.0
      %v4114 = vadd.f32 %v3929, 1.0
      %v4115 = vadd.f32 %v3931, 1.0
      %v4116 = vadd.f32 %v3933, 1.0
      %v4117 = vadd.f32 %v3935, 1.0
      %v4118 = vadd.f32 %v3937, 1.0
      %v4119 = vadd.f32 %v3939, 1.0
      %v4120 = vadd.f32 %v3941, 1.0
      %v4121 = vadd.f32 %v3943, 1.0
      %v4122 = vadd.f32 %v3945, 1.0
      %v4123 = vadd.f32 %v3947, 1.0
      %v4124 = vadd.f32 %v3949, 1.0
      %v4125 = vadd.f32 %v3951, 1.0
      %v4126 = vadd.f32 %v3953, 1.0
      %v4127 = vadd.f32 %v3955, 1.0
      %v4128 = vadd.f32 %v3957, 1.0
      %v4129 = vadd.f32 %v3959, 1.0
      %v4130 = vadd.f32 %v3961, 1.0
      %v4131 = vadd.f32 %v3963, 1.0
      %v4132 = vadd.f32 %v3965, 1.0
      %v4133 = vadd.f32 %v3967, 1.0
      %v4134 = vadd.f32 %v3969, 1.0
      %v4135 = vadd.f32 %v3971, 1.0
      %v4136 = vadd.f32 %v3973, 1.0
      %v4137 = vadd.f32 %v3975, 1.0
      %v4138 = vadd.f32 %v3977, 1.0
      %v4139 = vadd.f32 %v3979, 1.0
      %v4140 = vadd.f32 %v3981, 1.0
      %v4141 = vadd.f32 %v3983, 1.0
      %v4142 = vadd.f32 %v3985, 1.0
      %v4143 = vadd.f32 %v3987, 1.0
      %v4144 = vadd.f32 %v3989, 1.0
      %v4145 = vadd.f32 %v3991, 1.0
      %v4146 = vadd.f32 %v3993, 1.0
      %v4147 = vadd.f32 %v3995, 1.0
      %v4148 = vadd.f32 %v3997, 1.0
      %v4149 = vadd.f32 %v3999, 1.0
      %v4150 = vadd.f32 %v4001, 1.0
      %v4151 = vadd.f32 %v4003, 1.0
      %v4152 = vadd.f32 %v4005, 1.0
      %v4153 = vadd.f32 %v4007, 1.0
      %v4154 = vadd.f32 %v4009, 1.0
      %v4155 = vadd.f32 %v4011, 1.0
      %v4156 = vadd.f32 %v4013, 1.0
      %v4157 = vadd.f32 %v4015, 1.0
      %v4158 = vadd.f32 %v4017, 1.0
      %v4159 = vadd.f32 %v4019, 1.0
      %v4160 = vadd.f32 %v4021, 1.0
      %v4161 = vadd.f32 %v4023, 1.0
      %v4162 = vadd.f32 %v4025, 1.0
      %v4163 = vadd.f32 %v4027, 1.0
      %v4164 = vadd.f32 %v4029, 1.0
      %v4165 = vadd.f32 %v4031, 1.0
      %v4166 = vadd.f32 %v4033, 1.0
      %v4167 = vadd.f32 %v4035, 1.0
      %v4168 = vadd.f32 %v4037, 1.0
      %v4169 = vadd.f32 %v4039, 1.0
      %v4170 = vadd.f32 %v4041, 1.0
      %v4171 = vadd.f32 %v4043, 1.0
      %v4172 = vadd.f32 %v4045, 1.0
      %v4173 = vadd.f32 %v4047, 1.0
      %v4174 = vadd.f32 %v4049, 1.0
      %v4175 = vadd.f32 %v4051, 1.0
      %v4176 = vadd.f32 %v4053, 1.0
      %v4177 = vadd.f32 %v4055, 1.0
      %v4178 = vadd.f32 %v4057, 1.0
      %v4179 = vadd.f32 %v4059, 1.0
      %v4180 = vadd.f32 %v4061, 1.0
      %v4181 = vadd.f32 %v4063, 1.0
      %v4182 = vadd.f32 %v4065, 1.0
      %v4183 = vadd.f32 %v4067, 1.0
      %v4184 = vadd.f32 %v4069, 1.0
      %v4185 = vadd.f32 %v4071, 1.0
      %v4186 = vadd.f32 %v4073, 1.0
      %v4187 = vadd.f32 %v4075, 1.0
      %v4188 = vrcp.pop %v4076
      %v4189 = vmul.f32 1.0, %v4188
      %v4190 = vrcp.pop %v4077
      %v4191 = vmul.f32 1.0, %v4190
      %v4192 = vrcp.pop %v4078
      %v4193 = vmul.f32 1.0, %v4192
      %v4194 = vrcp.pop %v4079
      %v4195 = vmul.f32 1.0, %v4194
      %v4196 = vrcp.pop %v4080
      %v4197 = vmul.f32 1.0, %v4196
      %v4198 = vrcp.pop %v4081
      %v4199 = vmul.f32 1.0, %v4198
      %v4200 = vrcp.pop %v4082
      %v4201 = vmul.f32 1.0, %v4200
      %v4202 = vrcp.pop %v4083
      %v4203 = vmul.f32 1.0, %v4202
      %v4204 = vrcp.pop %v4084
      %v4205 = vmul.f32 1.0, %v4204
      %v4206 = vrcp.pop %v4085
      %v4207 = vmul.f32 1.0, %v4206
      %v4208 = vrcp.pop %v4086
      %v4209 = vmul.f32 1.0, %v4208
      %v4210 = vrcp.pop %v4087
      %v4211 = vmul.f32 1.0, %v4210
      %v4212 = vrcp.pop %v4088
      %v4213 = vmul.f32 1.0, %v4212
      %v4214 = vrcp.pop %v4089
      %v4215 = vmul.f32 1.0, %v4214
      %v4216 = vrcp.pop %v4090
      %v4217 = vmul.f32 1.0, %v4216
      %v4218 = vrcp.pop %v4091
      %v4219 = vmul.f32 1.0, %v4218
      %v4220 = vrcp.pop %v4092
      %v4221 = vmul.f32 1.0, %v4220
      %v4222 = vrcp.pop %v4093
      %v4223 = vmul.f32 1.0, %v4222
      %v4224 = vrcp.pop %v4094
      %v4225 = vmul.f32 1.0, %v4224
      %v4226 = vrcp.pop %v4095
      %v4227 = vmul.f32 1.0, %v4226
      %v4228 = vrcp.pop %v4096
      %v4229 = vmul.f32 1.0, %v4228
      %v4230 = vrcp.pop %v4097
      %v4231 = vmul.f32 1.0, %v4230
      %v4232 = vrcp.pop %v4098
      %v4233 = vmul.f32 1.0, %v4232
      %v4234 = vrcp.pop %v4099
      %v4235 = vmul.f32 1.0, %v4234
      %v4236 = vrcp.pop %v4100
      %v4237 = vmul.f32 1.0, %v4236
      %v4238 = vrcp.pop %v4101
      %v4239 = vmul.f32 1.0, %v4238
      %v4240 = vrcp.pop %v4102
      %v4241 = vmul.f32 1.0, %v4240
      %v4242 = vrcp.pop %v4103
      %v4243 = vmul.f32 1.0, %v4242
      %v4244 = vrcp.pop %v4104
      %v4245 = vmul.f32 1.0, %v4244
      %v4246 = vrcp.pop %v4105
      %v4247 = vmul.f32 1.0, %v4246
      %v4248 = vrcp.pop %v4106
      %v4249 = vmul.f32 1.0, %v4248
      %v4250 = vrcp.pop %v4107
      %v4251 = vmul.f32 1.0, %v4250
      %v4252 = vrcp.pop %v4108
      %v4253 = vmul.f32 1.0, %v4252
      %v4254 = vrcp.pop %v4109
      %v4255 = vmul.f32 1.0, %v4254
      %v4256 = vrcp.pop %v4110
      %v4257 = vmul.f32 1.0, %v4256
      %v4258 = vrcp.pop %v4111
      %v4259 = vmul.f32 1.0, %v4258
      %v4260 = vrcp.pop %v4112
      %v4261 = vmul.f32 1.0, %v4260
      %v4262 = vrcp.pop %v4113
      %v4263 = vmul.f32 1.0, %v4262
      %v4264 = vrcp.pop %v4114
      %v4265 = vmul.f32 1.0, %v4264
      %v4266 = vrcp.pop %v4115
      %v4267 = vmul.f32 1.0, %v4266
      %v4268 = vrcp.pop %v4116
      %v4269 = vmul.f32 1.0, %v4268
      %v4270 = vrcp.pop %v4117
      %v4271 = vmul.f32 1.0, %v4270
      %v4272 = vrcp.pop %v4118
      %v4273 = vmul.f32 1.0, %v4272
      %v4274 = vrcp.pop %v4119
      %v4275 = vmul.f32 1.0, %v4274
      %v4276 = vrcp.pop %v4120
      %v4277 = vmul.f32 1.0, %v4276
      %v4278 = vrcp.pop %v4121
      %v4279 = vmul.f32 1.0, %v4278
      %v4280 = vrcp.pop %v4122
      %v4281 = vmul.f32 1.0, %v4280
      %v4282 = vrcp.pop %v4123
      %v4283 = vmul.f32 1.0, %v4282
      %v4284 = vrcp.pop %v4124
      %v4285 = vmul.f32 1.0, %v4284
      %v4286 = vrcp.pop %v4125
      %v4287 = vmul.f32 1.0, %v4286
      %v4288 = vrcp.pop %v4126
      %v4289 = vmul.f32 1.0, %v4288
      %v4290 = vrcp.pop %v4127
      %v4291 = vmul.f32 1.0, %v4290
      %v4292 = vrcp.pop %v4128
      %v4293 = vmul.f32 1.0, %v4292
      %v4294 = vrcp.pop %v4129
      %v4295 = vmul.f32 1.0, %v4294
      %v4296 = vrcp.pop %v4130
      %v4297 = vmul.f32 1.0, %v4296
      %v4298 = vrcp.pop %v4131
      %v4299 = vmul.f32 1.0, %v4298
      %v4300 = vrcp.pop %v4132
      %v4301 = vmul.f32 1.0, %v4300
      %v4302 = vrcp.pop %v4133
      %v4303 = vmul.f32 1.0, %v4302
      %v4304 = vrcp.pop %v4134
      %v4305 = vmul.f32 1.0, %v4304
      %v4306 = vrcp.pop %v4135
      %v4307 = vmul.f32 1.0, %v4306
      %v4308 = vrcp.pop %v4136
      %v4309 = vmul.f32 1.0, %v4308
      %v4310 = vrcp.pop %v4137
      %v4311 = vmul.f32 1.0, %v4310
      %v4312 = vrcp.pop %v4138
      %v4313 = vmul.f32 1.0, %v4312
      %v4314 = vrcp.pop %v4139
      %v4315 = vmul.f32 1.0, %v4314
      %v4316 = vrcp.pop %v4140
      %v4317 = vmul.f32 1.0, %v4316
      %v4318 = vrcp.pop %v4141
      %v4319 = vmul.f32 1.0, %v4318
      %v4320 = vrcp.pop %v4142
      %v4321 = vmul.f32 1.0, %v4320
      %v4322 = vrcp.pop %v4143
      %v4323 = vmul.f32 1.0, %v4322
      %v4324 = vrcp.pop %v4144
      %v4325 = vmul.f32 1.0, %v4324
      %v4326 = vrcp.pop %v4145
      %v4327 = vmul.f32 1.0, %v4326
      %v4328 = vrcp.pop %v4146
      %v4329 = vmul.f32 1.0, %v4328
      %v4330 = vrcp.pop %v4147
      %v4331 = vmul.f32 1.0, %v4330
      %v4332 = vrcp.pop %v4148
      %v4333 = vmul.f32 1.0, %v4332
      %v4334 = vrcp.pop %v4149
      %v4335 = vmul.f32 1.0, %v4334
      %v4336 = vrcp.pop %v4150
      %v4337 = vmul.f32 1.0, %v4336
      %v4338 = vrcp.pop %v4151
      %v4339 = vmul.f32 1.0, %v4338
      %v4340 = vrcp.pop %v4152
      %v4341 = vmul.f32 1.0, %v4340
      %v4342 = vrcp.pop %v4153
      %v4343 = vmul.f32 1.0, %v4342
      %v4344 = vrcp.pop %v4154
      %v4345 = vmul.f32 1.0, %v4344
      %v4346 = vrcp.pop %v4155
      %v4347 = vmul.f32 1.0, %v4346
      %v4348 = vrcp.pop %v4156
      %v4349 = vmul.f32 1.0, %v4348
      %v4350 = vrcp.pop %v4157
      %v4351 = vmul.f32 1.0, %v4350
      %v4352 = vrcp.pop %v4158
      %v4353 = vmul.f32 1.0, %v4352
      %v4354 = vrcp.pop %v4159
      %v4355 = vmul.f32 1.0, %v4354
      %v4356 = vrcp.pop %v4160
      %v4357 = vmul.f32 1.0, %v4356
      %v4358 = vrcp.pop %v4161
      %v4359 = vmul.f32 1.0, %v4358
      %v4360 = vrcp.pop %v4162
      %v4361 = vmul.f32 1.0, %v4360
      %v4362 = vrcp.pop %v4163
      %v4363 = vmul.f32 1.0, %v4362
      %v4364 = vrcp.pop %v4164
      %v4365 = vmul.f32 1.0, %v4364
      %v4366 = vrcp.pop %v4165
      %v4367 = vmul.f32 1.0, %v4366
      %v4368 = vrcp.pop %v4166
      %v4369 = vmul.f32 1.0, %v4368
      %v4370 = vrcp.pop %v4167
      %v4371 = vmul.f32 1.0, %v4370
      %v4372 = vrcp.pop %v4168
      %v4373 = vmul.f32 1.0, %v4372
      %v4374 = vrcp.pop %v4169
      %v4375 = vmul.f32 1.0, %v4374
      %v4376 = vrcp.pop %v4170
      %v4377 = vmul.f32 1.0, %v4376
      %v4378 = vrcp.pop %v4171
      %v4379 = vmul.f32 1.0, %v4378
      %v4380 = vrcp.pop %v4172
      %v4381 = vmul.f32 1.0, %v4380
      %v4382 = vrcp.pop %v4173
      %v4383 = vmul.f32 1.0, %v4382
      %v4384 = vrcp.pop %v4174
      %v4385 = vmul.f32 1.0, %v4384
      %v4386 = vrcp.pop %v4175
      %v4387 = vmul.f32 1.0, %v4386
      %v4388 = vrcp.pop %v4176
      %v4389 = vmul.f32 1.0, %v4388
      %v4390 = vrcp.pop %v4177
      %v4391 = vmul.f32 1.0, %v4390
      %v4392 = vrcp.pop %v4178
      %v4393 = vmul.f32 1.0, %v4392
      %v4394 = vrcp.pop %v4179
      %v4395 = vmul.f32 1.0, %v4394
      %v4396 = vrcp.pop %v4180
      %v4397 = vmul.f32 1.0, %v4396
      %v4398 = vrcp.pop %v4181
      %v4399 = vmul.f32 1.0, %v4398
      %v4400 = vrcp.pop %v4182
      %v4401 = vmul.f32 1.0, %v4400
      %v4402 = vrcp.pop %v4183
      %v4403 = vmul.f32 1.0, %v4402
      %v4404 = vrcp.pop %v4184
      %v4405 = vmul.f32 1.0, %v4404
      %v4406 = vrcp.pop %v4185
      %v4407 = vmul.f32 1.0, %v4406
      %v4408 = vrcp.pop %v4186
      %v4409 = vmul.f32 1.0, %v4408
      %v4410 = vrcp.pop %v4187
      %v4411 = vmul.f32 1.0, %v4410
      %v4412 = vpack.c.bf16 %v4203, %v4189
      %v4413 = vpack.c.bf16 %v4205, %v4191
      %v4414 = vpack.c.bf16 %v4207, %v4193
      %v4415 = vpack.c.bf16 %v4209, %v4195
      %v4416 = vpack.c.bf16 %v4211, %v4197
      %v4417 = vpack.c.bf16 %v4213, %v4199
      %v4418 = vpack.c.bf16 %v4215, %v4201
      %v4419 = vpack.c.bf16 %v4231, %v4217
      %v4420 = vpack.c.bf16 %v4233, %v4219
      %v4421 = vpack.c.bf16 %v4235, %v4221
      %v4422 = vpack.c.bf16 %v4237, %v4223
      %v4423 = vpack.c.bf16 %v4239, %v4225
      %v4424 = vpack.c.bf16 %v4241, %v4227
      %v4425 = vpack.c.bf16 %v4243, %v4229
      %v4426 = vpack.c.bf16 %v4259, %v4245
      %v4427 = vpack.c.bf16 %v4261, %v4247
      %v4428 = vpack.c.bf16 %v4263, %v4249
      %v4429 = vpack.c.bf16 %v4265, %v4251
      %v4430 = vpack.c.bf16 %v4267, %v4253
      %v4431 = vpack.c.bf16 %v4269, %v4255
      %v4432 = vpack.c.bf16 %v4271, %v4257
      %v4433 = vpack.c.bf16 %v4287, %v4273
      %v4434 = vpack.c.bf16 %v4289, %v4275
      %v4435 = vpack.c.bf16 %v4291, %v4277
      %v4436 = vpack.c.bf16 %v4293, %v4279
      %v4437 = vpack.c.bf16 %v4295, %v4281
      %v4438 = vpack.c.bf16 %v4297, %v4283
      %v4439 = vpack.c.bf16 %v4299, %v4285
      %v4440 = vpack.c.bf16 %v4315, %v4301
      %v4441 = vpack.c.bf16 %v4317, %v4303
      %v4442 = vpack.c.bf16 %v4319, %v4305
      %v4443 = vpack.c.bf16 %v4321, %v4307
      %v4444 = vpack.c.bf16 %v4323, %v4309
      %v4445 = vpack.c.bf16 %v4325, %v4311
      %v4446 = vpack.c.bf16 %v4327, %v4313
      %v4447 = vpack.c.bf16 %v4343, %v4329
      %v4448 = vpack.c.bf16 %v4345, %v4331
      %v4449 = vpack.c.bf16 %v4347, %v4333
      %v4450 = vpack.c.bf16 %v4349, %v4335
      %v4451 = vpack.c.bf16 %v4351, %v4337
      %v4452 = vpack.c.bf16 %v4353, %v4339
      %v4453 = vpack.c.bf16 %v4355, %v4341
      %v4454 = vpack.c.bf16 %v4371, %v4357
      %v4455 = vpack.c.bf16 %v4373, %v4359
      %v4456 = vpack.c.bf16 %v4375, %v4361
      %v4457 = vpack.c.bf16 %v4377, %v4363
      %v4458 = vpack.c.bf16 %v4379, %v4365
      %v4459 = vpack.c.bf16 %v4381, %v4367
      %v4460 = vpack.c.bf16 %v4383, %v4369
      %v4461 = vpack.c.bf16 %v4399, %v4385
      %v4462 = vpack.c.bf16 %v4401, %v4387
      %v4463 = vpack.c.bf16 %v4403, %v4389
      %v4464 = vpack.c.bf16 %v4405, %v4391
      %v4465 = vpack.c.bf16 %v4407, %v4393
      %v4466 = vpack.c.bf16 %v4409, %v4395
      %v4467 = vpack.c.bf16 %v4411, %v4397
      %v4524 = vunpack.c.l.b16 %v4412
      %v4525 = vunpack.c.l.b16 %v4413
      %v4526 = vunpack.c.l.b16 %v4414
      %v4527 = vunpack.c.l.b16 %v4415
      %v4528 = vunpack.c.l.b16 %v4416
      %v4529 = vunpack.c.l.b16 %v4417
      %v4530 = vunpack.c.l.b16 %v4418
      %v4531 = vunpack.c.h.b16 %v4412
      %v4532 = vunpack.c.h.b16 %v4413
      %v4533 = vunpack.c.h.b16 %v4414
      %v4534 = vunpack.c.h.b16 %v4415
      %v4535 = vunpack.c.h.b16 %v4416
      %v4536 = vunpack.c.h.b16 %v4417
      %v4537 = vunpack.c.h.b16 %v4418
      %v4538 = vunpack.c.l.b16 %v4419
      %v4539 = vunpack.c.l.b16 %v4420
      %v4540 = vunpack.c.l.b16 %v4421
      %v4541 = vunpack.c.l.b16 %v4422
      %v4542 = vunpack.c.l.b16 %v4423
      %v4543 = vunpack.c.l.b16 %v4424
      %v4544 = vunpack.c.l.b16 %v4425
      %v4545 = vunpack.c.h.b16 %v4419
      %v4546 = vunpack.c.h.b16 %v4420
      %v4547 = vunpack.c.h.b16 %v4421
      %v4548 = vunpack.c.h.b16 %v4422
      %v4549 = vunpack.c.h.b16 %v4423
      %v4550 = vunpack.c.h.b16 %v4424
      %v4551 = vunpack.c.h.b16 %v4425
      %v4552 = vunpack.c.l.b16 %v4426
      %v4553 = vunpack.c.l.b16 %v4427
      %v4554 = vunpack.c.l.b16 %v4428
      %v4555 = vunpack.c.l.b16 %v4429
      %v4556 = vunpack.c.l.b16 %v4430
      %v4557 = vunpack.c.l.b16 %v4431
      %v4558 = vunpack.c.l.b16 %v4432
      %v4559 = vunpack.c.h.b16 %v4426
      %v4560 = vunpack.c.h.b16 %v4427
      %v4561 = vunpack.c.h.b16 %v4428
      %v4562 = vunpack.c.h.b16 %v4429
      %v4563 = vunpack.c.h.b16 %v4430
      %v4564 = vunpack.c.h.b16 %v4431
      %v4565 = vunpack.c.h.b16 %v4432
      %v4566 = vunpack.c.l.b16 %v4433
      %v4567 = vunpack.c.l.b16 %v4434
      %v4568 = vunpack.c.l.b16 %v4435
      %v4569 = vunpack.c.l.b16 %v4436
      %v4570 = vunpack.c.l.b16 %v4437
      %v4571 = vunpack.c.l.b16 %v4438
      %v4572 = vunpack.c.l.b16 %v4439
      %v4573 = vunpack.c.h.b16 %v4433
      %v4574 = vunpack.c.h.b16 %v4434
      %v4575 = vunpack.c.h.b16 %v4435
      %v4576 = vunpack.c.h.b16 %v4436
      %v4577 = vunpack.c.h.b16 %v4437
      %v4578 = vunpack.c.h.b16 %v4438
      %v4579 = vunpack.c.h.b16 %v4439
      %v4580 = vunpack.c.l.b16 %v4440
      %v4581 = vunpack.c.l.b16 %v4441
      %v4582 = vunpack.c.l.b16 %v4442
      %v4583 = vunpack.c.l.b16 %v4443
      %v4584 = vunpack.c.l.b16 %v4444
      %v4585 = vunpack.c.l.b16 %v4445
      %v4586 = vunpack.c.l.b16 %v4446
      %v4587 = vunpack.c.h.b16 %v4440
      %v4588 = vunpack.c.h.b16 %v4441
      %v4589 = vunpack.c.h.b16 %v4442
      %v4590 = vunpack.c.h.b16 %v4443
      %v4591 = vunpack.c.h.b16 %v4444
      %v4592 = vunpack.c.h.b16 %v4445
      %v4593 = vunpack.c.h.b16 %v4446
      %v4594 = vunpack.c.l.b16 %v4447
      %v4595 = vunpack.c.l.b16 %v4448
      %v4596 = vunpack.c.l.b16 %v4449
      %v4597 = vunpack.c.l.b16 %v4450
      %v4598 = vunpack.c.l.b16 %v4451
      %v4599 = vunpack.c.l.b16 %v4452
      %v4600 = vunpack.c.l.b16 %v4453
      %v4601 = vunpack.c.h.b16 %v4447
      %v4602 = vunpack.c.h.b16 %v4448
      %v4603 = vunpack.c.h.b16 %v4449
      %v4604 = vunpack.c.h.b16 %v4450
      %v4605 = vunpack.c.h.b16 %v4451
      %v4606 = vunpack.c.h.b16 %v4452
      %v4607 = vunpack.c.h.b16 %v4453
      %v4608 = vunpack.c.l.b16 %v4454
      %v4609 = vunpack.c.l.b16 %v4455
      %v4610 = vunpack.c.l.b16 %v4456
      %v4611 = vunpack.c.l.b16 %v4457
      %v4612 = vunpack.c.l.b16 %v4458
      %v4613 = vunpack.c.l.b16 %v4459
      %v4614 = vunpack.c.l.b16 %v4460
      %v4615 = vunpack.c.h.b16 %v4454
      %v4616 = vunpack.c.h.b16 %v4455
      %v4617 = vunpack.c.h.b16 %v4456
      %v4618 = vunpack.c.h.b16 %v4457
      %v4619 = vunpack.c.h.b16 %v4458
      %v4620 = vunpack.c.h.b16 %v4459
      %v4621 = vunpack.c.h.b16 %v4460
      %v4622 = vunpack.c.l.b16 %v4461
      %v4623 = vunpack.c.l.b16 %v4462
      %v4624 = vunpack.c.l.b16 %v4463
      %v4625 = vunpack.c.l.b16 %v4464
      %v4626 = vunpack.c.l.b16 %v4465
      %v4627 = vunpack.c.l.b16 %v4466
      %v4628 = vunpack.c.l.b16 %v4467
      %v4629 = vunpack.c.h.b16 %v4461
      %v4630 = vunpack.c.h.b16 %v4462
      %v4631 = vunpack.c.h.b16 %v4463
      %v4632 = vunpack.c.h.b16 %v4464
      %v4633 = vunpack.c.h.b16 %v4465
      %v4634 = vunpack.c.h.b16 %v4466
      %v4635 = vunpack.c.h.b16 %v4467
      %v4636 = vpack.c.b16 %v4525, %v4524
      %v4637 = vpack.c.b16 %v4527, %v4526
      %v4638 = vpack.c.b16 %v4529, %v4528
      %v4639 = vpack.c.b16 %v4530, %v4530
      %v4640 = vpack.c.b16 %v4532, %v4531
      %v4641 = vpack.c.b16 %v4534, %v4533
      %v4642 = vpack.c.b16 %v4536, %v4535
      %v4643 = vpack.c.b16 %v4537, %v4537
      %v4644 = vpack.c.b16 %v4539, %v4538
      %v4645 = vpack.c.b16 %v4541, %v4540
      %v4646 = vpack.c.b16 %v4543, %v4542
      %v4647 = vpack.c.b16 %v4544, %v4544
      %v4648 = vpack.c.b16 %v4546, %v4545
      %v4649 = vpack.c.b16 %v4548, %v4547
      %v4650 = vpack.c.b16 %v4550, %v4549
      %v4651 = vpack.c.b16 %v4551, %v4551
      %v4652 = vpack.c.b16 %v4553, %v4552
      %v4653 = vpack.c.b16 %v4555, %v4554
      %v4654 = vpack.c.b16 %v4557, %v4556
      %v4655 = vpack.c.b16 %v4558, %v4558
      %v4656 = vpack.c.b16 %v4560, %v4559
      %v4657 = vpack.c.b16 %v4562, %v4561
      %v4658 = vpack.c.b16 %v4564, %v4563
      %v4659 = vpack.c.b16 %v4565, %v4565
      %v4660 = vpack.c.b16 %v4567, %v4566
      %v4661 = vpack.c.b16 %v4569, %v4568
      %v4662 = vpack.c.b16 %v4571, %v4570
      %v4663 = vpack.c.b16 %v4572, %v4572
      %v4664 = vpack.c.b16 %v4574, %v4573
      %v4665 = vpack.c.b16 %v4576, %v4575
      %v4666 = vpack.c.b16 %v4578, %v4577
      %v4667 = vpack.c.b16 %v4579, %v4579
      %v4668 = vpack.c.b16 %v4581, %v4580
      %v4669 = vpack.c.b16 %v4583, %v4582
      %v4670 = vpack.c.b16 %v4585, %v4584
      %v4671 = vpack.c.b16 %v4586, %v4586
      %v4672 = vpack.c.b16 %v4588, %v4587
      %v4673 = vpack.c.b16 %v4590, %v4589
      %v4674 = vpack.c.b16 %v4592, %v4591
      %v4675 = vpack.c.b16 %v4593, %v4593
      %v4676 = vpack.c.b16 %v4595, %v4594
      %v4677 = vpack.c.b16 %v4597, %v4596
      %v4678 = vpack.c.b16 %v4599, %v4598
      %v4679 = vpack.c.b16 %v4600, %v4600
      %v4680 = vpack.c.b16 %v4602, %v4601
      %v4681 = vpack.c.b16 %v4604, %v4603
      %v4682 = vpack.c.b16 %v4606, %v4605
      %v4683 = vpack.c.b16 %v4607, %v4607
      %v4684 = vpack.c.b16 %v4609, %v4608
      %v4685 = vpack.c.b16 %v4611, %v4610
      %v4686 = vpack.c.b16 %v4613, %v4612
      %v4687 = vpack.c.b16 %v4614, %v4614
      %v4688 = vpack.c.b16 %v4616, %v4615
      %v4689 = vpack.c.b16 %v4618, %v4617
      %v4690 = vpack.c.b16 %v4620, %v4619
      %v4691 = vpack.c.b16 %v4621, %v4621
      %v4692 = vpack.c.b16 %v4623, %v4622
      %v4693 = vpack.c.b16 %v4625, %v4624
      %v4694 = vpack.c.b16 %v4627, %v4626
      %v4695 = vpack.c.b16 %v4628, %v4628
      %v4696 = vpack.c.b16 %v4630, %v4629
      %v4697 = vpack.c.b16 %v4632, %v4631
      %v4698 = vpack.c.b16 %v4634, %v4633
      %v4699 = vpack.c.b16 %v4635, %v4635
      %4764 = vst [vmem:[%s596] sm:$0xff] %v4636
      %4765 = vst [vmem:[%s596 + $0x8] sm:$0xff] %v4637
      %4766 = vst [vmem:[%s596 + $0x10] sm:$0xff] %v4638
      %vm4767 = vcmask 125952
      %4768 = vst.msk [vmem:[%s596 + $0x18] sm:$0xf] %vm4767, %v4639
      %4769 = vst [vmem:[%s596 + $0x1c] sm:$0xff] %v4640
      %4770 = vst [vmem:[%s596 + $0x24] sm:$0xff] %v4641
      %4771 = vst [vmem:[%s596 + $0x2c] sm:$0xff] %v4642
      %4772 = vst.msk [vmem:[%s596 + $0x34] sm:$0xf] %vm4767, %v4643
      %4773 = vst [vmem:[%s596 + $0x38] sm:$0xff] %v4644
      %4774 = vst [vmem:[%s596 + $0x40] sm:$0xff] %v4645
      %4775 = vst [vmem:[%s596 + $0x48] sm:$0xff] %v4646
      %4776 = vst.msk [vmem:[%s596 + $0x50] sm:$0xf] %vm4767, %v4647
      %4777 = vst [vmem:[%s596 + $0x54] sm:$0xff] %v4648
      %4778 = vst [vmem:[%s596 + $0x5c] sm:$0xff] %v4649
      %4779 = vst [vmem:[%s596 + $0x64] sm:$0xff] %v4650
      %4780 = vst.msk [vmem:[%s596 + $0x6c] sm:$0xf] %vm4767, %v4651
      %4781 = vst [vmem:[%s596 + $0x70] sm:$0xff] %v4652
      %4782 = vst [vmem:[%s596 + $0x78] sm:$0xff] %v4653
      %4783 = vst [vmem:[%s596 + $0x80] sm:$0xff] %v4654
      %4784 = vst.msk [vmem:[%s596 + $0x88] sm:$0xf] %vm4767, %v4655
      %4785 = vst [vmem:[%s596 + $0x8c] sm:$0xff] %v4656
      %4786 = vst [vmem:[%s596 + $0x94] sm:$0xff] %v4657
      %4787 = vst [vmem:[%s596 + $0x9c] sm:$0xff] %v4658
      %4788 = vst.msk [vmem:[%s596 + $0xa4] sm:$0xf] %vm4767, %v4659
      %4789 = vst [vmem:[%s596 + $0xa8] sm:$0xff] %v4660
      %4790 = vst [vmem:[%s596 + $0xb0] sm:$0xff] %v4661
      %4791 = vst [vmem:[%s596 + $0xb8] sm:$0xff] %v4662
      %4792 = vst.msk [vmem:[%s596 + $0xc0] sm:$0xf] %vm4767, %v4663
      %4793 = vst [vmem:[%s596 + $0xc4] sm:$0xff] %v4664
      %4794 = vst [vmem:[%s596 + $0xcc] sm:$0xff] %v4665
      %4795 = vst [vmem:[%s596 + $0xd4] sm:$0xff] %v4666
      %4796 = vst.msk [vmem:[%s596 + $0xdc] sm:$0xf] %vm4767, %v4667
      %4797 = vst [vmem:[%s596 + $0xe0] sm:$0xff] %v4668
      %4798 = vst [vmem:[%s596 + $0xe8] sm:$0xff] %v4669
      %4799 = vst [vmem:[%s596 + $0xf0] sm:$0xff] %v4670
      %4800 = vst.msk [vmem:[%s596 + $0xf8] sm:$0xf] %vm4767, %v4671
      %4801 = vst [vmem:[%s596 + $0xfc] sm:$0xff] %v4672
      %4802 = vst [vmem:[%s596 + $0x104] sm:$0xff] %v4673
      %4803 = vst [vmem:[%s596 + $0x10c] sm:$0xff] %v4674
      %4804 = vst.msk [vmem:[%s596 + $0x114] sm:$0xf] %vm4767, %v4675
      %4805 = vst [vmem:[%s596 + $0x118] sm:$0xff] %v4676
      %4806 = vst [vmem:[%s596 + $0x120] sm:$0xff] %v4677
      %4807 = vst [vmem:[%s596 + $0x128] sm:$0xff] %v4678
      %4808 = vst.msk [vmem:[%s596 + $0x130] sm:$0xf] %vm4767, %v4679
      %4809 = vst [vmem:[%s596 + $0x134] sm:$0xff] %v4680
      %4810 = vst [vmem:[%s596 + $0x13c] sm:$0xff] %v4681
      %4811 = vst [vmem:[%s596 + $0x144] sm:$0xff] %v4682
      %4812 = vst.msk [vmem:[%s596 + $0x14c] sm:$0xf] %vm4767, %v4683
      %4813 = vst [vmem:[%s596 + $0x150] sm:$0xff] %v4684
      %4814 = vst [vmem:[%s596 + $0x158] sm:$0xff] %v4685
      %4815 = vst [vmem:[%s596 + $0x160] sm:$0xff] %v4686
      %4816 = vst.msk [vmem:[%s596 + $0x168] sm:$0xf] %vm4767, %v4687
      %4817 = vst [vmem:[%s596 + $0x16c] sm:$0xff] %v4688
      %4818 = vst [vmem:[%s596 + $0x174] sm:$0xff] %v4689
      %4819 = vst [vmem:[%s596 + $0x17c] sm:$0xff] %v4690
      %4820 = vst.msk [vmem:[%s596 + $0x184] sm:$0xf] %vm4767, %v4691
      %4821 = vst [vmem:[%s596 + $0x188] sm:$0xff] %v4692
      %4822 = vst [vmem:[%s596 + $0x190] sm:$0xff] %v4693
      %4823 = vst [vmem:[%s596 + $0x198] sm:$0xff] %v4694
      %4824 = vst.msk [vmem:[%s596 + $0x1a0] sm:$0xf] %vm4767, %v4695
      %4825 = vst [vmem:[%s596 + $0x1a4] sm:$0xff] %v4696
      %4826 = vst [vmem:[%s596 + $0x1ac] sm:$0xff] %v4697
      %4827 = vst [vmem:[%s596 + $0x1b4] sm:$0xff] %v4698
      %4828 = vst.msk [vmem:[%s596 + $0x1bc] sm:$0xf] %vm4767, %v4699
      %s4829 = smul.u32 16, %s30
      %p4830 = scmp.lt.s32.totalorder %s4829, 63
      %s4831 = scalar_select %p4830, %s4829, 63
      %s4832 = smul.addr %s4831, 4
      %s4833 = scalar_lea.vmem %s17, %s4832
      %s4834 = smul.u32 16, %s30
      %p4835 = scmp.lt.s32.totalorder %s4834, 63
      %s4836 = scalar_select %p4835, %s4834, 63
      %s4837 = smul.addr %s4836, 7
      %s4838 = smul.addr %s4837, 4
      %s4839 = scalar_lea.vmem %s18, %s4838
      // Predicated region
      $region89: #{tpu_custom_call.1} parent=87 // pred_check
        %p4840 = pneg %p410
      $region90: #{tpu_custom_call.1} parent=87 // pred_check_branch
        %4842 = sbr.rel (%p4840) target = $region92
      $region91: #{tpu_custom_call.1} parent=87 // pred_region
        %s4843 = smul.u32 16, %s30
      $region92: #{tpu_custom_call.1} parent=87 // pred_fallthru
        _
      // Predicated region
      $region93: #{tpu_custom_call.1} parent=87 // pred_check
        %p4844 = pneg %p436
      $region94: #{tpu_custom_call.1} parent=87 // pred_check_branch
        %4846 = sbr.rel (%p4844) target = $region96
      $region95: #{tpu_custom_call.1} parent=87 // pred_region
        %s4847 = smul.u32 16, %s30
      $region96: #{tpu_custom_call.1} parent=87 // pred_fallthru
        _
    $region88: #{tpu_custom_call.1} parent=5 // pred_fallthru
      _
    %p4848 = scmp.le.s32.totalorder 2, %s25
    // Predicated region
    $region97: #{tpu_custom_call.1} parent=5 // pred_check
      %p4849 = pneg %p4848
    $region98: #{tpu_custom_call.1} parent=5 // pred_check_branch
      %4851 = sbr.rel (%p4849) target = $region100
    $region99: #{tpu_custom_call.1} parent=5 // pred_region
      %s4852 = ssub.s32 %s25, 2
      // Predicated region
      $region101: #{tpu_custom_call.1} parent=99 // pred_check
        %p4853 = pneg %p416
      $region102: #{tpu_custom_call.1} parent=99 // pred_check_branch
        %4855 = sbr.rel (%p4853) target = $region104
      $region103: #{tpu_custom_call.1} parent=99 // pred_region
        %s4856 = smul.u32 16, %s31
        %p4857 = scmp.lt.s32.totalorder %s4856, 63
        %s4858 = scalar_select %p4857, %s4856, 63
        %s4859 = smul.addr %s4858, 4
        %s4860 = scalar_lea.vmem %s17, %s4859
      $region104: #{tpu_custom_call.1} parent=99 // pred_fallthru
        _
      // Predicated region
      $region105: #{tpu_custom_call.1} parent=99 // pred_check
        %p4861 = pneg %p442
      $region106: #{tpu_custom_call.1} parent=99 // pred_check_branch
        %4863 = sbr.rel (%p4861) target = $region108
      $region107: #{tpu_custom_call.1} parent=99 // pred_region
        %s4864 = smul.u32 16, %s31
        %p4865 = scmp.lt.s32.totalorder %s4864, 63
        %s4866 = scalar_select %p4865, %s4864, 63
        %s4867 = smul.addr %s4866, 7
        %s4868 = smul.addr %s4867, 4
        %s4869 = scalar_lea.vmem %s18, %s4868
      $region108: #{tpu_custom_call.1} parent=99 // pred_fallthru
        _
    $region100: #{tpu_custom_call.1} parent=5 // pred_fallthru
      _
  $region6: #{tpu_custom_call.1} parent=0 // loop_footer
    %s29 = sadd.s32 1, %s25
  $region7: #{tpu_custom_call.1} parent=0 // loop_footer_branch
    %24 = sbr.rel target = $region3
  $region8: #{tpu_custom_call.1} parent=0 // loop_exit
    _

</llo_original>
